<compile_context>
chip_gen: v7x
topology: tpu7x:2x2x1
jax: 0.10.0
libtpu: 0.0.40
codegen_flags: <defaults>
</compile_context>

<pallas_src>
import jax
import jax.numpy as jnp
import numpy as np
from jax.experimental import pallas as pl
from jax.experimental.pallas import tpu as pltpu


# Geometry implied by CoCALC (28x28x1 input, AvgPool2d(7) at the end).
_H_IN = 28
_H1, _W1, _W1P = 14, 14, 16        # 14x14 stage, W padded to 16
_H2, _W2, _W2P = 7, 7, 8           # 7x7 stage,  W padded to 8
_P1 = _H1 * _W1P                   # 224 rows / sample (stage 1)
_P2 = _H2 * _W2P                   # 56 rows / sample  (stage 2)
_NCLS = 324
_NCLS_PAD = 384                    # 3 * 128, lane-dense FC output


# ----------------------------------------------------------------------------
# In-kernel helpers (traced inside the Pallas kernel)
# ----------------------------------------------------------------------------
def _shift_rows(x, s):
    """out[i] = x[i + s] with zero fill (x: (R, C) value, s static)."""
    if s == 0:
        return x
    r, c = x.shape
    pad = jnp.zeros((abs(s), c), x.dtype)
    if s > 0:
        return jnp.concatenate([x[s:, :], pad], axis=0)
    return jnp.concatenate([pad, x[:r + s, :]], axis=0)


def _depthwise3x3(x, wdw, bias, masks, shifts):
    """3x3 'same' depthwise conv on a flat (R, 128) slab + shift + ReLU."""
    acc = None
    for k in range(9):
        t = _shift_rows(x, shifts[k]) * masks[k]       # (R,128) * (R,1)
        contrib = t * wdw[k]                            # * (128,) per-channel tap
        acc = contrib if acc is None else acc + contrib
    return jnp.maximum(acc + bias, 0.0)


# ----------------------------------------------------------------------------
# Fused forward kernel: one batch block per grid step, everything in VMEM.
# ----------------------------------------------------------------------------
def _cocalc_kernel(
    patches_ref,                                    # (1, B*224, 9) im2col stem
    mask1_ref, mask2_ref,                           # (224, 9), (56, 9) tap masks
    dsel_ref, pool_ref,                             # (B*56, B*224), (B, B*56)
    w1_ref, b1_ref,                                 # (9, 128), (1, 128)
    wdw1_ref, bdw1_ref, wpw1_ref, bpw1_ref,         # dw 32 / pw 32->64 (padded)
    wdw2_ref, bdw2_ref, wpw2_ref, bpw2_ref,         # dw 64 (s=2) / pw 64->128
    wdw3_ref, bdw3_ref, wpw3_ref, bpw3_ref,         # dw 128 / pw 128->128
    wfc_ref, bfc_ref,                               # (128, 384), (1, 384)
    out_ref,                                        # (1, B, 384)
):
    f32 = jnp.float32
    b_blk = out_ref.shape[1]

    def load_masks(mref):
        cols = [mref[:, k:k + 1] for k in range(9)]           # (P, 1) f32 each
        if b_blk > 1:
            cols = [jnp.concatenate([m] * b_blk, axis=0) for m in cols]
        return cols

    masks1 = load_masks(mask1_ref)                            # shared by dw1/dw2
    masks2 = load_masks(mask2_ref)
    shifts1 = [dh * _W1P + dw for dh in (-1, 0, 1) for dw in (-1, 0, 1)]
    shifts2 = [dh * _W2P + dw for dh in (-1, 0, 1) for dw in (-1, 0, 1)]

    # ---- conv_bn(1, 32, stride=2): one im2col matmul -------------------------
    x = jnp.dot(patches_ref[0], w1_ref[...], preferred_element_type=f32)
    x = jnp.maximum(x + b1_ref[...], 0.0)                     # (R1, 128)

    # ---- conv_dw(32, 64, stride=1) -------------------------------------------
    x = _depthwise3x3(x, wdw1_ref[...], bdw1_ref[...], masks1, shifts1)
    x = jnp.maximum(jnp.dot(x, wpw1_ref[...], preferred_element_type=f32)
                    + bpw1_ref[...], 0.0)                     # (R1, 128)

    # ---- conv_dw(64, 128, stride=2): stride-1 dw + one decimation matmul -----
    x = _depthwise3x3(x, wdw2_ref[...], bdw2_ref[...], masks1, shifts1)
    x = jnp.dot(dsel_ref[...], x, preferred_element_type=f32)  # (R2, 128)
    x = jnp.maximum(jnp.dot(x, wpw2_ref[...], preferred_element_type=f32)
                    + bpw2_ref[...], 0.0)

    # ---- conv_dw(128, 128, stride=1) -----------------------------------------
    x = _depthwise3x3(x, wdw3_ref[...], bdw3_ref[...], masks2, shifts2)
    x = jnp.maximum(jnp.dot(x, wpw3_ref[...], preferred_element_type=f32)
                    + bpw3_ref[...], 0.0)                     # (R2, 128)

    # ---- AvgPool2d(7) (pooling matmul) + Linear(128, 324 padded to 384) ------
    pooled = jnp.dot(pool_ref[...], x, preferred_element_type=f32)   # (B, 128)
    out = jnp.dot(pooled, wfc_ref[...], preferred_element_type=f32) + bfc_ref[...]
    out_ref[0] = out                                          # (B, 384)


# ----------------------------------------------------------------------------
# Wrapper-side constant builders (trace-time numpy, tiny)
# ----------------------------------------------------------------------------
def _pick_batch_block(n):
    # Keep >= 2 grid steps (v7x 2-TC split) while filling matmul rows when possible.
    for b in (8, 4, 2):
        if n % b == 0 and n // b >= 2:
            return b
    return 1


def _build_tap_masks(h, w, wp):
    m = np.zeros((h * wp, 9), np.float32)
    for p in range(h * wp):
        hh, ww = p // wp, p % wp
        k = 0
        for dh in (-1, 0, 1):
            for dw in (-1, 0, 1):
                if ww < w and 0 <= hh + dh < h and 0 <= ww + dw < w:
                    m[p, k] = 1.0
                k += 1
    return m


def _build_decimation(b_blk):
    d = np.zeros((b_blk * _P2, b_blk * _P1), np.float32)
    for b in range(b_blk):
        for r in range(_H2):
            for c in range(_W2):
                d[b * _P2 + r * _W2P + c,
                  b * _P1 + (2 * r) * _W1P + (2 * c)] = 1.0
    return d


def _build_poolmat(b_blk):
    p = np.zeros((b_blk, b_blk * _P2), np.float32)
    for b in range(b_blk):
        for r in range(_H2):
            for c in range(_W2):
                p[b, b * _P2 + r * _W2P + c] = 1.0 / float(_H2 * _W2)
    return p


def _pad_cols(a, n):
    return jnp.pad(a, ((0, 0), (0, n - a.shape[1])))


def _pad_to(a, rows, cols):
    return jnp.pad(a, ((0, rows - a.shape[0]), (0, cols - a.shape[1])))


# ----------------------------------------------------------------------------
# Wrapper: im2col stem, BN-scale folding, channel padding, one fused pallas_call
# ----------------------------------------------------------------------------
@jax.jit
def cocalc_forward(x_nchw, p):
    x = x_nchw.astype(jnp.float32)
    n = x.shape[0]
    assert x.shape[1:] == (1, _H_IN, _H_IN), x.shape
    b_blk = _pick_batch_block(n)
    n_blk = n // b_blk
    r1 = b_blk * _P1
    r2 = b_blk * _P2

    # im2col patches for the stride-2 stem conv, flattened with W padded to 16.
    img = x[:, 0]                                                  # (N, 28, 28)
    xp = jnp.pad(img, ((0, 0), (1, 1), (1, 1)))                    # (N, 30, 30)
    taps = [xp[:, kh:kh + _H_IN:2, kw:kw + _H_IN:2]
            for kh in range(3) for kw in range(3)]
    patches = jnp.stack(taps, axis=-1)                             # (N, 14, 14, 9)
    patches = jnp.pad(patches, ((0, 0), (0, 0), (0, _W1P - _W1), (0, 0)))
    patches = patches.reshape(n_blk, r1, 9)

    # Fold BN scale into conv weights (shift stays a bias) and pad C to 128.
    w1 = _pad_cols(p["w1"] * p["s1"], 128)
    b1 = _pad_cols(p["b1"], 128)
    wdw1 = _pad_cols(p["wdw1"] * p["sdw1"], 128)
    bdw1 = _pad_cols(p["bdw1"], 128)
    wpw1 = _pad_to(p["wpw1"] * p["spw1"], 128, 128)
    bpw1 = _pad_cols(p["bpw1"], 128)
    wdw2 = _pad_cols(p["wdw2"] * p["sdw2"], 128)
    bdw2 = _pad_cols(p["bdw2"], 128)
    wpw2 = _pad_to(p["wpw2"] * p["spw2"], 128, 128)
    bpw2 = p["bpw2"]
    wdw3 = p["wdw3"] * p["sdw3"]
    bdw3 = p["bdw3"]
    wpw3 = p["wpw3"] * p["spw3"]
    bpw3 = p["bpw3"]
    wfc = _pad_cols(p["wfc"], _NCLS_PAD)
    bfc = _pad_cols(p["bfc"], _NCLS_PAD)

    mask1 = jnp.asarray(_build_tap_masks(_H1, _W1, _W1P))          # (224, 9)
    mask2 = jnp.asarray(_build_tap_masks(_H2, _W2, _W2P))          # (56, 9)
    dsel = jnp.asarray(_build_decimation(b_blk))                   # (r2, r1)
    poolm = jnp.asarray(_build_poolmat(b_blk))                     # (b_blk, r2)

    const2d = [mask1, mask2, dsel, poolm,
               w1, b1, wdw1, bdw1, wpw1, bpw1, wdw2, bdw2, wpw2, bpw2,
               wdw3, bdw3, wpw3, bpw3, wfc, bfc]

    out = pl.pallas_call(
        _cocalc_kernel,
        out_shape=jax.ShapeDtypeStruct((n_blk, b_blk, _NCLS_PAD), jnp.float32),
        grid=(n_blk,),
        in_specs=(
            [pl.BlockSpec((1, r1, 9), lambda i: (i, 0, 0))]
            + [pl.BlockSpec(a.shape, lambda i: (0, 0)) for a in const2d]
        ),
        out_specs=pl.BlockSpec((1, b_blk, _NCLS_PAD), lambda i: (i, 0, 0)),
        compiler_params=pltpu.CompilerParams(
            dimension_semantics=("parallel",)),
    )(patches, *const2d)

    return out.reshape(n, _NCLS_PAD)[:, :_NCLS]                    # (N, 324)


# ----------------------------------------------------------------------------
# Deterministic synthetic parameters (shapes from CoCALC.__init__)
# ----------------------------------------------------------------------------
def init_params(key):
    ks = jax.random.split(key, 16)

    def bn(k, c):
        k1, k2, k3, k4 = jax.random.split(k, 4)
        gamma = 1.0 + 0.1 * jax.random.normal(k1, (c,), jnp.float32)
        beta = 0.1 * jax.random.normal(k2, (c,), jnp.float32)
        rmean = 0.1 * jax.random.normal(k3, (c,), jnp.float32)
        rvar = 1.0 + 0.1 * jax.random.uniform(k4, (c,), jnp.float32)
        scale = gamma * jax.lax.rsqrt(rvar + 1e-5)
        shift = beta - rmean * scale
        return scale.reshape(1, c), shift.reshape(1, c)

    p = {}
    # conv_bn(1, 32, 2): Conv2d weight (32,1,3,3) stored HWIO-flat as (9, 32)
    p["w1"] = 0.3 * jax.random.normal(ks[0], (9, 32), jnp.float32)
    p["s1"], p["b1"] = bn(ks[1], 32)
    # conv_dw(32, 64, 1)
    p["wdw1"] = 0.3 * jax.random.normal(ks[2], (9, 32), jnp.float32)
    p["sdw1"], p["bdw1"] = bn(ks[3], 32)
    p["wpw1"] = jax.random.normal(ks[4], (32, 64), jnp.float32) / jnp.sqrt(32.0)
    p["spw1"], p["bpw1"] = bn(ks[5], 64)
    # conv_dw(64, 128, 2)
    p["wdw2"] = 0.3 * jax.random.normal(ks[6], (9, 64), jnp.float32)
    p["sdw2"], p["bdw2"] = bn(ks[7], 64)
    p["wpw2"] = jax.random.normal(ks[8], (64, 128), jnp.float32) / jnp.sqrt(64.0)
    p["spw2"], p["bpw2"] = bn(ks[9], 128)
    # conv_dw(128, 128, 1)
    p["wdw3"] = 0.3 * jax.random.normal(ks[10], (9, 128), jnp.float32)
    p["sdw3"], p["bdw3"] = bn(ks[11], 128)
    p["wpw3"] = jax.random.normal(ks[12], (128, 128), jnp.float32) / jnp.sqrt(128.0)
    p["spw3"], p["bpw3"] = bn(ks[13], 128)
    # fc: Linear(128, 324)
    p["wfc"] = jax.random.normal(ks[14], (128, 324), jnp.float32) / jnp.sqrt(128.0)
    p["bfc"] = (0.1 * jax.random.normal(ks[15], (324,), jnp.float32)).reshape(1, 324)
    return p


# ----------------------------------------------------------------------------
# Pure-JAX reference (lax.conv) for a correctness cross-check
# ----------------------------------------------------------------------------
def reference_forward(x_nchw, p):
    hi = jax.lax.Precision.HIGHEST
    x = jnp.transpose(x_nchw, (0, 2, 3, 1)).astype(jnp.float32)

    def conv3x3(x, w_flat, stride, depthwise):
        cin = x.shape[-1]
        cout = w_flat.shape[1]
        w = w_flat.reshape(3, 3, 1, cout)  # HWIO (I-per-group = 1)
        groups = cin if depthwise else 1
        return jax.lax.conv_general_dilated(
            x, w, (stride, stride), ((1, 1), (1, 1)),
            dimension_numbers=("NHWC", "HWIO", "NHWC"),
            feature_group_count=groups, precision=hi)

    def bnrelu(x, s, b):
        return jnp.maximum(x * s[0] + b[0], 0.0)

    x = bnrelu(conv3x3(x, p["w1"], 2, False), p["s1"], p["b1"])
    x = bnrelu(conv3x3(x, p["wdw1"], 1, True), p["sdw1"], p["bdw1"])
    x = bnrelu(jnp.einsum("nhwc,cd->nhwd", x, p["wpw1"], precision=hi),
               p["spw1"], p["bpw1"])
    x = bnrelu(conv3x3(x, p["wdw2"], 2, True), p["sdw2"], p["bdw2"])
    x = bnrelu(jnp.einsum("nhwc,cd->nhwd", x, p["wpw2"], precision=hi),
               p["spw2"], p["bpw2"])
    x = bnrelu(conv3x3(x, p["wdw3"], 1, True), p["sdw3"], p["bdw3"])
    x = bnrelu(jnp.einsum("nhwc,cd->nhwd", x, p["wpw3"], precision=hi),
               p["spw3"], p["bpw3"])
    pooled = jnp.mean(x, axis=(1, 2))                      # AvgPool2d(7) + view
    return jnp.dot(pooled, p["wfc"], precision=hi) + p["bfc"][0]


# ----------------------------------------------------------------------------
if __name__ == "__main__":
    key = jax.random.PRNGKey(0)
    kx, kp = jax.random.split(key)
    params = init_params(kp)

    # N=2 exercises the per-sample grid (v7x 2-TC split); N=4 exercises batch
    # folding into the matmul row dimension (2 samples per grid step).
    for n in (2, 4):
        x = jax.random.normal(jax.random.fold_in(kx, n),
                              (n, 1, _H_IN, _H_IN), dtype=jnp.float32)
        out = jax.block_until_ready(cocalc_forward(x, params))
        assert out.shape == (n, _NCLS), out.shape
        ref = jax.block_until_ready(reference_forward(x, params))
        np.testing.assert_allclose(np.asarray(out), np.asarray(ref),
                                   rtol=5e-2, atol=5e-2)

    print("KERNEL_OK")
</pallas_src>

<mosaic_0001>
module attributes {stable_mosaic.version = 11 : i64} {
  func.func @_cocalc_kernel(%arg0: i32, %arg1: memref<1x224x9xf32, #tpu.memory_space<vmem>>, %arg2: memref<224x9xf32, #tpu.memory_space<vmem>>, %arg3: memref<56x9xf32, #tpu.memory_space<vmem>>, %arg4: memref<56x224xf32, #tpu.memory_space<vmem>>, %arg5: memref<1x56xf32, #tpu.memory_space<vmem>>, %arg6: memref<9x128xf32, #tpu.memory_space<vmem>>, %arg7: memref<1x128xf32, #tpu.memory_space<vmem>>, %arg8: memref<9x128xf32, #tpu.memory_space<vmem>>, %arg9: memref<1x128xf32, #tpu.memory_space<vmem>>, %arg10: memref<128x128xf32, #tpu.memory_space<vmem>>, %arg11: memref<1x128xf32, #tpu.memory_space<vmem>>, %arg12: memref<9x128xf32, #tpu.memory_space<vmem>>, %arg13: memref<1x128xf32, #tpu.memory_space<vmem>>, %arg14: memref<128x128xf32, #tpu.memory_space<vmem>>, %arg15: memref<1x128xf32, #tpu.memory_space<vmem>>, %arg16: memref<9x128xf32, #tpu.memory_space<vmem>>, %arg17: memref<1x128xf32, #tpu.memory_space<vmem>>, %arg18: memref<128x128xf32, #tpu.memory_space<vmem>>, %arg19: memref<1x128xf32, #tpu.memory_space<vmem>>, %arg20: memref<128x384xf32, #tpu.memory_space<vmem>>, %arg21: memref<1x384xf32, #tpu.memory_space<vmem>>, %arg22: memref<1x1x384xf32, #tpu.memory_space<vmem>>) attributes {dimension_semantics = [#tpu.dimension_semantics<parallel>], iteration_bounds = array<i64: 2>, scalar_prefetch = 0 : i64, scratch_operands = 0 : i64, tpu.core_type = #tpu.core_type<tc>, window_params = [{transform_indices = @transform_0, window_bounds = array<i64: 1, 224, 9>}, {pipeline_mode = #tpu.pipeline_mode<synchronous>, transform_indices = @transform_1, window_bounds = array<i64: 224, 9>}, {pipeline_mode = #tpu.pipeline_mode<synchronous>, transform_indices = @transform_2, window_bounds = array<i64: 56, 9>}, {pipeline_mode = #tpu.pipeline_mode<synchronous>, transform_indices = @transform_3, window_bounds = array<i64: 56, 224>}, {pipeline_mode = #tpu.pipeline_mode<synchronous>, transform_indices = @transform_4, window_bounds = array<i64: 1, 56>}, {pipeline_mode = #tpu.pipeline_mode<synchronous>, transform_indices = @transform_5, window_bounds = array<i64: 9, 128>}, {pipeline_mode = #tpu.pipeline_mode<synchronous>, transform_indices = @transform_6, window_bounds = array<i64: 1, 128>}, {pipeline_mode = #tpu.pipeline_mode<synchronous>, transform_indices = @transform_7, window_bounds = array<i64: 9, 128>}, {pipeline_mode = #tpu.pipeline_mode<synchronous>, transform_indices = @transform_8, window_bounds = array<i64: 1, 128>}, {pipeline_mode = #tpu.pipeline_mode<synchronous>, transform_indices = @transform_9, window_bounds = array<i64: 128, 128>}, {pipeline_mode = #tpu.pipeline_mode<synchronous>, transform_indices = @transform_10, window_bounds = array<i64: 1, 128>}, {pipeline_mode = #tpu.pipeline_mode<synchronous>, transform_indices = @transform_11, window_bounds = array<i64: 9, 128>}, {pipeline_mode = #tpu.pipeline_mode<synchronous>, transform_indices = @transform_12, window_bounds = array<i64: 1, 128>}, {pipeline_mode = #tpu.pipeline_mode<synchronous>, transform_indices = @transform_13, window_bounds = array<i64: 128, 128>}, {pipeline_mode = #tpu.pipeline_mode<synchronous>, transform_indices = @transform_14, window_bounds = array<i64: 1, 128>}, {pipeline_mode = #tpu.pipeline_mode<synchronous>, transform_indices = @transform_15, window_bounds = array<i64: 9, 128>}, {pipeline_mode = #tpu.pipeline_mode<synchronous>, transform_indices = @transform_16, window_bounds = array<i64: 1, 128>}, {pipeline_mode = #tpu.pipeline_mode<synchronous>, transform_indices = @transform_17, window_bounds = array<i64: 128, 128>}, {pipeline_mode = #tpu.pipeline_mode<synchronous>, transform_indices = @transform_18, window_bounds = array<i64: 1, 128>}, {pipeline_mode = #tpu.pipeline_mode<synchronous>, transform_indices = @transform_19, window_bounds = array<i64: 128, 384>}, {pipeline_mode = #tpu.pipeline_mode<synchronous>, transform_indices = @transform_20, window_bounds = array<i64: 1, 384>}, {transform_indices = @transform_21, window_bounds = array<i64: 1, 1, 384>}]} {
    %c0 = arith.constant 0 : index
    %c0_0 = arith.constant 0 : index
    %0 = vector.load %arg2[%c0, %c0_0] : memref<224x9xf32, #tpu.memory_space<vmem>>, vector<224x1xf32>
    %c0_1 = arith.constant 0 : index
    %c1 = arith.constant 1 : index
    %1 = vector.load %arg2[%c0_1, %c1] : memref<224x9xf32, #tpu.memory_space<vmem>>, vector<224x1xf32>
    %c0_2 = arith.constant 0 : index
    %c2 = arith.constant 2 : index
    %2 = vector.load %arg2[%c0_2, %c2] : memref<224x9xf32, #tpu.memory_space<vmem>>, vector<224x1xf32>
    %c0_3 = arith.constant 0 : index
    %c3 = arith.constant 3 : index
    %3 = vector.load %arg2[%c0_3, %c3] : memref<224x9xf32, #tpu.memory_space<vmem>>, vector<224x1xf32>
    %c0_4 = arith.constant 0 : index
    %c4 = arith.constant 4 : index
    %4 = vector.load %arg2[%c0_4, %c4] : memref<224x9xf32, #tpu.memory_space<vmem>>, vector<224x1xf32>
    %c0_5 = arith.constant 0 : index
    %c5 = arith.constant 5 : index
    %5 = vector.load %arg2[%c0_5, %c5] : memref<224x9xf32, #tpu.memory_space<vmem>>, vector<224x1xf32>
    %c0_6 = arith.constant 0 : index
    %c6 = arith.constant 6 : index
    %6 = vector.load %arg2[%c0_6, %c6] : memref<224x9xf32, #tpu.memory_space<vmem>>, vector<224x1xf32>
    %c0_7 = arith.constant 0 : index
    %c7 = arith.constant 7 : index
    %7 = vector.load %arg2[%c0_7, %c7] : memref<224x9xf32, #tpu.memory_space<vmem>>, vector<224x1xf32>
    %c0_8 = arith.constant 0 : index
    %c8 = arith.constant 8 : index
    %8 = vector.load %arg2[%c0_8, %c8] : memref<224x9xf32, #tpu.memory_space<vmem>>, vector<224x1xf32>
    %c0_9 = arith.constant 0 : index
    %c0_10 = arith.constant 0 : index
    %9 = vector.load %arg3[%c0_9, %c0_10] : memref<56x9xf32, #tpu.memory_space<vmem>>, vector<56x1xf32>
    %c0_11 = arith.constant 0 : index
    %c1_12 = arith.constant 1 : index
    %10 = vector.load %arg3[%c0_11, %c1_12] : memref<56x9xf32, #tpu.memory_space<vmem>>, vector<56x1xf32>
    %c0_13 = arith.constant 0 : index
    %c2_14 = arith.constant 2 : index
    %11 = vector.load %arg3[%c0_13, %c2_14] : memref<56x9xf32, #tpu.memory_space<vmem>>, vector<56x1xf32>
    %c0_15 = arith.constant 0 : index
    %c3_16 = arith.constant 3 : index
    %12 = vector.load %arg3[%c0_15, %c3_16] : memref<56x9xf32, #tpu.memory_space<vmem>>, vector<56x1xf32>
    %c0_17 = arith.constant 0 : index
    %c4_18 = arith.constant 4 : index
    %13 = vector.load %arg3[%c0_17, %c4_18] : memref<56x9xf32, #tpu.memory_space<vmem>>, vector<56x1xf32>
    %c0_19 = arith.constant 0 : index
    %c5_20 = arith.constant 5 : index
    %14 = vector.load %arg3[%c0_19, %c5_20] : memref<56x9xf32, #tpu.memory_space<vmem>>, vector<56x1xf32>
    %c0_21 = arith.constant 0 : index
    %c6_22 = arith.constant 6 : index
    %15 = vector.load %arg3[%c0_21, %c6_22] : memref<56x9xf32, #tpu.memory_space<vmem>>, vector<56x1xf32>
    %c0_23 = arith.constant 0 : index
    %c7_24 = arith.constant 7 : index
    %16 = vector.load %arg3[%c0_23, %c7_24] : memref<56x9xf32, #tpu.memory_space<vmem>>, vector<56x1xf32>
    %c0_25 = arith.constant 0 : index
    %c8_26 = arith.constant 8 : index
    %17 = vector.load %arg3[%c0_25, %c8_26] : memref<56x9xf32, #tpu.memory_space<vmem>>, vector<56x1xf32>
    %c0_27 = arith.constant 0 : index
    %c0_28 = arith.constant 0 : index
    %c0_29 = arith.constant 0 : index
    %18 = vector.load %arg1[%c0_27, %c0_28, %c0_29] : memref<1x224x9xf32, #tpu.memory_space<vmem>>, vector<1x224x9xf32>
    %19 = vector.shape_cast %18 : vector<1x224x9xf32> to vector<224x9xf32>
    %c0_30 = arith.constant 0 : index
    %c0_31 = arith.constant 0 : index
    %20 = vector.load %arg6[%c0_30, %c0_31] : memref<9x128xf32, #tpu.memory_space<vmem>>, vector<9x128xf32>
    %cst = arith.constant dense<0.000000e+00> : vector<224x128xf32>
    %21 = tpu.matmul %19, %20, %cst {dimension_numbers = #tpu.dot_dimension_numbers<[1], [0], [0], [1], [0, 0, 1, 1], [], []>} : vector<224x9xf32>, vector<9x128xf32>, vector<224x128xf32> -> vector<224x128xf32>
    %c0_32 = arith.constant 0 : index
    %c0_33 = arith.constant 0 : index
    %22 = vector.load %arg7[%c0_32, %c0_33] : memref<1x128xf32, #tpu.memory_space<vmem>>, vector<1x128xf32>
    %23 = vector.broadcast %22 : vector<1x128xf32> to vector<224x128xf32>
    %24 = arith.addf %21, %23 : vector<224x128xf32>
    %cst_34 = arith.constant 0.000000e+00 : f32
    %25 = vector.broadcast %cst_34 : f32 to vector<224x128xf32>
    %26 = arith.maximumf %24, %25 : vector<224x128xf32>
    %c0_35 = arith.constant 0 : index
    %c0_36 = arith.constant 0 : index
    %27 = vector.load %arg8[%c0_35, %c0_36] : memref<9x128xf32, #tpu.memory_space<vmem>>, vector<9x128xf32>
    %c0_37 = arith.constant 0 : index
    %c0_38 = arith.constant 0 : index
    %28 = vector.load %arg9[%c0_37, %c0_38] : memref<1x128xf32, #tpu.memory_space<vmem>>, vector<1x128xf32>
    %cst_39 = arith.constant 0.000000e+00 : f32
    %29 = vector.broadcast %cst_39 : f32 to vector<17x128xf32>
    %30 = vector.extract_strided_slice %26 {offsets = [0, 0], sizes = [207, 128], strides = [1, 1]} : vector<224x128xf32> to vector<207x128xf32>
    %31 = tpu.concatenate %29, %30 in 0 : vector<17x128xf32>, vector<207x128xf32> -> vector<224x128xf32>
    %32 = vector.broadcast %0 : vector<224x1xf32> to vector<224x128xf32>
    %33 = arith.mulf %31, %32 : vector<224x128xf32>
    %34 = vector.extract_strided_slice %27 {offsets = [0, 0], sizes = [1, 128], strides = [1, 1]} : vector<9x128xf32> to vector<1x128xf32>
    %35 = vector.shape_cast %34 : vector<1x128xf32> to vector<128xf32>
    %36 = vector.shape_cast %35 : vector<128xf32> to vector<1x128xf32>
    %37 = vector.broadcast %36 : vector<1x128xf32> to vector<224x128xf32>
    %38 = arith.mulf %33, %37 : vector<224x128xf32>
    %cst_40 = arith.constant 0.000000e+00 : f32
    %39 = vector.broadcast %cst_40 : f32 to vector<16x128xf32>
    %40 = vector.extract_strided_slice %26 {offsets = [0, 0], sizes = [208, 128], strides = [1, 1]} : vector<224x128xf32> to vector<208x128xf32>
    %41 = tpu.concatenate %39, %40 in 0 : vector<16x128xf32>, vector<208x128xf32> -> vector<224x128xf32>
    %42 = vector.broadcast %1 : vector<224x1xf32> to vector<224x128xf32>
    %43 = arith.mulf %41, %42 : vector<224x128xf32>
    %44 = vector.extract_strided_slice %27 {offsets = [1, 0], sizes = [1, 128], strides = [1, 1]} : vector<9x128xf32> to vector<1x128xf32>
    %45 = vector.shape_cast %44 : vector<1x128xf32> to vector<128xf32>
    %46 = vector.shape_cast %45 : vector<128xf32> to vector<1x128xf32>
    %47 = vector.broadcast %46 : vector<1x128xf32> to vector<224x128xf32>
    %48 = arith.mulf %43, %47 : vector<224x128xf32>
    %49 = arith.addf %38, %48 : vector<224x128xf32>
    %cst_41 = arith.constant 0.000000e+00 : f32
    %50 = vector.broadcast %cst_41 : f32 to vector<15x128xf32>
    %51 = vector.extract_strided_slice %26 {offsets = [0, 0], sizes = [209, 128], strides = [1, 1]} : vector<224x128xf32> to vector<209x128xf32>
    %52 = tpu.concatenate %50, %51 in 0 : vector<15x128xf32>, vector<209x128xf32> -> vector<224x128xf32>
    %53 = vector.broadcast %2 : vector<224x1xf32> to vector<224x128xf32>
    %54 = arith.mulf %52, %53 : vector<224x128xf32>
    %55 = vector.extract_strided_slice %27 {offsets = [2, 0], sizes = [1, 128], strides = [1, 1]} : vector<9x128xf32> to vector<1x128xf32>
    %56 = vector.shape_cast %55 : vector<1x128xf32> to vector<128xf32>
    %57 = vector.shape_cast %56 : vector<128xf32> to vector<1x128xf32>
    %58 = vector.broadcast %57 : vector<1x128xf32> to vector<224x128xf32>
    %59 = arith.mulf %54, %58 : vector<224x128xf32>
    %60 = arith.addf %49, %59 : vector<224x128xf32>
    %cst_42 = arith.constant 0.000000e+00 : f32
    %61 = vector.broadcast %cst_42 : f32 to vector<1x128xf32>
    %62 = vector.extract_strided_slice %26 {offsets = [0, 0], sizes = [223, 128], strides = [1, 1]} : vector<224x128xf32> to vector<223x128xf32>
    %63 = tpu.concatenate %61, %62 in 0 : vector<1x128xf32>, vector<223x128xf32> -> vector<224x128xf32>
    %64 = vector.broadcast %3 : vector<224x1xf32> to vector<224x128xf32>
    %65 = arith.mulf %63, %64 : vector<224x128xf32>
    %66 = vector.extract_strided_slice %27 {offsets = [3, 0], sizes = [1, 128], strides = [1, 1]} : vector<9x128xf32> to vector<1x128xf32>
    %67 = vector.shape_cast %66 : vector<1x128xf32> to vector<128xf32>
    %68 = vector.shape_cast %67 : vector<128xf32> to vector<1x128xf32>
    %69 = vector.broadcast %68 : vector<1x128xf32> to vector<224x128xf32>
    %70 = arith.mulf %65, %69 : vector<224x128xf32>
    %71 = arith.addf %60, %70 : vector<224x128xf32>
    %72 = vector.broadcast %4 : vector<224x1xf32> to vector<224x128xf32>
    %73 = arith.mulf %26, %72 : vector<224x128xf32>
    %74 = vector.extract_strided_slice %27 {offsets = [4, 0], sizes = [1, 128], strides = [1, 1]} : vector<9x128xf32> to vector<1x128xf32>
    %75 = vector.shape_cast %74 : vector<1x128xf32> to vector<128xf32>
    %76 = vector.shape_cast %75 : vector<128xf32> to vector<1x128xf32>
    %77 = vector.broadcast %76 : vector<1x128xf32> to vector<224x128xf32>
    %78 = arith.mulf %73, %77 : vector<224x128xf32>
    %79 = arith.addf %71, %78 : vector<224x128xf32>
    %cst_43 = arith.constant 0.000000e+00 : f32
    %80 = vector.broadcast %cst_43 : f32 to vector<1x128xf32>
    %81 = vector.extract_strided_slice %26 {offsets = [1, 0], sizes = [223, 128], strides = [1, 1]} : vector<224x128xf32> to vector<223x128xf32>
    %82 = tpu.concatenate %81, %80 in 0 : vector<223x128xf32>, vector<1x128xf32> -> vector<224x128xf32>
    %83 = vector.broadcast %5 : vector<224x1xf32> to vector<224x128xf32>
    %84 = arith.mulf %82, %83 : vector<224x128xf32>
    %85 = vector.extract_strided_slice %27 {offsets = [5, 0], sizes = [1, 128], strides = [1, 1]} : vector<9x128xf32> to vector<1x128xf32>
    %86 = vector.shape_cast %85 : vector<1x128xf32> to vector<128xf32>
    %87 = vector.shape_cast %86 : vector<128xf32> to vector<1x128xf32>
    %88 = vector.broadcast %87 : vector<1x128xf32> to vector<224x128xf32>
    %89 = arith.mulf %84, %88 : vector<224x128xf32>
    %90 = arith.addf %79, %89 : vector<224x128xf32>
    %cst_44 = arith.constant 0.000000e+00 : f32
    %91 = vector.broadcast %cst_44 : f32 to vector<15x128xf32>
    %92 = vector.extract_strided_slice %26 {offsets = [15, 0], sizes = [209, 128], strides = [1, 1]} : vector<224x128xf32> to vector<209x128xf32>
    %93 = tpu.concatenate %92, %91 in 0 : vector<209x128xf32>, vector<15x128xf32> -> vector<224x128xf32>
    %94 = vector.broadcast %6 : vector<224x1xf32> to vector<224x128xf32>
    %95 = arith.mulf %93, %94 : vector<224x128xf32>
    %96 = vector.extract_strided_slice %27 {offsets = [6, 0], sizes = [1, 128], strides = [1, 1]} : vector<9x128xf32> to vector<1x128xf32>
    %97 = vector.shape_cast %96 : vector<1x128xf32> to vector<128xf32>
    %98 = vector.shape_cast %97 : vector<128xf32> to vector<1x128xf32>
    %99 = vector.broadcast %98 : vector<1x128xf32> to vector<224x128xf32>
    %100 = arith.mulf %95, %99 : vector<224x128xf32>
    %101 = arith.addf %90, %100 : vector<224x128xf32>
    %cst_45 = arith.constant 0.000000e+00 : f32
    %102 = vector.broadcast %cst_45 : f32 to vector<16x128xf32>
    %103 = vector.extract_strided_slice %26 {offsets = [16, 0], sizes = [208, 128], strides = [1, 1]} : vector<224x128xf32> to vector<208x128xf32>
    %104 = tpu.concatenate %103, %102 in 0 : vector<208x128xf32>, vector<16x128xf32> -> vector<224x128xf32>
    %105 = vector.broadcast %7 : vector<224x1xf32> to vector<224x128xf32>
    %106 = arith.mulf %104, %105 : vector<224x128xf32>
    %107 = vector.extract_strided_slice %27 {offsets = [7, 0], sizes = [1, 128], strides = [1, 1]} : vector<9x128xf32> to vector<1x128xf32>
    %108 = vector.shape_cast %107 : vector<1x128xf32> to vector<128xf32>
    %109 = vector.shape_cast %108 : vector<128xf32> to vector<1x128xf32>
    %110 = vector.broadcast %109 : vector<1x128xf32> to vector<224x128xf32>
    %111 = arith.mulf %106, %110 : vector<224x128xf32>
    %112 = arith.addf %101, %111 : vector<224x128xf32>
    %cst_46 = arith.constant 0.000000e+00 : f32
    %113 = vector.broadcast %cst_46 : f32 to vector<17x128xf32>
    %114 = vector.extract_strided_slice %26 {offsets = [17, 0], sizes = [207, 128], strides = [1, 1]} : vector<224x128xf32> to vector<207x128xf32>
    %115 = tpu.concatenate %114, %113 in 0 : vector<207x128xf32>, vector<17x128xf32> -> vector<224x128xf32>
    %116 = vector.broadcast %8 : vector<224x1xf32> to vector<224x128xf32>
    %117 = arith.mulf %115, %116 : vector<224x128xf32>
    %118 = vector.extract_strided_slice %27 {offsets = [8, 0], sizes = [1, 128], strides = [1, 1]} : vector<9x128xf32> to vector<1x128xf32>
    %119 = vector.shape_cast %118 : vector<1x128xf32> to vector<128xf32>
    %120 = vector.shape_cast %119 : vector<128xf32> to vector<1x128xf32>
    %121 = vector.broadcast %120 : vector<1x128xf32> to vector<224x128xf32>
    %122 = arith.mulf %117, %121 : vector<224x128xf32>
    %123 = arith.addf %112, %122 : vector<224x128xf32>
    %124 = vector.broadcast %28 : vector<1x128xf32> to vector<224x128xf32>
    %125 = arith.addf %123, %124 : vector<224x128xf32>
    %cst_47 = arith.constant 0.000000e+00 : f32
    %126 = vector.broadcast %cst_47 : f32 to vector<224x128xf32>
    %127 = arith.maximumf %125, %126 : vector<224x128xf32>
    %c0_48 = arith.constant 0 : index
    %c0_49 = arith.constant 0 : index
    %128 = vector.load %arg10[%c0_48, %c0_49] : memref<128x128xf32, #tpu.memory_space<vmem>>, vector<128x128xf32>
    %cst_50 = arith.constant dense<0.000000e+00> : vector<224x128xf32>
    %129 = tpu.matmul %127, %128, %cst_50 {dimension_numbers = #tpu.dot_dimension_numbers<[1], [0], [0], [1], [0, 0, 1, 1], [], []>} : vector<224x128xf32>, vector<128x128xf32>, vector<224x128xf32> -> vector<224x128xf32>
    %c0_51 = arith.constant 0 : index
    %c0_52 = arith.constant 0 : index
    %130 = vector.load %arg11[%c0_51, %c0_52] : memref<1x128xf32, #tpu.memory_space<vmem>>, vector<1x128xf32>
    %131 = vector.broadcast %130 : vector<1x128xf32> to vector<224x128xf32>
    %132 = arith.addf %129, %131 : vector<224x128xf32>
    %cst_53 = arith.constant 0.000000e+00 : f32
    %133 = vector.broadcast %cst_53 : f32 to vector<224x128xf32>
    %134 = arith.maximumf %132, %133 : vector<224x128xf32>
    %c0_54 = arith.constant 0 : index
    %c0_55 = arith.constant 0 : index
    %135 = vector.load %arg12[%c0_54, %c0_55] : memref<9x128xf32, #tpu.memory_space<vmem>>, vector<9x128xf32>
    %c0_56 = arith.constant 0 : index
    %c0_57 = arith.constant 0 : index
    %136 = vector.load %arg13[%c0_56, %c0_57] : memref<1x128xf32, #tpu.memory_space<vmem>>, vector<1x128xf32>
    %cst_58 = arith.constant 0.000000e+00 : f32
    %137 = vector.broadcast %cst_58 : f32 to vector<17x128xf32>
    %138 = vector.extract_strided_slice %134 {offsets = [0, 0], sizes = [207, 128], strides = [1, 1]} : vector<224x128xf32> to vector<207x128xf32>
    %139 = tpu.concatenate %137, %138 in 0 : vector<17x128xf32>, vector<207x128xf32> -> vector<224x128xf32>
    %140 = vector.broadcast %0 : vector<224x1xf32> to vector<224x128xf32>
    %141 = arith.mulf %139, %140 : vector<224x128xf32>
    %142 = vector.extract_strided_slice %135 {offsets = [0, 0], sizes = [1, 128], strides = [1, 1]} : vector<9x128xf32> to vector<1x128xf32>
    %143 = vector.shape_cast %142 : vector<1x128xf32> to vector<128xf32>
    %144 = vector.shape_cast %143 : vector<128xf32> to vector<1x128xf32>
    %145 = vector.broadcast %144 : vector<1x128xf32> to vector<224x128xf32>
    %146 = arith.mulf %141, %145 : vector<224x128xf32>
    %cst_59 = arith.constant 0.000000e+00 : f32
    %147 = vector.broadcast %cst_59 : f32 to vector<16x128xf32>
    %148 = vector.extract_strided_slice %134 {offsets = [0, 0], sizes = [208, 128], strides = [1, 1]} : vector<224x128xf32> to vector<208x128xf32>
    %149 = tpu.concatenate %147, %148 in 0 : vector<16x128xf32>, vector<208x128xf32> -> vector<224x128xf32>
    %150 = vector.broadcast %1 : vector<224x1xf32> to vector<224x128xf32>
    %151 = arith.mulf %149, %150 : vector<224x128xf32>
    %152 = vector.extract_strided_slice %135 {offsets = [1, 0], sizes = [1, 128], strides = [1, 1]} : vector<9x128xf32> to vector<1x128xf32>
    %153 = vector.shape_cast %152 : vector<1x128xf32> to vector<128xf32>
    %154 = vector.shape_cast %153 : vector<128xf32> to vector<1x128xf32>
    %155 = vector.broadcast %154 : vector<1x128xf32> to vector<224x128xf32>
    %156 = arith.mulf %151, %155 : vector<224x128xf32>
    %157 = arith.addf %146, %156 : vector<224x128xf32>
    %cst_60 = arith.constant 0.000000e+00 : f32
    %158 = vector.broadcast %cst_60 : f32 to vector<15x128xf32>
    %159 = vector.extract_strided_slice %134 {offsets = [0, 0], sizes = [209, 128], strides = [1, 1]} : vector<224x128xf32> to vector<209x128xf32>
    %160 = tpu.concatenate %158, %159 in 0 : vector<15x128xf32>, vector<209x128xf32> -> vector<224x128xf32>
    %161 = vector.broadcast %2 : vector<224x1xf32> to vector<224x128xf32>
    %162 = arith.mulf %160, %161 : vector<224x128xf32>
    %163 = vector.extract_strided_slice %135 {offsets = [2, 0], sizes = [1, 128], strides = [1, 1]} : vector<9x128xf32> to vector<1x128xf32>
    %164 = vector.shape_cast %163 : vector<1x128xf32> to vector<128xf32>
    %165 = vector.shape_cast %164 : vector<128xf32> to vector<1x128xf32>
    %166 = vector.broadcast %165 : vector<1x128xf32> to vector<224x128xf32>
    %167 = arith.mulf %162, %166 : vector<224x128xf32>
    %168 = arith.addf %157, %167 : vector<224x128xf32>
    %cst_61 = arith.constant 0.000000e+00 : f32
    %169 = vector.broadcast %cst_61 : f32 to vector<1x128xf32>
    %170 = vector.extract_strided_slice %134 {offsets = [0, 0], sizes = [223, 128], strides = [1, 1]} : vector<224x128xf32> to vector<223x128xf32>
    %171 = tpu.concatenate %169, %170 in 0 : vector<1x128xf32>, vector<223x128xf32> -> vector<224x128xf32>
    %172 = vector.broadcast %3 : vector<224x1xf32> to vector<224x128xf32>
    %173 = arith.mulf %171, %172 : vector<224x128xf32>
    %174 = vector.extract_strided_slice %135 {offsets = [3, 0], sizes = [1, 128], strides = [1, 1]} : vector<9x128xf32> to vector<1x128xf32>
    %175 = vector.shape_cast %174 : vector<1x128xf32> to vector<128xf32>
    %176 = vector.shape_cast %175 : vector<128xf32> to vector<1x128xf32>
    %177 = vector.broadcast %176 : vector<1x128xf32> to vector<224x128xf32>
    %178 = arith.mulf %173, %177 : vector<224x128xf32>
    %179 = arith.addf %168, %178 : vector<224x128xf32>
    %180 = vector.broadcast %4 : vector<224x1xf32> to vector<224x128xf32>
    %181 = arith.mulf %134, %180 : vector<224x128xf32>
    %182 = vector.extract_strided_slice %135 {offsets = [4, 0], sizes = [1, 128], strides = [1, 1]} : vector<9x128xf32> to vector<1x128xf32>
    %183 = vector.shape_cast %182 : vector<1x128xf32> to vector<128xf32>
    %184 = vector.shape_cast %183 : vector<128xf32> to vector<1x128xf32>
    %185 = vector.broadcast %184 : vector<1x128xf32> to vector<224x128xf32>
    %186 = arith.mulf %181, %185 : vector<224x128xf32>
    %187 = arith.addf %179, %186 : vector<224x128xf32>
    %cst_62 = arith.constant 0.000000e+00 : f32
    %188 = vector.broadcast %cst_62 : f32 to vector<1x128xf32>
    %189 = vector.extract_strided_slice %134 {offsets = [1, 0], sizes = [223, 128], strides = [1, 1]} : vector<224x128xf32> to vector<223x128xf32>
    %190 = tpu.concatenate %189, %188 in 0 : vector<223x128xf32>, vector<1x128xf32> -> vector<224x128xf32>
    %191 = vector.broadcast %5 : vector<224x1xf32> to vector<224x128xf32>
    %192 = arith.mulf %190, %191 : vector<224x128xf32>
    %193 = vector.extract_strided_slice %135 {offsets = [5, 0], sizes = [1, 128], strides = [1, 1]} : vector<9x128xf32> to vector<1x128xf32>
    %194 = vector.shape_cast %193 : vector<1x128xf32> to vector<128xf32>
    %195 = vector.shape_cast %194 : vector<128xf32> to vector<1x128xf32>
    %196 = vector.broadcast %195 : vector<1x128xf32> to vector<224x128xf32>
    %197 = arith.mulf %192, %196 : vector<224x128xf32>
    %198 = arith.addf %187, %197 : vector<224x128xf32>
    %cst_63 = arith.constant 0.000000e+00 : f32
    %199 = vector.broadcast %cst_63 : f32 to vector<15x128xf32>
    %200 = vector.extract_strided_slice %134 {offsets = [15, 0], sizes = [209, 128], strides = [1, 1]} : vector<224x128xf32> to vector<209x128xf32>
    %201 = tpu.concatenate %200, %199 in 0 : vector<209x128xf32>, vector<15x128xf32> -> vector<224x128xf32>
    %202 = vector.broadcast %6 : vector<224x1xf32> to vector<224x128xf32>
    %203 = arith.mulf %201, %202 : vector<224x128xf32>
    %204 = vector.extract_strided_slice %135 {offsets = [6, 0], sizes = [1, 128], strides = [1, 1]} : vector<9x128xf32> to vector<1x128xf32>
    %205 = vector.shape_cast %204 : vector<1x128xf32> to vector<128xf32>
    %206 = vector.shape_cast %205 : vector<128xf32> to vector<1x128xf32>
    %207 = vector.broadcast %206 : vector<1x128xf32> to vector<224x128xf32>
    %208 = arith.mulf %203, %207 : vector<224x128xf32>
    %209 = arith.addf %198, %208 : vector<224x128xf32>
    %cst_64 = arith.constant 0.000000e+00 : f32
    %210 = vector.broadcast %cst_64 : f32 to vector<16x128xf32>
    %211 = vector.extract_strided_slice %134 {offsets = [16, 0], sizes = [208, 128], strides = [1, 1]} : vector<224x128xf32> to vector<208x128xf32>
    %212 = tpu.concatenate %211, %210 in 0 : vector<208x128xf32>, vector<16x128xf32> -> vector<224x128xf32>
    %213 = vector.broadcast %7 : vector<224x1xf32> to vector<224x128xf32>
    %214 = arith.mulf %212, %213 : vector<224x128xf32>
    %215 = vector.extract_strided_slice %135 {offsets = [7, 0], sizes = [1, 128], strides = [1, 1]} : vector<9x128xf32> to vector<1x128xf32>
    %216 = vector.shape_cast %215 : vector<1x128xf32> to vector<128xf32>
    %217 = vector.shape_cast %216 : vector<128xf32> to vector<1x128xf32>
    %218 = vector.broadcast %217 : vector<1x128xf32> to vector<224x128xf32>
    %219 = arith.mulf %214, %218 : vector<224x128xf32>
    %220 = arith.addf %209, %219 : vector<224x128xf32>
    %cst_65 = arith.constant 0.000000e+00 : f32
    %221 = vector.broadcast %cst_65 : f32 to vector<17x128xf32>
    %222 = vector.extract_strided_slice %134 {offsets = [17, 0], sizes = [207, 128], strides = [1, 1]} : vector<224x128xf32> to vector<207x128xf32>
    %223 = tpu.concatenate %222, %221 in 0 : vector<207x128xf32>, vector<17x128xf32> -> vector<224x128xf32>
    %224 = vector.broadcast %8 : vector<224x1xf32> to vector<224x128xf32>
    %225 = arith.mulf %223, %224 : vector<224x128xf32>
    %226 = vector.extract_strided_slice %135 {offsets = [8, 0], sizes = [1, 128], strides = [1, 1]} : vector<9x128xf32> to vector<1x128xf32>
    %227 = vector.shape_cast %226 : vector<1x128xf32> to vector<128xf32>
    %228 = vector.shape_cast %227 : vector<128xf32> to vector<1x128xf32>
    %229 = vector.broadcast %228 : vector<1x128xf32> to vector<224x128xf32>
    %230 = arith.mulf %225, %229 : vector<224x128xf32>
    %231 = arith.addf %220, %230 : vector<224x128xf32>
    %232 = vector.broadcast %136 : vector<1x128xf32> to vector<224x128xf32>
    %233 = arith.addf %231, %232 : vector<224x128xf32>
    %cst_66 = arith.constant 0.000000e+00 : f32
    %234 = vector.broadcast %cst_66 : f32 to vector<224x128xf32>
    %235 = arith.maximumf %233, %234 : vector<224x128xf32>
    %c0_67 = arith.constant 0 : index
    %c0_68 = arith.constant 0 : index
    %236 = vector.load %arg4[%c0_67, %c0_68] : memref<56x224xf32, #tpu.memory_space<vmem>>, vector<56x224xf32>
    %cst_69 = arith.constant dense<0.000000e+00> : vector<56x128xf32>
    %237 = tpu.matmul %236, %235, %cst_69 {dimension_numbers = #tpu.dot_dimension_numbers<[1], [0], [0], [1], [0, 0, 1, 1], [], []>} : vector<56x224xf32>, vector<224x128xf32>, vector<56x128xf32> -> vector<56x128xf32>
    %c0_70 = arith.constant 0 : index
    %c0_71 = arith.constant 0 : index
    %238 = vector.load %arg14[%c0_70, %c0_71] : memref<128x128xf32, #tpu.memory_space<vmem>>, vector<128x128xf32>
    %cst_72 = arith.constant dense<0.000000e+00> : vector<56x128xf32>
    %239 = tpu.matmul %237, %238, %cst_72 {dimension_numbers = #tpu.dot_dimension_numbers<[1], [0], [0], [1], [0, 0, 1, 1], [], []>} : vector<56x128xf32>, vector<128x128xf32>, vector<56x128xf32> -> vector<56x128xf32>
    %c0_73 = arith.constant 0 : index
    %c0_74 = arith.constant 0 : index
    %240 = vector.load %arg15[%c0_73, %c0_74] : memref<1x128xf32, #tpu.memory_space<vmem>>, vector<1x128xf32>
    %241 = vector.broadcast %240 : vector<1x128xf32> to vector<56x128xf32>
    %242 = arith.addf %239, %241 : vector<56x128xf32>
    %cst_75 = arith.constant 0.000000e+00 : f32
    %243 = vector.broadcast %cst_75 : f32 to vector<56x128xf32>
    %244 = arith.maximumf %242, %243 : vector<56x128xf32>
    %c0_76 = arith.constant 0 : index
    %c0_77 = arith.constant 0 : index
    %245 = vector.load %arg16[%c0_76, %c0_77] : memref<9x128xf32, #tpu.memory_space<vmem>>, vector<9x128xf32>
    %c0_78 = arith.constant 0 : index
    %c0_79 = arith.constant 0 : index
    %246 = vector.load %arg17[%c0_78, %c0_79] : memref<1x128xf32, #tpu.memory_space<vmem>>, vector<1x128xf32>
    %cst_80 = arith.constant 0.000000e+00 : f32
    %247 = vector.broadcast %cst_80 : f32 to vector<9x128xf32>
    %248 = vector.extract_strided_slice %244 {offsets = [0, 0], sizes = [47, 128], strides = [1, 1]} : vector<56x128xf32> to vector<47x128xf32>
    %249 = tpu.concatenate %247, %248 in 0 : vector<9x128xf32>, vector<47x128xf32> -> vector<56x128xf32>
    %250 = vector.broadcast %9 : vector<56x1xf32> to vector<56x128xf32>
    %251 = arith.mulf %249, %250 : vector<56x128xf32>
    %252 = vector.extract_strided_slice %245 {offsets = [0, 0], sizes = [1, 128], strides = [1, 1]} : vector<9x128xf32> to vector<1x128xf32>
    %253 = vector.shape_cast %252 : vector<1x128xf32> to vector<128xf32>
    %254 = vector.shape_cast %253 : vector<128xf32> to vector<1x128xf32>
    %255 = vector.broadcast %254 : vector<1x128xf32> to vector<56x128xf32>
    %256 = arith.mulf %251, %255 : vector<56x128xf32>
    %cst_81 = arith.constant 0.000000e+00 : f32
    %257 = vector.broadcast %cst_81 : f32 to vector<8x128xf32>
    %258 = vector.extract_strided_slice %244 {offsets = [0, 0], sizes = [48, 128], strides = [1, 1]} : vector<56x128xf32> to vector<48x128xf32>
    %259 = tpu.concatenate %257, %258 in 0 : vector<8x128xf32>, vector<48x128xf32> -> vector<56x128xf32>
    %260 = vector.broadcast %10 : vector<56x1xf32> to vector<56x128xf32>
    %261 = arith.mulf %259, %260 : vector<56x128xf32>
    %262 = vector.extract_strided_slice %245 {offsets = [1, 0], sizes = [1, 128], strides = [1, 1]} : vector<9x128xf32> to vector<1x128xf32>
    %263 = vector.shape_cast %262 : vector<1x128xf32> to vector<128xf32>
    %264 = vector.shape_cast %263 : vector<128xf32> to vector<1x128xf32>
    %265 = vector.broadcast %264 : vector<1x128xf32> to vector<56x128xf32>
    %266 = arith.mulf %261, %265 : vector<56x128xf32>
    %267 = arith.addf %256, %266 : vector<56x128xf32>
    %cst_82 = arith.constant 0.000000e+00 : f32
    %268 = vector.broadcast %cst_82 : f32 to vector<7x128xf32>
    %269 = vector.extract_strided_slice %244 {offsets = [0, 0], sizes = [49, 128], strides = [1, 1]} : vector<56x128xf32> to vector<49x128xf32>
    %270 = tpu.concatenate %268, %269 in 0 : vector<7x128xf32>, vector<49x128xf32> -> vector<56x128xf32>
    %271 = vector.broadcast %11 : vector<56x1xf32> to vector<56x128xf32>
    %272 = arith.mulf %270, %271 : vector<56x128xf32>
    %273 = vector.extract_strided_slice %245 {offsets = [2, 0], sizes = [1, 128], strides = [1, 1]} : vector<9x128xf32> to vector<1x128xf32>
    %274 = vector.shape_cast %273 : vector<1x128xf32> to vector<128xf32>
    %275 = vector.shape_cast %274 : vector<128xf32> to vector<1x128xf32>
    %276 = vector.broadcast %275 : vector<1x128xf32> to vector<56x128xf32>
    %277 = arith.mulf %272, %276 : vector<56x128xf32>
    %278 = arith.addf %267, %277 : vector<56x128xf32>
    %cst_83 = arith.constant 0.000000e+00 : f32
    %279 = vector.broadcast %cst_83 : f32 to vector<1x128xf32>
    %280 = vector.extract_strided_slice %244 {offsets = [0, 0], sizes = [55, 128], strides = [1, 1]} : vector<56x128xf32> to vector<55x128xf32>
    %281 = tpu.concatenate %279, %280 in 0 : vector<1x128xf32>, vector<55x128xf32> -> vector<56x128xf32>
    %282 = vector.broadcast %12 : vector<56x1xf32> to vector<56x128xf32>
    %283 = arith.mulf %281, %282 : vector<56x128xf32>
    %284 = vector.extract_strided_slice %245 {offsets = [3, 0], sizes = [1, 128], strides = [1, 1]} : vector<9x128xf32> to vector<1x128xf32>
    %285 = vector.shape_cast %284 : vector<1x128xf32> to vector<128xf32>
    %286 = vector.shape_cast %285 : vector<128xf32> to vector<1x128xf32>
    %287 = vector.broadcast %286 : vector<1x128xf32> to vector<56x128xf32>
    %288 = arith.mulf %283, %287 : vector<56x128xf32>
    %289 = arith.addf %278, %288 : vector<56x128xf32>
    %290 = vector.broadcast %13 : vector<56x1xf32> to vector<56x128xf32>
    %291 = arith.mulf %244, %290 : vector<56x128xf32>
    %292 = vector.extract_strided_slice %245 {offsets = [4, 0], sizes = [1, 128], strides = [1, 1]} : vector<9x128xf32> to vector<1x128xf32>
    %293 = vector.shape_cast %292 : vector<1x128xf32> to vector<128xf32>
    %294 = vector.shape_cast %293 : vector<128xf32> to vector<1x128xf32>
    %295 = vector.broadcast %294 : vector<1x128xf32> to vector<56x128xf32>
    %296 = arith.mulf %291, %295 : vector<56x128xf32>
    %297 = arith.addf %289, %296 : vector<56x128xf32>
    %cst_84 = arith.constant 0.000000e+00 : f32
    %298 = vector.broadcast %cst_84 : f32 to vector<1x128xf32>
    %299 = vector.extract_strided_slice %244 {offsets = [1, 0], sizes = [55, 128], strides = [1, 1]} : vector<56x128xf32> to vector<55x128xf32>
    %300 = tpu.concatenate %299, %298 in 0 : vector<55x128xf32>, vector<1x128xf32> -> vector<56x128xf32>
    %301 = vector.broadcast %14 : vector<56x1xf32> to vector<56x128xf32>
    %302 = arith.mulf %300, %301 : vector<56x128xf32>
    %303 = vector.extract_strided_slice %245 {offsets = [5, 0], sizes = [1, 128], strides = [1, 1]} : vector<9x128xf32> to vector<1x128xf32>
    %304 = vector.shape_cast %303 : vector<1x128xf32> to vector<128xf32>
    %305 = vector.shape_cast %304 : vector<128xf32> to vector<1x128xf32>
    %306 = vector.broadcast %305 : vector<1x128xf32> to vector<56x128xf32>
    %307 = arith.mulf %302, %306 : vector<56x128xf32>
    %308 = arith.addf %297, %307 : vector<56x128xf32>
    %cst_85 = arith.constant 0.000000e+00 : f32
    %309 = vector.broadcast %cst_85 : f32 to vector<7x128xf32>
    %310 = vector.extract_strided_slice %244 {offsets = [7, 0], sizes = [49, 128], strides = [1, 1]} : vector<56x128xf32> to vector<49x128xf32>
    %311 = tpu.concatenate %310, %309 in 0 : vector<49x128xf32>, vector<7x128xf32> -> vector<56x128xf32>
    %312 = vector.broadcast %15 : vector<56x1xf32> to vector<56x128xf32>
    %313 = arith.mulf %311, %312 : vector<56x128xf32>
    %314 = vector.extract_strided_slice %245 {offsets = [6, 0], sizes = [1, 128], strides = [1, 1]} : vector<9x128xf32> to vector<1x128xf32>
    %315 = vector.shape_cast %314 : vector<1x128xf32> to vector<128xf32>
    %316 = vector.shape_cast %315 : vector<128xf32> to vector<1x128xf32>
    %317 = vector.broadcast %316 : vector<1x128xf32> to vector<56x128xf32>
    %318 = arith.mulf %313, %317 : vector<56x128xf32>
    %319 = arith.addf %308, %318 : vector<56x128xf32>
    %cst_86 = arith.constant 0.000000e+00 : f32
    %320 = vector.broadcast %cst_86 : f32 to vector<8x128xf32>
    %321 = vector.extract_strided_slice %244 {offsets = [8, 0], sizes = [48, 128], strides = [1, 1]} : vector<56x128xf32> to vector<48x128xf32>
    %322 = tpu.concatenate %321, %320 in 0 : vector<48x128xf32>, vector<8x128xf32> -> vector<56x128xf32>
    %323 = vector.broadcast %16 : vector<56x1xf32> to vector<56x128xf32>
    %324 = arith.mulf %322, %323 : vector<56x128xf32>
    %325 = vector.extract_strided_slice %245 {offsets = [7, 0], sizes = [1, 128], strides = [1, 1]} : vector<9x128xf32> to vector<1x128xf32>
    %326 = vector.shape_cast %325 : vector<1x128xf32> to vector<128xf32>
    %327 = vector.shape_cast %326 : vector<128xf32> to vector<1x128xf32>
    %328 = vector.broadcast %327 : vector<1x128xf32> to vector<56x128xf32>
    %329 = arith.mulf %324, %328 : vector<56x128xf32>
    %330 = arith.addf %319, %329 : vector<56x128xf32>
    %cst_87 = arith.constant 0.000000e+00 : f32
    %331 = vector.broadcast %cst_87 : f32 to vector<9x128xf32>
    %332 = vector.extract_strided_slice %244 {offsets = [9, 0], sizes = [47, 128], strides = [1, 1]} : vector<56x128xf32> to vector<47x128xf32>
    %333 = tpu.concatenate %332, %331 in 0 : vector<47x128xf32>, vector<9x128xf32> -> vector<56x128xf32>
    %334 = vector.broadcast %17 : vector<56x1xf32> to vector<56x128xf32>
    %335 = arith.mulf %333, %334 : vector<56x128xf32>
    %336 = vector.extract_strided_slice %245 {offsets = [8, 0], sizes = [1, 128], strides = [1, 1]} : vector<9x128xf32> to vector<1x128xf32>
    %337 = vector.shape_cast %336 : vector<1x128xf32> to vector<128xf32>
    %338 = vector.shape_cast %337 : vector<128xf32> to vector<1x128xf32>
    %339 = vector.broadcast %338 : vector<1x128xf32> to vector<56x128xf32>
    %340 = arith.mulf %335, %339 : vector<56x128xf32>
    %341 = arith.addf %330, %340 : vector<56x128xf32>
    %342 = vector.broadcast %246 : vector<1x128xf32> to vector<56x128xf32>
    %343 = arith.addf %341, %342 : vector<56x128xf32>
    %cst_88 = arith.constant 0.000000e+00 : f32
    %344 = vector.broadcast %cst_88 : f32 to vector<56x128xf32>
    %345 = arith.maximumf %343, %344 : vector<56x128xf32>
    %c0_89 = arith.constant 0 : index
    %c0_90 = arith.constant 0 : index
    %346 = vector.load %arg18[%c0_89, %c0_90] : memref<128x128xf32, #tpu.memory_space<vmem>>, vector<128x128xf32>
    %cst_91 = arith.constant dense<0.000000e+00> : vector<56x128xf32>
    %347 = tpu.matmul %345, %346, %cst_91 {dimension_numbers = #tpu.dot_dimension_numbers<[1], [0], [0], [1], [0, 0, 1, 1], [], []>} : vector<56x128xf32>, vector<128x128xf32>, vector<56x128xf32> -> vector<56x128xf32>
    %c0_92 = arith.constant 0 : index
    %c0_93 = arith.constant 0 : index
    %348 = vector.load %arg19[%c0_92, %c0_93] : memref<1x128xf32, #tpu.memory_space<vmem>>, vector<1x128xf32>
    %349 = vector.broadcast %348 : vector<1x128xf32> to vector<56x128xf32>
    %350 = arith.addf %347, %349 : vector<56x128xf32>
    %cst_94 = arith.constant 0.000000e+00 : f32
    %351 = vector.broadcast %cst_94 : f32 to vector<56x128xf32>
    %352 = arith.maximumf %350, %351 : vector<56x128xf32>
    %c0_95 = arith.constant 0 : index
    %c0_96 = arith.constant 0 : index
    %353 = vector.load %arg5[%c0_95, %c0_96] : memref<1x56xf32, #tpu.memory_space<vmem>>, vector<1x56xf32>
    %cst_97 = arith.constant dense<0.000000e+00> : vector<1x128xf32>
    %354 = tpu.matmul %353, %352, %cst_97 {dimension_numbers = #tpu.dot_dimension_numbers<[1], [0], [0], [1], [0, 0, 1, 1], [], []>} : vector<1x56xf32>, vector<56x128xf32>, vector<1x128xf32> -> vector<1x128xf32>
    %c0_98 = arith.constant 0 : index
    %c0_99 = arith.constant 0 : index
    %355 = vector.load %arg20[%c0_98, %c0_99] : memref<128x384xf32, #tpu.memory_space<vmem>>, vector<128x384xf32>
    %cst_100 = arith.constant dense<0.000000e+00> : vector<1x384xf32>
    %356 = tpu.matmul %354, %355, %cst_100 {dimension_numbers = #tpu.dot_dimension_numbers<[1], [0], [0], [1], [0, 0, 1, 1], [], []>} : vector<1x128xf32>, vector<128x384xf32>, vector<1x384xf32> -> vector<1x384xf32>
    %c0_101 = arith.constant 0 : index
    %c0_102 = arith.constant 0 : index
    %357 = vector.load %arg21[%c0_101, %c0_102] : memref<1x384xf32, #tpu.memory_space<vmem>>, vector<1x384xf32>
    %358 = arith.addf %356, %357 : vector<1x384xf32>
    %c0_103 = arith.constant 0 : index
    %c0_104 = arith.constant 0 : index
    %c0_105 = arith.constant 0 : index
    %359 = vector.load %arg22[%c0_103, %c0_104, %c0_105] : memref<1x1x384xf32, #tpu.memory_space<vmem>>, vector<1x1x384xf32>
    %360 = vector.shape_cast %359 : vector<1x1x384xf32> to vector<1x384xf32>
    %361 = vector.shape_cast %358 : vector<1x384xf32> to vector<1x1x384xf32>
    tpu.vector_store %arg22[%c0_103, %c0_104, %c0_105], %361 {strides = array<i32>} : memref<1x1x384xf32, #tpu.memory_space<vmem>>, vector<1x1x384xf32>,
    return
  }
  func.func @transform_0(%arg0: i32) -> (i32, i32, i32) {
    %c0_i32 = arith.constant 0 : i32
    %c0_i32_0 = arith.constant 0 : i32
    %c0_i32_1 = arith.constant 0 : i32
    return %arg0, %c0_i32, %c0_i32_0 : i32, i32, i32
  }
  func.func @transform_1(%arg0: i32) -> (i32, i32) {
    %c0_i32 = arith.constant 0 : i32
    %c0_i32_0 = arith.constant 0 : i32
    %c0_i32_1 = arith.constant 0 : i32
    return %c0_i32, %c0_i32_0 : i32, i32
  }
  func.func @transform_2(%arg0: i32) -> (i32, i32) {
    %c0_i32 = arith.constant 0 : i32
    %c0_i32_0 = arith.constant 0 : i32
    %c0_i32_1 = arith.constant 0 : i32
    return %c0_i32, %c0_i32_0 : i32, i32
  }
  func.func @transform_3(%arg0: i32) -> (i32, i32) {
    %c0_i32 = arith.constant 0 : i32
    %c0_i32_0 = arith.constant 0 : i32
    %c0_i32_1 = arith.constant 0 : i32
    return %c0_i32, %c0_i32_0 : i32, i32
  }
  func.func @transform_4(%arg0: i32) -> (i32, i32) {
    %c0_i32 = arith.constant 0 : i32
    %c0_i32_0 = arith.constant 0 : i32
    %c0_i32_1 = arith.constant 0 : i32
    return %c0_i32, %c0_i32_0 : i32, i32
  }
  func.func @transform_5(%arg0: i32) -> (i32, i32) {
    %c0_i32 = arith.constant 0 : i32
    %c0_i32_0 = arith.constant 0 : i32
    %c0_i32_1 = arith.constant 0 : i32
    return %c0_i32, %c0_i32_0 : i32, i32
  }
  func.func @transform_6(%arg0: i32) -> (i32, i32) {
    %c0_i32 = arith.constant 0 : i32
    %c0_i32_0 = arith.constant 0 : i32
    %c0_i32_1 = arith.constant 0 : i32
    return %c0_i32, %c0_i32_0 : i32, i32
  }
  func.func @transform_7(%arg0: i32) -> (i32, i32) {
    %c0_i32 = arith.constant 0 : i32
    %c0_i32_0 = arith.constant 0 : i32
    %c0_i32_1 = arith.constant 0 : i32
    return %c0_i32, %c0_i32_0 : i32, i32
  }
  func.func @transform_8(%arg0: i32) -> (i32, i32) {
    %c0_i32 = arith.constant 0 : i32
    %c0_i32_0 = arith.constant 0 : i32
    %c0_i32_1 = arith.constant 0 : i32
    return %c0_i32, %c0_i32_0 : i32, i32
  }
  func.func @transform_9(%arg0: i32) -> (i32, i32) {
    %c0_i32 = arith.constant 0 : i32
    %c0_i32_0 = arith.constant 0 : i32
    %c0_i32_1 = arith.constant 0 : i32
    return %c0_i32, %c0_i32_0 : i32, i32
  }
  func.func @transform_10(%arg0: i32) -> (i32, i32) {
    %c0_i32 = arith.constant 0 : i32
    %c0_i32_0 = arith.constant 0 : i32
    %c0_i32_1 = arith.constant 0 : i32
    return %c0_i32, %c0_i32_0 : i32, i32
  }
  func.func @transform_11(%arg0: i32) -> (i32, i32) {
    %c0_i32 = arith.constant 0 : i32
    %c0_i32_0 = arith.constant 0 : i32
    %c0_i32_1 = arith.constant 0 : i32
    return %c0_i32, %c0_i32_0 : i32, i32
  }
  func.func @transform_12(%arg0: i32) -> (i32, i32) {
    %c0_i32 = arith.constant 0 : i32
    %c0_i32_0 = arith.constant 0 : i32
    %c0_i32_1 = arith.constant 0 : i32
    return %c0_i32, %c0_i32_0 : i32, i32
  }
  func.func @transform_13(%arg0: i32) -> (i32, i32) {
    %c0_i32 = arith.constant 0 : i32
    %c0_i32_0 = arith.constant 0 : i32
    %c0_i32_1 = arith.constant 0 : i32
    return %c0_i32, %c0_i32_0 : i32, i32
  }
  func.func @transform_14(%arg0: i32) -> (i32, i32) {
    %c0_i32 = arith.constant 0 : i32
    %c0_i32_0 = arith.constant 0 : i32
    %c0_i32_1 = arith.constant 0 : i32
    return %c0_i32, %c0_i32_0 : i32, i32
  }
  func.func @transform_15(%arg0: i32) -> (i32, i32) {
    %c0_i32 = arith.constant 0 : i32
    %c0_i32_0 = arith.constant 0 : i32
    %c0_i32_1 = arith.constant 0 : i32
    return %c0_i32, %c0_i32_0 : i32, i32
  }
  func.func @transform_16(%arg0: i32) -> (i32, i32) {
    %c0_i32 = arith.constant 0 : i32
    %c0_i32_0 = arith.constant 0 : i32
    %c0_i32_1 = arith.constant 0 : i32
    return %c0_i32, %c0_i32_0 : i32, i32
  }
  func.func @transform_17(%arg0: i32) -> (i32, i32) {
    %c0_i32 = arith.constant 0 : i32
    %c0_i32_0 = arith.constant 0 : i32
    %c0_i32_1 = arith.constant 0 : i32
    return %c0_i32, %c0_i32_0 : i32, i32
  }
  func.func @transform_18(%arg0: i32) -> (i32, i32) {
    %c0_i32 = arith.constant 0 : i32
    %c0_i32_0 = arith.constant 0 : i32
    %c0_i32_1 = arith.constant 0 : i32
    return %c0_i32, %c0_i32_0 : i32, i32
  }
  func.func @transform_19(%arg0: i32) -> (i32, i32) {
    %c0_i32 = arith.constant 0 : i32
    %c0_i32_0 = arith.constant 0 : i32
    %c0_i32_1 = arith.constant 0 : i32
    return %c0_i32, %c0_i32_0 : i32, i32
  }
  func.func @transform_20(%arg0: i32) -> (i32, i32) {
    %c0_i32 = arith.constant 0 : i32
    %c0_i32_0 = arith.constant 0 : i32
    %c0_i32_1 = arith.constant 0 : i32
    return %c0_i32, %c0_i32_0 : i32, i32
  }
  func.func @transform_21(%arg0: i32) -> (i32, i32, i32) {
    %c0_i32 = arith.constant 0 : i32
    %c0_i32_0 = arith.constant 0 : i32
    %c0_i32_1 = arith.constant 0 : i32
    return %arg0, %c0_i32, %c0_i32_0 : i32, i32, i32
  }
}

</mosaic_0001>

<llo_original>
// kernel: cocalc_forward.1
$region0: #{cocalc_forward.1}
  #allocation0 [shape = 'u32[]', space=smem, size = 0x4, offset = 0x4, fixed_abs, tag = 'smem constant byte address 0x4 - core index']
  #allocation1 [shape = 'u32[144,128]{1,0:T(1,128)}', space=vmem, size = 0x12000, scoped, tag = 'internal scratch']
  %s0 = inlined_call_operand.vmem [shape: f32[2,224,9], index: 0, kind: input, shape index: {}]
  %s1 = inlined_call_operand.vmem [shape: f32[224,9], index: 1, kind: input, shape index: {}]
  %s2 = inlined_call_operand.vmem [shape: f32[56,9], index: 2, kind: input, shape index: {}]
  %s3 = inlined_call_operand.vmem [shape: f32[56,224], index: 3, kind: input, shape index: {}]
  %s4 = inlined_call_operand.vmem [shape: f32[1,56], index: 4, kind: input, shape index: {}]
  %s5 = inlined_call_operand.vmem [shape: f32[9,128], index: 5, kind: input, shape index: {}]
  %s6 = inlined_call_operand.vmem [shape: f32[1,128], index: 6, kind: input, shape index: {}]
  %s7 = inlined_call_operand.vmem [shape: f32[9,128], index: 7, kind: input, shape index: {}]
  %s8 = inlined_call_operand.vmem [shape: f32[1,128], index: 8, kind: input, shape index: {}]
  %s9 = inlined_call_operand.vmem [shape: f32[128,128], index: 9, kind: input, shape index: {}]
  %s10 = inlined_call_operand.vmem [shape: f32[1,128], index: 10, kind: input, shape index: {}]
  %s11 = inlined_call_operand.vmem [shape: f32[9,128], index: 11, kind: input, shape index: {}]
  %s12 = inlined_call_operand.vmem [shape: f32[1,128], index: 12, kind: input, shape index: {}]
  %s13 = inlined_call_operand.vmem [shape: f32[128,128], index: 13, kind: input, shape index: {}]
  %s14 = inlined_call_operand.vmem [shape: f32[1,128], index: 14, kind: input, shape index: {}]
  %s15 = inlined_call_operand.vmem [shape: f32[9,128], index: 15, kind: input, shape index: {}]
  %s16 = inlined_call_operand.vmem [shape: f32[1,128], index: 16, kind: input, shape index: {}]
  %s17 = inlined_call_operand.vmem [shape: f32[128,128], index: 17, kind: input, shape index: {}]
  %s18 = inlined_call_operand.vmem [shape: f32[1,128], index: 18, kind: input, shape index: {}]
  %s19 = inlined_call_operand.vmem [shape: f32[128,384], index: 19, kind: input, shape index: {}]
  %s20 = inlined_call_operand.vmem [shape: f32[1,384], index: 20, kind: input, shape index: {}]
  %s21 = inlined_call_operand.vmem [shape: f32[2,1,384], index: 21, kind: output, shape index: {}]
  %s22 = sld [smem:[#allocation0]]
  $region117: #{cocalc_forward.1} parent=0
    _
  %s24 = ssub.s32 1, %s22
  %s25 = scalar_select 0, %s24, %s22
  loop: start=0, step=1, limit=4
  $region2: #{cocalc_forward.1} parent=0 // loop_pre_header
    _
  $region3: #{cocalc_forward.1} parent=0 // loop_header
    %s27 = sphi 0, %s31
    %p28 = scmp.ge.s32.totalorder %s27, 4
    %s37 = sphi 0, %s39
    %s40 = sphi 0, %s37
    %s41 = sphi 0, %s40
    %s57 = sphi 0, %s41
    %s61 = sphi 0, %s61
    %s63 = sphi 0, %s61
    %s64 = sphi 0, %s63
    %s78 = sphi 0, %s64
    %s82 = sphi 0, %s82
    %s84 = sphi 0, %s82
    %s85 = sphi 0, %s84
    %s99 = sphi 0, %s85
    %s103 = sphi 0, %s103
    %s105 = sphi 0, %s103
    %s106 = sphi 0, %s105
    %s120 = sphi 0, %s106
    %s124 = sphi 0, %s124
    %s126 = sphi 0, %s124
    %s127 = sphi 0, %s126
    %s141 = sphi 0, %s127
    %s145 = sphi 0, %s145
    %s147 = sphi 0, %s145
    %s148 = sphi 0, %s147
    %s162 = sphi 0, %s148
    %s166 = sphi 0, %s166
    %s168 = sphi 0, %s166
    %s169 = sphi 0, %s168
    %s183 = sphi 0, %s169
    %s187 = sphi 0, %s187
    %s189 = sphi 0, %s187
    %s190 = sphi 0, %s189
    %s204 = sphi 0, %s190
    %s208 = sphi 0, %s208
    %s210 = sphi 0, %s208
    %s211 = sphi 0, %s210
    %s225 = sphi 0, %s211
    %s229 = sphi 0, %s229
    %s231 = sphi 0, %s229
    %s232 = sphi 0, %s231
    %s246 = sphi 0, %s232
    %s250 = sphi 0, %s250
    %s252 = sphi 0, %s250
    %s253 = sphi 0, %s252
    %s267 = sphi 0, %s253
    %s271 = sphi 0, %s271
    %s273 = sphi 0, %s271
    %s274 = sphi 0, %s273
    %s288 = sphi 0, %s274
    %s292 = sphi 0, %s292
    %s294 = sphi 0, %s292
    %s295 = sphi 0, %s294
    %s309 = sphi 0, %s295
    %s313 = sphi 0, %s313
    %s315 = sphi 0, %s313
    %s316 = sphi 0, %s315
    %s330 = sphi 0, %s316
    %s334 = sphi 0, %s334
    %s336 = sphi 0, %s334
    %s337 = sphi 0, %s336
    %s351 = sphi 0, %s337
    %s355 = sphi 0, %s355
    %s357 = sphi 0, %s355
    %s358 = sphi 0, %s357
    %s372 = sphi 0, %s358
    %s376 = sphi 0, %s376
    %s378 = sphi 0, %s376
    %s379 = sphi 0, %s378
    %s393 = sphi 0, %s379
    %s397 = sphi 0, %s397
    %s399 = sphi 0, %s397
    %s400 = sphi 0, %s399
    %s414 = sphi 0, %s400
    %s418 = sphi 0, %s418
    %s420 = sphi 0, %s418
    %s421 = sphi 0, %s420
    %s435 = sphi 0, %s421
    %s439 = sphi 0, %s439
    %s441 = sphi 0, %s439
    %s442 = sphi 0, %s441
    %s456 = sphi 0, %s442
    %s460 = sphi 0, %s460
    %s462 = sphi 0, %s460
    %s463 = sphi 0, %s462
    %s477 = sphi 0, %s463
    %s483 = sphi 0, %s485
    %s486 = sphi 0, %s483
    %s487 = sphi 0, %s486
    %s503 = sphi 0, %s487
  $region4: #{cocalc_forward.1} parent=0 // loop_header_branch
    %30 = sbr.rel (%p28) target = $region8
  $region5: #{cocalc_forward.1} parent=0 // loop_body
    %s32 = ssub.s32 %s27, 1
    %s33 = ssub.s32 %s27, 2
    %s34 = sadd.s32 %s27, 1
    %s35 = ssub.s32 %s27, %s34
    %p36 = scmp.eq.s32.totalorder %s35, 0
    %s38 = sadd.s32 %s37, 1
    %s39 = scalar_select %p36, %s37, %s38
    %p42 = pneg %p36
    %p43 = scmp.eq.s32.totalorder %s27, 1
    %p44 = por %p42, %p43
    %p45 = scmp.ne.s32.totalorder %s37, %s40
    %p46 = scmp.eq.s32.totalorder %s27, 0
    %p47 = por %p45, %p46
    %p48 = scmp.ne.s32.totalorder %s37, %s40
    %p49 = scmp.eq.s32.totalorder %s32, 1
    %p50 = por %p48, %p49
    %p51 = scmp.ne.s32.totalorder %s40, %s41
    %p52 = scmp.eq.s32.totalorder %s32, 0
    %p53 = por %p51, %p52
    %p54 = scmp.ne.s32.totalorder %s40, %s41
    %p55 = scmp.eq.s32.totalorder %s33, 1
    %p56 = por %p54, %p55
    %p58 = scmp.ne.s32.totalorder %s41, %s57
    %p59 = scmp.eq.s32.totalorder %s33, 0
    %p60 = por %p58, %p59
    %s62 = sadd.s32 %s61, 1
    %p65 = scmp.eq.s32.totalorder %s27, 1
    %p66 = scmp.ne.s32.totalorder %s61, %s63
    %p67 = scmp.eq.s32.totalorder %s27, 0
    %p68 = por %p66, %p67
    %p69 = scmp.ne.s32.totalorder %s61, %s63
    %p70 = scmp.eq.s32.totalorder %s32, 1
    %p71 = por %p69, %p70
    %p72 = scmp.ne.s32.totalorder %s63, %s64
    %p73 = scmp.eq.s32.totalorder %s32, 0
    %p74 = por %p72, %p73
    %p75 = scmp.ne.s32.totalorder %s63, %s64
    %p76 = scmp.eq.s32.totalorder %s33, 1
    %p77 = por %p75, %p76
    %p79 = scmp.ne.s32.totalorder %s64, %s78
    %p80 = scmp.eq.s32.totalorder %s33, 0
    %p81 = por %p79, %p80
    %s83 = sadd.s32 %s82, 1
    %p86 = scmp.eq.s32.totalorder %s27, 1
    %p87 = scmp.ne.s32.totalorder %s82, %s84
    %p88 = scmp.eq.s32.totalorder %s27, 0
    %p89 = por %p87, %p88
    %p90 = scmp.ne.s32.totalorder %s82, %s84
    %p91 = scmp.eq.s32.totalorder %s32, 1
    %p92 = por %p90, %p91
    %p93 = scmp.ne.s32.totalorder %s84, %s85
    %p94 = scmp.eq.s32.totalorder %s32, 0
    %p95 = por %p93, %p94
    %p96 = scmp.ne.s32.totalorder %s84, %s85
    %p97 = scmp.eq.s32.totalorder %s33, 1
    %p98 = por %p96, %p97
    %p100 = scmp.ne.s32.totalorder %s85, %s99
    %p101 = scmp.eq.s32.totalorder %s33, 0
    %p102 = por %p100, %p101
    %s104 = sadd.s32 %s103, 1
    %p107 = scmp.eq.s32.totalorder %s27, 1
    %p108 = scmp.ne.s32.totalorder %s103, %s105
    %p109 = scmp.eq.s32.totalorder %s27, 0
    %p110 = por %p108, %p109
    %p111 = scmp.ne.s32.totalorder %s103, %s105
    %p112 = scmp.eq.s32.totalorder %s32, 1
    %p113 = por %p111, %p112
    %p114 = scmp.ne.s32.totalorder %s105, %s106
    %p115 = scmp.eq.s32.totalorder %s32, 0
    %p116 = por %p114, %p115
    %p117 = scmp.ne.s32.totalorder %s105, %s106
    %p118 = scmp.eq.s32.totalorder %s33, 1
    %p119 = por %p117, %p118
    %p121 = scmp.ne.s32.totalorder %s106, %s120
    %p122 = scmp.eq.s32.totalorder %s33, 0
    %p123 = por %p121, %p122
    %s125 = sadd.s32 %s124, 1
    %p128 = scmp.eq.s32.totalorder %s27, 1
    %p129 = scmp.ne.s32.totalorder %s124, %s126
    %p130 = scmp.eq.s32.totalorder %s27, 0
    %p131 = por %p129, %p130
    %p132 = scmp.ne.s32.totalorder %s124, %s126
    %p133 = scmp.eq.s32.totalorder %s32, 1
    %p134 = por %p132, %p133
    %p135 = scmp.ne.s32.totalorder %s126, %s127
    %p136 = scmp.eq.s32.totalorder %s32, 0
    %p137 = por %p135, %p136
    %p138 = scmp.ne.s32.totalorder %s126, %s127
    %p139 = scmp.eq.s32.totalorder %s33, 1
    %p140 = por %p138, %p139
    %p142 = scmp.ne.s32.totalorder %s127, %s141
    %p143 = scmp.eq.s32.totalorder %s33, 0
    %p144 = por %p142, %p143
    %s146 = sadd.s32 %s145, 1
    %p149 = scmp.eq.s32.totalorder %s27, 1
    %p150 = scmp.ne.s32.totalorder %s145, %s147
    %p151 = scmp.eq.s32.totalorder %s27, 0
    %p152 = por %p150, %p151
    %p153 = scmp.ne.s32.totalorder %s145, %s147
    %p154 = scmp.eq.s32.totalorder %s32, 1
    %p155 = por %p153, %p154
    %p156 = scmp.ne.s32.totalorder %s147, %s148
    %p157 = scmp.eq.s32.totalorder %s32, 0
    %p158 = por %p156, %p157
    %p159 = scmp.ne.s32.totalorder %s147, %s148
    %p160 = scmp.eq.s32.totalorder %s33, 1
    %p161 = por %p159, %p160
    %p163 = scmp.ne.s32.totalorder %s148, %s162
    %p164 = scmp.eq.s32.totalorder %s33, 0
    %p165 = por %p163, %p164
    %s167 = sadd.s32 %s166, 1
    %p170 = scmp.eq.s32.totalorder %s27, 1
    %p171 = scmp.ne.s32.totalorder %s166, %s168
    %p172 = scmp.eq.s32.totalorder %s27, 0
    %p173 = por %p171, %p172
    %p174 = scmp.ne.s32.totalorder %s166, %s168
    %p175 = scmp.eq.s32.totalorder %s32, 1
    %p176 = por %p174, %p175
    %p177 = scmp.ne.s32.totalorder %s168, %s169
    %p178 = scmp.eq.s32.totalorder %s32, 0
    %p179 = por %p177, %p178
    %p180 = scmp.ne.s32.totalorder %s168, %s169
    %p181 = scmp.eq.s32.totalorder %s33, 1
    %p182 = por %p180, %p181
    %p184 = scmp.ne.s32.totalorder %s169, %s183
    %p185 = scmp.eq.s32.totalorder %s33, 0
    %p186 = por %p184, %p185
    %s188 = sadd.s32 %s187, 1
    %p191 = scmp.eq.s32.totalorder %s27, 1
    %p192 = scmp.ne.s32.totalorder %s187, %s189
    %p193 = scmp.eq.s32.totalorder %s27, 0
    %p194 = por %p192, %p193
    %p195 = scmp.ne.s32.totalorder %s187, %s189
    %p196 = scmp.eq.s32.totalorder %s32, 1
    %p197 = por %p195, %p196
    %p198 = scmp.ne.s32.totalorder %s189, %s190
    %p199 = scmp.eq.s32.totalorder %s32, 0
    %p200 = por %p198, %p199
    %p201 = scmp.ne.s32.totalorder %s189, %s190
    %p202 = scmp.eq.s32.totalorder %s33, 1
    %p203 = por %p201, %p202
    %p205 = scmp.ne.s32.totalorder %s190, %s204
    %p206 = scmp.eq.s32.totalorder %s33, 0
    %p207 = por %p205, %p206
    %s209 = sadd.s32 %s208, 1
    %p212 = scmp.eq.s32.totalorder %s27, 1
    %p213 = scmp.ne.s32.totalorder %s208, %s210
    %p214 = scmp.eq.s32.totalorder %s27, 0
    %p215 = por %p213, %p214
    %p216 = scmp.ne.s32.totalorder %s208, %s210
    %p217 = scmp.eq.s32.totalorder %s32, 1
    %p218 = por %p216, %p217
    %p219 = scmp.ne.s32.totalorder %s210, %s211
    %p220 = scmp.eq.s32.totalorder %s32, 0
    %p221 = por %p219, %p220
    %p222 = scmp.ne.s32.totalorder %s210, %s211
    %p223 = scmp.eq.s32.totalorder %s33, 1
    %p224 = por %p222, %p223
    %p226 = scmp.ne.s32.totalorder %s211, %s225
    %p227 = scmp.eq.s32.totalorder %s33, 0
    %p228 = por %p226, %p227
    %s230 = sadd.s32 %s229, 1
    %p233 = scmp.eq.s32.totalorder %s27, 1
    %p234 = scmp.ne.s32.totalorder %s229, %s231
    %p235 = scmp.eq.s32.totalorder %s27, 0
    %p236 = por %p234, %p235
    %p237 = scmp.ne.s32.totalorder %s229, %s231
    %p238 = scmp.eq.s32.totalorder %s32, 1
    %p239 = por %p237, %p238
    %p240 = scmp.ne.s32.totalorder %s231, %s232
    %p241 = scmp.eq.s32.totalorder %s32, 0
    %p242 = por %p240, %p241
    %p243 = scmp.ne.s32.totalorder %s231, %s232
    %p244 = scmp.eq.s32.totalorder %s33, 1
    %p245 = por %p243, %p244
    %p247 = scmp.ne.s32.totalorder %s232, %s246
    %p248 = scmp.eq.s32.totalorder %s33, 0
    %p249 = por %p247, %p248
    %s251 = sadd.s32 %s250, 1
    %p254 = scmp.eq.s32.totalorder %s27, 1
    %p255 = scmp.ne.s32.totalorder %s250, %s252
    %p256 = scmp.eq.s32.totalorder %s27, 0
    %p257 = por %p255, %p256
    %p258 = scmp.ne.s32.totalorder %s250, %s252
    %p259 = scmp.eq.s32.totalorder %s32, 1
    %p260 = por %p258, %p259
    %p261 = scmp.ne.s32.totalorder %s252, %s253
    %p262 = scmp.eq.s32.totalorder %s32, 0
    %p263 = por %p261, %p262
    %p264 = scmp.ne.s32.totalorder %s252, %s253
    %p265 = scmp.eq.s32.totalorder %s33, 1
    %p266 = por %p264, %p265
    %p268 = scmp.ne.s32.totalorder %s253, %s267
    %p269 = scmp.eq.s32.totalorder %s33, 0
    %p270 = por %p268, %p269
    %s272 = sadd.s32 %s271, 1
    %p275 = scmp.eq.s32.totalorder %s27, 1
    %p276 = scmp.ne.s32.totalorder %s271, %s273
    %p277 = scmp.eq.s32.totalorder %s27, 0
    %p278 = por %p276, %p277
    %p279 = scmp.ne.s32.totalorder %s271, %s273
    %p280 = scmp.eq.s32.totalorder %s32, 1
    %p281 = por %p279, %p280
    %p282 = scmp.ne.s32.totalorder %s273, %s274
    %p283 = scmp.eq.s32.totalorder %s32, 0
    %p284 = por %p282, %p283
    %p285 = scmp.ne.s32.totalorder %s273, %s274
    %p286 = scmp.eq.s32.totalorder %s33, 1
    %p287 = por %p285, %p286
    %p289 = scmp.ne.s32.totalorder %s274, %s288
    %p290 = scmp.eq.s32.totalorder %s33, 0
    %p291 = por %p289, %p290
    %s293 = sadd.s32 %s292, 1
    %p296 = scmp.eq.s32.totalorder %s27, 1
    %p297 = scmp.ne.s32.totalorder %s292, %s294
    %p298 = scmp.eq.s32.totalorder %s27, 0
    %p299 = por %p297, %p298
    %p300 = scmp.ne.s32.totalorder %s292, %s294
    %p301 = scmp.eq.s32.totalorder %s32, 1
    %p302 = por %p300, %p301
    %p303 = scmp.ne.s32.totalorder %s294, %s295
    %p304 = scmp.eq.s32.totalorder %s32, 0
    %p305 = por %p303, %p304
    %p306 = scmp.ne.s32.totalorder %s294, %s295
    %p307 = scmp.eq.s32.totalorder %s33, 1
    %p308 = por %p306, %p307
    %p310 = scmp.ne.s32.totalorder %s295, %s309
    %p311 = scmp.eq.s32.totalorder %s33, 0
    %p312 = por %p310, %p311
    %s314 = sadd.s32 %s313, 1
    %p317 = scmp.eq.s32.totalorder %s27, 1
    %p318 = scmp.ne.s32.totalorder %s313, %s315
    %p319 = scmp.eq.s32.totalorder %s27, 0
    %p320 = por %p318, %p319
    %p321 = scmp.ne.s32.totalorder %s313, %s315
    %p322 = scmp.eq.s32.totalorder %s32, 1
    %p323 = por %p321, %p322
    %p324 = scmp.ne.s32.totalorder %s315, %s316
    %p325 = scmp.eq.s32.totalorder %s32, 0
    %p326 = por %p324, %p325
    %p327 = scmp.ne.s32.totalorder %s315, %s316
    %p328 = scmp.eq.s32.totalorder %s33, 1
    %p329 = por %p327, %p328
    %p331 = scmp.ne.s32.totalorder %s316, %s330
    %p332 = scmp.eq.s32.totalorder %s33, 0
    %p333 = por %p331, %p332
    %s335 = sadd.s32 %s334, 1
    %p338 = scmp.eq.s32.totalorder %s27, 1
    %p339 = scmp.ne.s32.totalorder %s334, %s336
    %p340 = scmp.eq.s32.totalorder %s27, 0
    %p341 = por %p339, %p340
    %p342 = scmp.ne.s32.totalorder %s334, %s336
    %p343 = scmp.eq.s32.totalorder %s32, 1
    %p344 = por %p342, %p343
    %p345 = scmp.ne.s32.totalorder %s336, %s337
    %p346 = scmp.eq.s32.totalorder %s32, 0
    %p347 = por %p345, %p346
    %p348 = scmp.ne.s32.totalorder %s336, %s337
    %p349 = scmp.eq.s32.totalorder %s33, 1
    %p350 = por %p348, %p349
    %p352 = scmp.ne.s32.totalorder %s337, %s351
    %p353 = scmp.eq.s32.totalorder %s33, 0
    %p354 = por %p352, %p353
    %s356 = sadd.s32 %s355, 1
    %p359 = scmp.eq.s32.totalorder %s27, 1
    %p360 = scmp.ne.s32.totalorder %s355, %s357
    %p361 = scmp.eq.s32.totalorder %s27, 0
    %p362 = por %p360, %p361
    %p363 = scmp.ne.s32.totalorder %s355, %s357
    %p364 = scmp.eq.s32.totalorder %s32, 1
    %p365 = por %p363, %p364
    %p366 = scmp.ne.s32.totalorder %s357, %s358
    %p367 = scmp.eq.s32.totalorder %s32, 0
    %p368 = por %p366, %p367
    %p369 = scmp.ne.s32.totalorder %s357, %s358
    %p370 = scmp.eq.s32.totalorder %s33, 1
    %p371 = por %p369, %p370
    %p373 = scmp.ne.s32.totalorder %s358, %s372
    %p374 = scmp.eq.s32.totalorder %s33, 0
    %p375 = por %p373, %p374
    %s377 = sadd.s32 %s376, 1
    %p380 = scmp.eq.s32.totalorder %s27, 1
    %p381 = scmp.ne.s32.totalorder %s376, %s378
    %p382 = scmp.eq.s32.totalorder %s27, 0
    %p383 = por %p381, %p382
    %p384 = scmp.ne.s32.totalorder %s376, %s378
    %p385 = scmp.eq.s32.totalorder %s32, 1
    %p386 = por %p384, %p385
    %p387 = scmp.ne.s32.totalorder %s378, %s379
    %p388 = scmp.eq.s32.totalorder %s32, 0
    %p389 = por %p387, %p388
    %p390 = scmp.ne.s32.totalorder %s378, %s379
    %p391 = scmp.eq.s32.totalorder %s33, 1
    %p392 = por %p390, %p391
    %p394 = scmp.ne.s32.totalorder %s379, %s393
    %p395 = scmp.eq.s32.totalorder %s33, 0
    %p396 = por %p394, %p395
    %s398 = sadd.s32 %s397, 1
    %p401 = scmp.eq.s32.totalorder %s27, 1
    %p402 = scmp.ne.s32.totalorder %s397, %s399
    %p403 = scmp.eq.s32.totalorder %s27, 0
    %p404 = por %p402, %p403
    %p405 = scmp.ne.s32.totalorder %s397, %s399
    %p406 = scmp.eq.s32.totalorder %s32, 1
    %p407 = por %p405, %p406
    %p408 = scmp.ne.s32.totalorder %s399, %s400
    %p409 = scmp.eq.s32.totalorder %s32, 0
    %p410 = por %p408, %p409
    %p411 = scmp.ne.s32.totalorder %s399, %s400
    %p412 = scmp.eq.s32.totalorder %s33, 1
    %p413 = por %p411, %p412
    %p415 = scmp.ne.s32.totalorder %s400, %s414
    %p416 = scmp.eq.s32.totalorder %s33, 0
    %p417 = por %p415, %p416
    %s419 = sadd.s32 %s418, 1
    %p422 = scmp.eq.s32.totalorder %s27, 1
    %p423 = scmp.ne.s32.totalorder %s418, %s420
    %p424 = scmp.eq.s32.totalorder %s27, 0
    %p425 = por %p423, %p424
    %p426 = scmp.ne.s32.totalorder %s418, %s420
    %p427 = scmp.eq.s32.totalorder %s32, 1
    %p428 = por %p426, %p427
    %p429 = scmp.ne.s32.totalorder %s420, %s421
    %p430 = scmp.eq.s32.totalorder %s32, 0
    %p431 = por %p429, %p430
    %p432 = scmp.ne.s32.totalorder %s420, %s421
    %p433 = scmp.eq.s32.totalorder %s33, 1
    %p434 = por %p432, %p433
    %p436 = scmp.ne.s32.totalorder %s421, %s435
    %p437 = scmp.eq.s32.totalorder %s33, 0
    %p438 = por %p436, %p437
    %s440 = sadd.s32 %s439, 1
    %p443 = scmp.eq.s32.totalorder %s27, 1
    %p444 = scmp.ne.s32.totalorder %s439, %s441
    %p445 = scmp.eq.s32.totalorder %s27, 0
    %p446 = por %p444, %p445
    %p447 = scmp.ne.s32.totalorder %s439, %s441
    %p448 = scmp.eq.s32.totalorder %s32, 1
    %p449 = por %p447, %p448
    %p450 = scmp.ne.s32.totalorder %s441, %s442
    %p451 = scmp.eq.s32.totalorder %s32, 0
    %p452 = por %p450, %p451
    %p453 = scmp.ne.s32.totalorder %s441, %s442
    %p454 = scmp.eq.s32.totalorder %s33, 1
    %p455 = por %p453, %p454
    %p457 = scmp.ne.s32.totalorder %s442, %s456
    %p458 = scmp.eq.s32.totalorder %s33, 0
    %p459 = por %p457, %p458
    %s461 = sadd.s32 %s460, 1
    %p464 = scmp.eq.s32.totalorder %s27, 1
    %p465 = scmp.ne.s32.totalorder %s460, %s462
    %p466 = scmp.eq.s32.totalorder %s27, 0
    %p467 = por %p465, %p466
    %p468 = scmp.ne.s32.totalorder %s460, %s462
    %p469 = scmp.eq.s32.totalorder %s32, 1
    %p470 = por %p468, %p469
    %p471 = scmp.ne.s32.totalorder %s462, %s463
    %p472 = scmp.eq.s32.totalorder %s32, 0
    %p473 = por %p471, %p472
    %p474 = scmp.ne.s32.totalorder %s462, %s463
    %p475 = scmp.eq.s32.totalorder %s33, 1
    %p476 = por %p474, %p475
    %p478 = scmp.ne.s32.totalorder %s463, %s477
    %p479 = scmp.eq.s32.totalorder %s33, 0
    %p480 = por %p478, %p479
    %s481 = ssub.s32 %s27, %s34
    %p482 = scmp.eq.s32.totalorder %s481, 0
    %s484 = sadd.s32 %s483, 1
    %s485 = scalar_select %p482, %s483, %s484
    %p488 = pneg %p482
    %p489 = scmp.eq.s32.totalorder %s27, 1
    %p490 = por %p488, %p489
    %p491 = scmp.ne.s32.totalorder %s483, %s486
    %p492 = scmp.eq.s32.totalorder %s27, 0
    %p493 = por %p491, %p492
    %p494 = scmp.ne.s32.totalorder %s483, %s486
    %p495 = scmp.eq.s32.totalorder %s32, 1
    %p496 = por %p494, %p495
    %p497 = scmp.ne.s32.totalorder %s486, %s487
    %p498 = scmp.eq.s32.totalorder %s32, 0
    %p499 = por %p497, %p498
    %p500 = scmp.ne.s32.totalorder %s486, %s487
    %p501 = scmp.eq.s32.totalorder %s33, 1
    %p502 = por %p500, %p501
    %p504 = scmp.ne.s32.totalorder %s487, %s503
    %p505 = scmp.eq.s32.totalorder %s33, 0
    %p506 = por %p504, %p505
    %p507 = scmp.le.s32.totalorder 1, %s27
    %p508 = scmp.lt.s32.totalorder %s27, 3
    %p509 = pnand %p507, %p508
    %p510 = pneg %p509
    // Predicated region
    $region9: #{cocalc_forward.1} parent=5 // pred_check
      _
    $region10: #{cocalc_forward.1} parent=5 // pred_check_branch
      %512 = sbr.rel (%p509) target = $region12
    $region11: #{cocalc_forward.1} parent=5 // pred_region
      %s513 = ssub.s32 %s27, 1
      // Predicated region
      $region13: #{cocalc_forward.1} parent=11 // pred_check
        %p514 = pneg %p74
      $region14: #{cocalc_forward.1} parent=11 // pred_check_branch
        %516 = sbr.rel (%p514) target = $region16
      $region15: #{cocalc_forward.1} parent=11 // pred_region
        _
      $region16: #{cocalc_forward.1} parent=11 // pred_fallthru
        _
      // Predicated region
      $region17: #{cocalc_forward.1} parent=11 // pred_check
        %p517 = pneg %p95
      $region18: #{cocalc_forward.1} parent=11 // pred_check_branch
        %519 = sbr.rel (%p517) target = $region20
      $region19: #{cocalc_forward.1} parent=11 // pred_region
        _
      $region20: #{cocalc_forward.1} parent=11 // pred_fallthru
        _
      // Predicated region
      $region21: #{cocalc_forward.1} parent=11 // pred_check
        %p520 = pneg %p116
      $region22: #{cocalc_forward.1} parent=11 // pred_check_branch
        %522 = sbr.rel (%p520) target = $region24
      $region23: #{cocalc_forward.1} parent=11 // pred_region
        _
      $region24: #{cocalc_forward.1} parent=11 // pred_fallthru
        _
      // Predicated region
      $region25: #{cocalc_forward.1} parent=11 // pred_check
        %p523 = pneg %p137
      $region26: #{cocalc_forward.1} parent=11 // pred_check_branch
        %525 = sbr.rel (%p523) target = $region28
      $region27: #{cocalc_forward.1} parent=11 // pred_region
        _
      $region28: #{cocalc_forward.1} parent=11 // pred_fallthru
        _
      // Predicated region
      $region29: #{cocalc_forward.1} parent=11 // pred_check
        %p526 = pneg %p158
      $region30: #{cocalc_forward.1} parent=11 // pred_check_branch
        %528 = sbr.rel (%p526) target = $region32
      $region31: #{cocalc_forward.1} parent=11 // pred_region
        _
      $region32: #{cocalc_forward.1} parent=11 // pred_fallthru
        _
      // Predicated region
      $region33: #{cocalc_forward.1} parent=11 // pred_check
        %p529 = pneg %p179
      $region34: #{cocalc_forward.1} parent=11 // pred_check_branch
        %531 = sbr.rel (%p529) target = $region36
      $region35: #{cocalc_forward.1} parent=11 // pred_region
        _
      $region36: #{cocalc_forward.1} parent=11 // pred_fallthru
        _
      // Predicated region
      $region37: #{cocalc_forward.1} parent=11 // pred_check
        %p532 = pneg %p200
      $region38: #{cocalc_forward.1} parent=11 // pred_check_branch
        %534 = sbr.rel (%p532) target = $region40
      $region39: #{cocalc_forward.1} parent=11 // pred_region
        _
      $region40: #{cocalc_forward.1} parent=11 // pred_fallthru
        _
      // Predicated region
      $region41: #{cocalc_forward.1} parent=11 // pred_check
        %p535 = pneg %p221
      $region42: #{cocalc_forward.1} parent=11 // pred_check_branch
        %537 = sbr.rel (%p535) target = $region44
      $region43: #{cocalc_forward.1} parent=11 // pred_region
        _
      $region44: #{cocalc_forward.1} parent=11 // pred_fallthru
        _
      // Predicated region
      $region45: #{cocalc_forward.1} parent=11 // pred_check
        %p538 = pneg %p242
      $region46: #{cocalc_forward.1} parent=11 // pred_check_branch
        %540 = sbr.rel (%p538) target = $region48
      $region47: #{cocalc_forward.1} parent=11 // pred_region
        _
      $region48: #{cocalc_forward.1} parent=11 // pred_fallthru
        _
      // Predicated region
      $region49: #{cocalc_forward.1} parent=11 // pred_check
        %p541 = pneg %p263
      $region50: #{cocalc_forward.1} parent=11 // pred_check_branch
        %543 = sbr.rel (%p541) target = $region52
      $region51: #{cocalc_forward.1} parent=11 // pred_region
        _
      $region52: #{cocalc_forward.1} parent=11 // pred_fallthru
        _
      // Predicated region
      $region53: #{cocalc_forward.1} parent=11 // pred_check
        %p544 = pneg %p284
      $region54: #{cocalc_forward.1} parent=11 // pred_check_branch
        %546 = sbr.rel (%p544) target = $region56
      $region55: #{cocalc_forward.1} parent=11 // pred_region
        _
      $region56: #{cocalc_forward.1} parent=11 // pred_fallthru
        _
      // Predicated region
      $region57: #{cocalc_forward.1} parent=11 // pred_check
        %p547 = pneg %p305
      $region58: #{cocalc_forward.1} parent=11 // pred_check_branch
        %549 = sbr.rel (%p547) target = $region60
      $region59: #{cocalc_forward.1} parent=11 // pred_region
        _
      $region60: #{cocalc_forward.1} parent=11 // pred_fallthru
        _
      // Predicated region
      $region61: #{cocalc_forward.1} parent=11 // pred_check
        %p550 = pneg %p326
      $region62: #{cocalc_forward.1} parent=11 // pred_check_branch
        %552 = sbr.rel (%p550) target = $region64
      $region63: #{cocalc_forward.1} parent=11 // pred_region
        _
      $region64: #{cocalc_forward.1} parent=11 // pred_fallthru
        _
      // Predicated region
      $region65: #{cocalc_forward.1} parent=11 // pred_check
        %p553 = pneg %p347
      $region66: #{cocalc_forward.1} parent=11 // pred_check_branch
        %555 = sbr.rel (%p553) target = $region68
      $region67: #{cocalc_forward.1} parent=11 // pred_region
        _
      $region68: #{cocalc_forward.1} parent=11 // pred_fallthru
        _
      // Predicated region
      $region69: #{cocalc_forward.1} parent=11 // pred_check
        %p556 = pneg %p368
      $region70: #{cocalc_forward.1} parent=11 // pred_check_branch
        %558 = sbr.rel (%p556) target = $region72
      $region71: #{cocalc_forward.1} parent=11 // pred_region
        _
      $region72: #{cocalc_forward.1} parent=11 // pred_fallthru
        _
      // Predicated region
      $region73: #{cocalc_forward.1} parent=11 // pred_check
        %p559 = pneg %p389
      $region74: #{cocalc_forward.1} parent=11 // pred_check_branch
        %561 = sbr.rel (%p559) target = $region76
      $region75: #{cocalc_forward.1} parent=11 // pred_region
        _
      $region76: #{cocalc_forward.1} parent=11 // pred_fallthru
        _
      // Predicated region
      $region77: #{cocalc_forward.1} parent=11 // pred_check
        %p562 = pneg %p410
      $region78: #{cocalc_forward.1} parent=11 // pred_check_branch
        %564 = sbr.rel (%p562) target = $region80
      $region79: #{cocalc_forward.1} parent=11 // pred_region
        _
      $region80: #{cocalc_forward.1} parent=11 // pred_fallthru
        _
      // Predicated region
      $region81: #{cocalc_forward.1} parent=11 // pred_check
        %p565 = pneg %p431
      $region82: #{cocalc_forward.1} parent=11 // pred_check_branch
        %567 = sbr.rel (%p565) target = $region84
      $region83: #{cocalc_forward.1} parent=11 // pred_region
        _
      $region84: #{cocalc_forward.1} parent=11 // pred_fallthru
        _
      // Predicated region
      $region85: #{cocalc_forward.1} parent=11 // pred_check
        %p568 = pneg %p452
      $region86: #{cocalc_forward.1} parent=11 // pred_check_branch
        %570 = sbr.rel (%p568) target = $region88
      $region87: #{cocalc_forward.1} parent=11 // pred_region
        _
      $region88: #{cocalc_forward.1} parent=11 // pred_fallthru
        _
      // Predicated region
      $region89: #{cocalc_forward.1} parent=11 // pred_check
        %p571 = pneg %p473
      $region90: #{cocalc_forward.1} parent=11 // pred_check_branch
        %573 = sbr.rel (%p571) target = $region92
      $region91: #{cocalc_forward.1} parent=11 // pred_region
        _
      $region92: #{cocalc_forward.1} parent=11 // pred_fallthru
        _
    $region12: #{cocalc_forward.1} parent=5 // pred_fallthru
      _
    %p574 = scmp.lt.s32.totalorder %s27, 2
    // Predicated region
    $region93: #{cocalc_forward.1} parent=5 // pred_check
      %p575 = pneg %p574
    $region94: #{cocalc_forward.1} parent=5 // pred_check_branch
      %577 = sbr.rel (%p575) target = $region96
    $region95: #{cocalc_forward.1} parent=5 // pred_region
      // Predicated region
      $region97: #{cocalc_forward.1} parent=95 // pred_check
        %p578 = pneg %p47
      $region98: #{cocalc_forward.1} parent=95 // pred_check_branch
        %580 = sbr.rel (%p578) target = $region100
      $region99: #{cocalc_forward.1} parent=95 // pred_region
        %p581 = scmp.lt.s32.totalorder %s27, 1
        %s582 = scalar_select %p581, %s27, 1
        %s583 = smul.addr %s582, 28
        %s584 = smul.addr %s583, 8
        %s585 = scalar_lea.vmem %s0, %s584
      $region100: #{cocalc_forward.1} parent=95 // pred_fallthru
        _
    $region96: #{cocalc_forward.1} parent=5 // pred_fallthru
      _
    %p586 = scmp.le.s32.totalorder 1, %s27
    %p587 = scmp.lt.s32.totalorder %s27, 3
    %p588 = pnand %p586, %p587
    %p589 = pneg %p588
    // Predicated region
    $region101: #{cocalc_forward.1} parent=5 // pred_check
      _
    $region102: #{cocalc_forward.1} parent=5 // pred_check_branch
      %591 = sbr.rel (%p588) target = $region104
    $region103: #{cocalc_forward.1} parent=5 // pred_region
      %s592 = ssub.s32 %s27, 1
      %p593 = scmp.lt.s32.totalorder %s32, 1
      %s594 = scalar_select %p593, %s32, 1
      %s595 = smul.addr %s594, 28
      %s596 = smul.addr %s595, 8
      %s597 = scalar_lea.vmem %s0, %s596
      %p598 = pneg %p53
      %p599 = pneg %p50
      %p600 = pneg %p74
      %p601 = pneg %p71
      %p602 = pneg %p95
      %p603 = pneg %p92
      %p604 = pneg %p116
      %p605 = pneg %p113
      %p606 = pneg %p137
      %p607 = pneg %p134
      %p608 = pneg %p158
      %p609 = pneg %p155
      %p610 = pneg %p179
      %p611 = pneg %p176
      %p612 = pneg %p200
      %p613 = pneg %p197
      %p614 = pneg %p221
      %p615 = pneg %p218
      %p616 = pneg %p242
      %p617 = pneg %p239
      %p618 = pneg %p263
      %p619 = pneg %p260
      %p620 = pneg %p284
      %p621 = pneg %p281
      %p622 = pneg %p305
      %p623 = pneg %p302
      %p624 = pneg %p326
      %p625 = pneg %p323
      %p626 = pneg %p347
      %p627 = pneg %p344
      %p628 = pneg %p368
      %p629 = pneg %p365
      %p630 = pneg %p389
      %p631 = pneg %p386
      %p632 = pneg %p410
      %p633 = pneg %p407
      %p634 = pneg %p431
      %p635 = pneg %p428
      %p636 = pneg %p452
      %p637 = pneg %p449
      %p638 = pneg %p473
      %p639 = pneg %p470
      %p640 = pneg %p499
      %p641 = pneg %p496
      %p642 = scmp.lt.s32.totalorder %s32, 1
      %s643 = scalar_select %p642, %s32, 1
      %s644 = smul.addr %s643, 3
      %s645 = scalar_lea.vmem %s21, %s644
      %p646 = scmp.lt.s32.totalorder %s32, 1
      %s647 = scalar_select %p646, %s32, 1
      %s648 = smul.addr %s647, 28
      %s649 = smul.addr %s648, 8
      %s650 = scalar_lea.vmem %s0, %s649
      %p651 = scmp.lt.s32.totalorder %s32, 1
      %s652 = scalar_select %p651, %s32, 1
      %s653 = smul.addr %s652, 3
      %s654 = scalar_lea.vmem %s21, %s653
      %v655 = vld [vmem:[%s1] sm:$0xff]
      %v656 = vld [vmem:[%s1 + $0x8] sm:$0xff]
      %v657 = vld [vmem:[%s1 + $0x10] sm:$0xff]
      %v658 = vld [vmem:[%s1 + $0x18] sm:$0xff]
      %v659 = vld [vmem:[%s1 + $0x20] sm:$0xff]
      %v660 = vld [vmem:[%s1 + $0x28] sm:$0xff]
      %v661 = vld [vmem:[%s1 + $0x30] sm:$0xff]
      %v662 = vld [vmem:[%s1 + $0x38] sm:$0xff]
      %v663 = vld [vmem:[%s1 + $0x40] sm:$0xff]
      %v664 = vld [vmem:[%s1 + $0x48] sm:$0xff]
      %v665 = vld [vmem:[%s1 + $0x50] sm:$0xff]
      %v666 = vld [vmem:[%s1 + $0x58] sm:$0xff]
      %v667 = vld [vmem:[%s1 + $0x60] sm:$0xff]
      %v668 = vld [vmem:[%s1 + $0x68] sm:$0xff]
      %v669 = vld [vmem:[%s1 + $0x70] sm:$0xff]
      %v670 = vld [vmem:[%s1 + $0x78] sm:$0xff]
      %v671 = vld [vmem:[%s1 + $0x80] sm:$0xff]
      %v672 = vld [vmem:[%s1 + $0x88] sm:$0xff]
      %v673 = vld [vmem:[%s1 + $0x90] sm:$0xff]
      %v674 = vld [vmem:[%s1 + $0x98] sm:$0xff]
      %v675 = vld [vmem:[%s1 + $0xa0] sm:$0xff]
      %v676 = vld [vmem:[%s1 + $0xa8] sm:$0xff]
      %v677 = vld [vmem:[%s1 + $0xb0] sm:$0xff]
      %v678 = vld [vmem:[%s1 + $0xb8] sm:$0xff]
      %v679 = vld [vmem:[%s1 + $0xc0] sm:$0xff]
      %v680 = vld [vmem:[%s1 + $0xc8] sm:$0xff]
      %v681 = vld [vmem:[%s1 + $0xd0] sm:$0xff]
      %v682 = vld [vmem:[%s1 + $0xd8] sm:$0xff]
      %v683 = vld [vmem:[%s2] sm:$0xff]
      %v684 = vld [vmem:[%s2 + $0x8] sm:$0xff]
      %v685 = vld [vmem:[%s2 + $0x10] sm:$0xff]
      %v686 = vld [vmem:[%s2 + $0x18] sm:$0xff]
      %v687 = vld [vmem:[%s2 + $0x20] sm:$0xff]
      %v688 = vld [vmem:[%s2 + $0x28] sm:$0xff]
      %v689 = vld [vmem:[%s2 + $0x30] sm:$0xff]
      %v690 = vld [vmem:[%s650] sm:$0xff]
      %v691 = vld [vmem:[%s650 + $0x8] sm:$0xff]
      %v692 = vld [vmem:[%s650 + $0x10] sm:$0xff]
      %v693 = vld [vmem:[%s650 + $0x18] sm:$0xff]
      %v694 = vld [vmem:[%s650 + $0x20] sm:$0xff]
      %v695 = vld [vmem:[%s650 + $0x28] sm:$0xff]
      %v696 = vld [vmem:[%s650 + $0x30] sm:$0xff]
      %v697 = vld [vmem:[%s650 + $0x38] sm:$0xff]
      %v698 = vld [vmem:[%s650 + $0x40] sm:$0xff]
      %v699 = vld [vmem:[%s650 + $0x48] sm:$0xff]
      %v700 = vld [vmem:[%s650 + $0x50] sm:$0xff]
      %v701 = vld [vmem:[%s650 + $0x58] sm:$0xff]
      %v702 = vld [vmem:[%s650 + $0x60] sm:$0xff]
      %v703 = vld [vmem:[%s650 + $0x68] sm:$0xff]
      %v704 = vld [vmem:[%s650 + $0x70] sm:$0xff]
      %v705 = vld [vmem:[%s650 + $0x78] sm:$0xff]
      %v706 = vld [vmem:[%s650 + $0x80] sm:$0xff]
      %v707 = vld [vmem:[%s650 + $0x88] sm:$0xff]
      %v708 = vld [vmem:[%s650 + $0x90] sm:$0xff]
      %v709 = vld [vmem:[%s650 + $0x98] sm:$0xff]
      %v710 = vld [vmem:[%s650 + $0xa0] sm:$0xff]
      %v711 = vld [vmem:[%s650 + $0xa8] sm:$0xff]
      %v712 = vld [vmem:[%s650 + $0xb0] sm:$0xff]
      %v713 = vld [vmem:[%s650 + $0xb8] sm:$0xff]
      %v714 = vld [vmem:[%s650 + $0xc0] sm:$0xff]
      %v715 = vld [vmem:[%s650 + $0xc8] sm:$0xff]
      %v716 = vld [vmem:[%s650 + $0xd0] sm:$0xff]
      %v717 = vld [vmem:[%s650 + $0xd8] sm:$0xff]
      %v718 = vld [vmem:[%s5] sm:$0xff]
      %v719 = vld [vmem:[%s5 + $0x8] sm:$0x1]
      %v720 = vld [vmem:[%s6] sm:$0x1]
      %v722 = vlaneseq
      %v723 = vshrl.u32 %v722, 7
      %v724 = vsub.s32 0, %v723
      %v725 = vrot.slane %v720, %v724
      %vm727 = vcmask 72704
      %v729 = vsel %vm727, %v690, 0
      %v732 = vsel %vm727, %v691, 0
      %v735 = vsel %vm727, %v692, 0
      %v738 = vsel %vm727, %v693, 0
      %v741 = vsel %vm727, %v694, 0
      %v744 = vsel %vm727, %v695, 0
      %v747 = vsel %vm727, %v696, 0
      %v750 = vsel %vm727, %v697, 0
      %v753 = vsel %vm727, %v698, 0
      %v756 = vsel %vm727, %v699, 0
      %v759 = vsel %vm727, %v700, 0
      %v762 = vsel %vm727, %v701, 0
      %v765 = vsel %vm727, %v702, 0
      %v768 = vsel %vm727, %v703, 0
      %v771 = vsel %vm727, %v704, 0
      %v774 = vsel %vm727, %v705, 0
      %v777 = vsel %vm727, %v706, 0
      %v780 = vsel %vm727, %v707, 0
      %v783 = vsel %vm727, %v708, 0
      %v786 = vsel %vm727, %v709, 0
      %v789 = vsel %vm727, %v710, 0
      %v792 = vsel %vm727, %v711, 0
      %v795 = vsel %vm727, %v712, 0
      %v798 = vsel %vm727, %v713, 0
      %v801 = vsel %vm727, %v714, 0
      %v804 = vsel %vm727, %v715, 0
      %v807 = vsel %vm727, %v716, 0
      %v810 = vsel %vm727, %v717, 0
      %vm812 = vcmask 1040384
      %v814 = vsel %vm812, %v719, 0
      %816 = vmatprep.subr.mxu0 0.0
      %817 = vmatpush1.msra.mxu0 %v718
      %818 = vmatprep.subr.mxu0 0.0
      %819 = vmatpush1.msra.mxu0 %v814
      %820 = vmatprep.subr.mxu0 0.0
      %821 = vmatpush1.msra.mxu0 0.0
      %822 = vmatprep.subr.mxu0 0.0
      %823 = vmatpush1.msra.mxu0 0.0
      %824 = vmatprep.subr.mxu0 0.0
      %825 = vmatpush1.msra.mxu0 0.0
      %826 = vmatprep.subr.mxu0 0.0
      %827 = vmatpush1.msra.mxu0 0.0
      %828 = vmatprep.subr.mxu0 0.0
      %829 = vmatpush1.msra.mxu0 0.0
      %830 = vmatprep.subr.mxu0 0.0
      %831 = vmatpush1.msra.mxu0 0.0
      %832 = vmatprep.subr.mxu0 0.0
      %833 = vmatpush1.msra.mxu0 0.0
      %834 = vmatprep.subr.mxu0 0.0
      %835 = vmatpush1.msra.mxu0 0.0
      %836 = vmatprep.subr.mxu0 0.0
      %837 = vmatpush1.msra.mxu0 0.0
      %838 = vmatprep.subr.mxu0 0.0
      %839 = vmatpush1.msra.mxu0 0.0
      %840 = vmatprep.subr.mxu0 0.0
      %841 = vmatpush1.msra.mxu0 0.0
      %842 = vmatprep.subr.mxu0 0.0
      %843 = vmatpush1.msra.mxu0 0.0
      %844 = vmatprep.subr.mxu0 0.0
      %845 = vmatpush1.msra.mxu0 0.0
      %846 = vmatprep.subr.mxu0 0.0
      %847 = vmatpush1.msra.mxu0 0.0
      %848 = vmatprep.subr.mxu0 0.0
      %849 = vmatpush1.msra.mxu0 0.0
      %850 = vmatprep.subr.mxu0 0.0
      %851 = vmatpush1.msra.mxu0 0.0
      %852 = vmatprep.subr.mxu0 0.0
      %853 = vmatpush1.msra.mxu0 0.0
      %854 = vmatprep.subr.mxu0 0.0
      %855 = vmatpush1.msra.mxu0 0.0
      %856 = vmatprep.subr.mxu0 0.0
      %857 = vmatpush1.msra.mxu0 0.0
      %858 = vmatprep.subr.mxu0 0.0
      %859 = vmatpush1.msra.mxu0 0.0
      %860 = vmatprep.subr.mxu0 0.0
      %861 = vmatpush1.msra.mxu0 0.0
      %862 = vmatprep.subr.mxu0 0.0
      %863 = vmatpush1.msra.mxu0 0.0
      %864 = vmatprep.subr.mxu0 0.0
      %865 = vmatpush1.msra.mxu0 0.0
      %866 = vmatprep.subr.mxu0 0.0
      %867 = vmatpush1.msra.mxu0 0.0
      %868 = vmatprep.subr.mxu0 0.0
      %869 = vmatpush1.msra.mxu0 0.0
      %870 = vmatprep.subr.mxu0 0.0
      %871 = vmatpush1.msra.mxu0 0.0
      %872 = vmatprep.subr.mxu0 0.0
      %873 = vmatpush1.msra.mxu0 0.0
      %874 = vmatprep.subr.mxu0 0.0
      %875 = vmatpush1.msra.mxu0 0.0
      %876 = vmatprep.subr.mxu0 0.0
      %877 = vmatpush1.msra.mxu0 0.0
      %878 = vmatprep.subr.mxu0 0.0
      %879 = vmatpush1.msra.mxu0 0.0
      %880 = vmatprep.mubr.f32.mxu0 0.0
      %881 = vmatmul.mubr.f32.gmra.mrb[0].mxu0 %v729
      %v882 = vpop.f32.mrb[0].mxu0
      %v883 = vadd.f32 %v725, %v882
      %v884 = vpop.f32.mrb[0].mxu0
      %885 = vmatprep.mubr.f32.mxu0 0.0
      %886 = vmatmul.mubr.f32.gmra.mrb[0].mxu0 %v732
      %v887 = vpop.f32.mrb[0].mxu0
      %v888 = vadd.f32 %v725, %v887
      %v889 = vpop.f32.mrb[0].mxu0
      %890 = vmatprep.mubr.f32.mxu0 0.0
      %891 = vmatmul.mubr.f32.gmra.mrb[0].mxu0 %v735
      %v892 = vpop.f32.mrb[0].mxu0
      %v893 = vadd.f32 %v725, %v892
      %v894 = vpop.f32.mrb[0].mxu0
      %895 = vmatprep.mubr.f32.mxu0 0.0
      %896 = vmatmul.mubr.f32.gmra.mrb[0].mxu0 %v738
      %v897 = vpop.f32.mrb[0].mxu0
      %v898 = vadd.f32 %v725, %v897
      %v899 = vpop.f32.mrb[0].mxu0
      %900 = vmatprep.mubr.f32.mxu0 0.0
      %901 = vmatmul.mubr.f32.gmra.mrb[0].mxu0 %v741
      %v902 = vpop.f32.mrb[0].mxu0
      %v903 = vadd.f32 %v725, %v902
      %v904 = vpop.f32.mrb[0].mxu0
      %905 = vmatprep.mubr.f32.mxu0 0.0
      %906 = vmatmul.mubr.f32.gmra.mrb[0].mxu0 %v744
      %v907 = vpop.f32.mrb[0].mxu0
      %v908 = vadd.f32 %v725, %v907
      %v909 = vpop.f32.mrb[0].mxu0
      %910 = vmatprep.mubr.f32.mxu0 0.0
      %911 = vmatmul.mubr.f32.gmra.mrb[0].mxu0 %v747
      %v912 = vpop.f32.mrb[0].mxu0
      %v913 = vadd.f32 %v725, %v912
      %v914 = vpop.f32.mrb[0].mxu0
      %915 = vmatprep.mubr.f32.mxu0 0.0
      %916 = vmatmul.mubr.f32.gmra.mrb[0].mxu0 %v750
      %v917 = vpop.f32.mrb[0].mxu0
      %v918 = vadd.f32 %v725, %v917
      %v919 = vpop.f32.mrb[0].mxu0
      %920 = vmatprep.mubr.f32.mxu0 0.0
      %921 = vmatmul.mubr.f32.gmra.mrb[0].mxu0 %v753
      %v922 = vpop.f32.mrb[0].mxu0
      %v923 = vadd.f32 %v725, %v922
      %v924 = vpop.f32.mrb[0].mxu0
      %925 = vmatprep.mubr.f32.mxu0 0.0
      %926 = vmatmul.mubr.f32.gmra.mrb[0].mxu0 %v756
      %v927 = vpop.f32.mrb[0].mxu0
      %v928 = vadd.f32 %v725, %v927
      %v929 = vpop.f32.mrb[0].mxu0
      %930 = vmatprep.mubr.f32.mxu0 0.0
      %931 = vmatmul.mubr.f32.gmra.mrb[0].mxu0 %v759
      %v932 = vpop.f32.mrb[0].mxu0
      %v933 = vadd.f32 %v725, %v932
      %v934 = vpop.f32.mrb[0].mxu0
      %935 = vmatprep.mubr.f32.mxu0 0.0
      %936 = vmatmul.mubr.f32.gmra.mrb[0].mxu0 %v762
      %v937 = vpop.f32.mrb[0].mxu0
      %v938 = vadd.f32 %v725, %v937
      %v939 = vpop.f32.mrb[0].mxu0
      %940 = vmatprep.mubr.f32.mxu0 0.0
      %941 = vmatmul.mubr.f32.gmra.mrb[0].mxu0 %v765
      %v942 = vpop.f32.mrb[0].mxu0
      %v943 = vadd.f32 %v725, %v942
      %v944 = vpop.f32.mrb[0].mxu0
      %945 = vmatprep.mubr.f32.mxu0 0.0
      %946 = vmatmul.mubr.f32.gmra.mrb[0].mxu0 %v768
      %v947 = vpop.f32.mrb[0].mxu0
      %v948 = vadd.f32 %v725, %v947
      %v949 = vpop.f32.mrb[0].mxu0
      %950 = vmatprep.mubr.f32.mxu0 0.0
      %951 = vmatmul.mubr.f32.gmra.mrb[0].mxu0 %v771
      %v952 = vpop.f32.mrb[0].mxu0
      %v953 = vadd.f32 %v725, %v952
      %v954 = vpop.f32.mrb[0].mxu0
      %955 = vmatprep.mubr.f32.mxu0 0.0
      %956 = vmatmul.mubr.f32.gmra.mrb[0].mxu0 %v774
      %v957 = vpop.f32.mrb[0].mxu0
      %v958 = vadd.f32 %v725, %v957
      %v959 = vpop.f32.mrb[0].mxu0
      %960 = vmatprep.mubr.f32.mxu0 0.0
      %961 = vmatmul.mubr.f32.gmra.mrb[0].mxu0 %v777
      %v962 = vpop.f32.mrb[0].mxu0
      %v963 = vadd.f32 %v725, %v962
      %v964 = vpop.f32.mrb[0].mxu0
      %965 = vmatprep.mubr.f32.mxu0 0.0
      %966 = vmatmul.mubr.f32.gmra.mrb[0].mxu0 %v780
      %v967 = vpop.f32.mrb[0].mxu0
      %v968 = vadd.f32 %v725, %v967
      %v969 = vpop.f32.mrb[0].mxu0
      %970 = vmatprep.mubr.f32.mxu0 0.0
      %971 = vmatmul.mubr.f32.gmra.mrb[0].mxu0 %v783
      %v972 = vpop.f32.mrb[0].mxu0
      %v973 = vadd.f32 %v725, %v972
      %v974 = vpop.f32.mrb[0].mxu0
      %975 = vmatprep.mubr.f32.mxu0 0.0
      %976 = vmatmul.mubr.f32.gmra.mrb[0].mxu0 %v786
      %v977 = vpop.f32.mrb[0].mxu0
      %v978 = vadd.f32 %v725, %v977
      %v979 = vpop.f32.mrb[0].mxu0
      %980 = vmatprep.mubr.f32.mxu0 0.0
      %981 = vmatmul.mubr.f32.gmra.mrb[0].mxu0 %v789
      %v982 = vpop.f32.mrb[0].mxu0
      %v983 = vadd.f32 %v725, %v982
      %v984 = vpop.f32.mrb[0].mxu0
      %985 = vmatprep.mubr.f32.mxu0 0.0
      %986 = vmatmul.mubr.f32.gmra.mrb[0].mxu0 %v792
      %v987 = vpop.f32.mrb[0].mxu0
      %v988 = vadd.f32 %v725, %v987
      %v989 = vpop.f32.mrb[0].mxu0
      %990 = vmatprep.mubr.f32.mxu0 0.0
      %991 = vmatmul.mubr.f32.gmra.mrb[0].mxu0 %v795
      %v992 = vpop.f32.mrb[0].mxu0
      %v993 = vadd.f32 %v725, %v992
      %v994 = vpop.f32.mrb[0].mxu0
      %995 = vmatprep.mubr.f32.mxu0 0.0
      %996 = vmatmul.mubr.f32.gmra.mrb[0].mxu0 %v798
      %v997 = vpop.f32.mrb[0].mxu0
      %v998 = vadd.f32 %v725, %v997
      %v999 = vpop.f32.mrb[0].mxu0
      %1000 = vmatprep.mubr.f32.mxu0 0.0
      %1001 = vmatmul.mubr.f32.gmra.mrb[0].mxu0 %v801
      %v1002 = vpop.f32.mrb[0].mxu0
      %v1003 = vadd.f32 %v725, %v1002
      %v1004 = vpop.f32.mrb[0].mxu0
      %1005 = vmatprep.mubr.f32.mxu0 0.0
      %1006 = vmatmul.mubr.f32.gmra.mrb[0].mxu0 %v804
      %v1007 = vpop.f32.mrb[0].mxu0
      %v1008 = vadd.f32 %v725, %v1007
      %v1009 = vpop.f32.mrb[0].mxu0
      %1010 = vmatprep.mubr.f32.mxu0 0.0
      %1011 = vmatmul.mubr.f32.gmra.mrb[0].mxu0 %v807
      %v1012 = vpop.f32.mrb[0].mxu0
      %v1013 = vadd.f32 %v725, %v1012
      %v1014 = vpop.f32.mrb[0].mxu0
      %1015 = vmatprep.mubr.f32.mxu0 0.0
      %1016 = vmatmul.mubr.f32.gmra.mrb[0].mxu0 %v810
      %v1017 = vpop.f32.mrb[0].mxu0
      %v1018 = vadd.f32 %v725, %v1017
      %v1019 = vpop.f32.mrb[0].mxu0
      %1020 = vdwg.mxu0
      %v1021 = vmax.f32 %v883, 0.0
      %v1022 = vmax.f32 %v888, 0.0
      %v1023 = vmax.f32 %v893, 0.0
      %v1024 = vmax.f32 %v898, 0.0
      %v1025 = vmax.f32 %v903, 0.0
      %v1026 = vmax.f32 %v908, 0.0
      %v1027 = vmax.f32 %v913, 0.0
      %v1028 = vmax.f32 %v918, 0.0
      %v1029 = vmax.f32 %v923, 0.0
      %v1030 = vmax.f32 %v928, 0.0
      %v1031 = vmax.f32 %v933, 0.0
      %v1032 = vmax.f32 %v938, 0.0
      %v1033 = vmax.f32 %v943, 0.0
      %v1034 = vmax.f32 %v948, 0.0
      %v1035 = vmax.f32 %v953, 0.0
      %v1036 = vmax.f32 %v958, 0.0
      %v1037 = vmax.f32 %v963, 0.0
      %v1038 = vmax.f32 %v968, 0.0
      %v1039 = vmax.f32 %v973, 0.0
      %v1040 = vmax.f32 %v978, 0.0
      %v1041 = vmax.f32 %v983, 0.0
      %v1042 = vmax.f32 %v988, 0.0
      %v1043 = vmax.f32 %v993, 0.0
      %v1044 = vmax.f32 %v998, 0.0
      %v1045 = vmax.f32 %v1003, 0.0
      %v1046 = vmax.f32 %v1008, 0.0
      %v1047 = vmax.f32 %v1013, 0.0
      %v1048 = vmax.f32 %v1018, 0.0
      %v1049 = vld [vmem:[%s7] sm:$0xff]
      %v1050 = vld [vmem:[%s7 + $0x8] sm:$0x1]
      %v1051 = vld [vmem:[%s8] sm:$0x1]
      %v1078 = vrot.slane %v1021, 7
      %v1079 = vrot.slane %v1022, 7
      %v1080 = vsel %vm812, %v1078, %v1079
      %v1081 = vrot.slane %v1023, 7
      %v1082 = vsel %vm812, %v1079, %v1081
      %v1083 = vrot.slane %v1024, 7
      %v1084 = vsel %vm812, %v1081, %v1083
      %v1085 = vrot.slane %v1025, 7
      %v1086 = vsel %vm812, %v1083, %v1085
      %v1087 = vrot.slane %v1026, 7
      %v1088 = vsel %vm812, %v1085, %v1087
      %v1089 = vrot.slane %v1027, 7
      %v1090 = vsel %vm812, %v1087, %v1089
      %v1091 = vrot.slane %v1028, 7
      %v1092 = vsel %vm812, %v1089, %v1091
      %v1093 = vrot.slane %v1029, 7
      %v1094 = vsel %vm812, %v1091, %v1093
      %v1095 = vrot.slane %v1030, 7
      %v1096 = vsel %vm812, %v1093, %v1095
      %v1097 = vrot.slane %v1031, 7
      %v1098 = vsel %vm812, %v1095, %v1097
      %v1099 = vrot.slane %v1032, 7
      %v1100 = vsel %vm812, %v1097, %v1099
      %v1101 = vrot.slane %v1033, 7
      %v1102 = vsel %vm812, %v1099, %v1101
      %v1103 = vrot.slane %v1034, 7
      %v1104 = vsel %vm812, %v1101, %v1103
      %v1105 = vrot.slane %v1035, 7
      %v1106 = vsel %vm812, %v1103, %v1105
      %v1107 = vrot.slane %v1036, 7
      %v1108 = vsel %vm812, %v1105, %v1107
      %v1109 = vrot.slane %v1037, 7
      %v1110 = vsel %vm812, %v1107, %v1109
      %v1111 = vrot.slane %v1038, 7
      %v1112 = vsel %vm812, %v1109, %v1111
      %v1113 = vrot.slane %v1039, 7
      %v1114 = vsel %vm812, %v1111, %v1113
      %v1115 = vrot.slane %v1040, 7
      %v1116 = vsel %vm812, %v1113, %v1115
      %v1117 = vrot.slane %v1041, 7
      %v1118 = vsel %vm812, %v1115, %v1117
      %v1119 = vrot.slane %v1042, 7
      %v1120 = vsel %vm812, %v1117, %v1119
      %v1121 = vrot.slane %v1043, 7
      %v1122 = vsel %vm812, %v1119, %v1121
      %v1123 = vrot.slane %v1044, 7
      %v1124 = vsel %vm812, %v1121, %v1123
      %v1125 = vrot.slane %v1045, 7
      %v1126 = vsel %vm812, %v1123, %v1125
      %v1127 = vrot.slane %v1046, 7
      %v1128 = vsel %vm812, %v1125, %v1127
      %v1155 = vsel %vm812, 0.0, %v1078
      %1157 = vset.pattern.permute.xlu0 0
      %1158 = vperm.xlu0 %1157, %v655
      %v1159 = vpop.permute.xlu0 %1158
      %1162 = vset.pattern.permute.xlu0 0
      %1163 = vperm.xlu0 %1162, %v656
      %v1164 = vpop.permute.xlu0 %1163
      %1167 = vset.pattern.permute.xlu0 0
      %1168 = vperm.xlu0 %1167, %v657
      %v1169 = vpop.permute.xlu0 %1168
      %1172 = vset.pattern.permute.xlu0 0
      %1173 = vperm.xlu0 %1172, %v658
      %v1174 = vpop.permute.xlu0 %1173
      %1177 = vset.pattern.permute.xlu0 0
      %1178 = vperm.xlu0 %1177, %v659
      %v1179 = vpop.permute.xlu0 %1178
      %1182 = vset.pattern.permute.xlu0 0
      %1183 = vperm.xlu0 %1182, %v660
      %v1184 = vpop.permute.xlu0 %1183
      %1187 = vset.pattern.permute.xlu0 0
      %1188 = vperm.xlu0 %1187, %v661
      %v1189 = vpop.permute.xlu0 %1188
      %1192 = vset.pattern.permute.xlu0 0
      %1193 = vperm.xlu0 %1192, %v662
      %v1194 = vpop.permute.xlu0 %1193
      %1197 = vset.pattern.permute.xlu0 0
      %1198 = vperm.xlu0 %1197, %v663
      %v1199 = vpop.permute.xlu0 %1198
      %1202 = vset.pattern.permute.xlu0 0
      %1203 = vperm.xlu0 %1202, %v664
      %v1204 = vpop.permute.xlu0 %1203
      %1207 = vset.pattern.permute.xlu0 0
      %1208 = vperm.xlu0 %1207, %v665
      %v1209 = vpop.permute.xlu0 %1208
      %1212 = vset.pattern.permute.xlu0 0
      %1213 = vperm.xlu0 %1212, %v666
      %v1214 = vpop.permute.xlu0 %1213
      %1217 = vset.pattern.permute.xlu0 0
      %1218 = vperm.xlu0 %1217, %v667
      %v1219 = vpop.permute.xlu0 %1218
      %1222 = vset.pattern.permute.xlu0 0
      %1223 = vperm.xlu0 %1222, %v668
      %v1224 = vpop.permute.xlu0 %1223
      %1227 = vset.pattern.permute.xlu0 0
      %1228 = vperm.xlu0 %1227, %v669
      %v1229 = vpop.permute.xlu0 %1228
      %1232 = vset.pattern.permute.xlu0 0
      %1233 = vperm.xlu0 %1232, %v670
      %v1234 = vpop.permute.xlu0 %1233
      %1237 = vset.pattern.permute.xlu0 0
      %1238 = vperm.xlu0 %1237, %v671
      %v1239 = vpop.permute.xlu0 %1238
      %1242 = vset.pattern.permute.xlu0 0
      %1243 = vperm.xlu0 %1242, %v672
      %v1244 = vpop.permute.xlu0 %1243
      %1247 = vset.pattern.permute.xlu0 0
      %1248 = vperm.xlu0 %1247, %v673
      %v1249 = vpop.permute.xlu0 %1248
      %1252 = vset.pattern.permute.xlu0 0
      %1253 = vperm.xlu0 %1252, %v674
      %v1254 = vpop.permute.xlu0 %1253
      %1257 = vset.pattern.permute.xlu0 0
      %1258 = vperm.xlu0 %1257, %v675
      %v1259 = vpop.permute.xlu0 %1258
      %1262 = vset.pattern.permute.xlu0 0
      %1263 = vperm.xlu0 %1262, %v676
      %v1264 = vpop.permute.xlu0 %1263
      %1267 = vset.pattern.permute.xlu0 0
      %1268 = vperm.xlu0 %1267, %v677
      %v1269 = vpop.permute.xlu0 %1268
      %1272 = vset.pattern.permute.xlu0 0
      %1273 = vperm.xlu0 %1272, %v678
      %v1274 = vpop.permute.xlu0 %1273
      %1277 = vset.pattern.permute.xlu0 0
      %1278 = vperm.xlu0 %1277, %v679
      %v1279 = vpop.permute.xlu0 %1278
      %1282 = vset.pattern.permute.xlu0 0
      %1283 = vperm.xlu0 %1282, %v680
      %v1284 = vpop.permute.xlu0 %1283
      %1287 = vset.pattern.permute.xlu0 0
      %1288 = vperm.xlu0 %1287, %v681
      %v1289 = vpop.permute.xlu0 %1288
      %1292 = vset.pattern.permute.xlu0 0
      %1293 = vperm.xlu0 %1292, %v682
      %v1294 = vpop.permute.xlu0 %1293
      %v1296 = vmul.f32 %v1159, 0.0
      %v1297 = vmul.f32 %v1164, 0.0
      %v1298 = vmul.f32 %v1155, %v1169
      %v1299 = vmul.f32 %v1080, %v1174
      %v1300 = vmul.f32 %v1082, %v1179
      %v1301 = vmul.f32 %v1084, %v1184
      %v1302 = vmul.f32 %v1086, %v1189
      %v1303 = vmul.f32 %v1088, %v1194
      %v1304 = vmul.f32 %v1090, %v1199
      %v1305 = vmul.f32 %v1092, %v1204
      %v1306 = vmul.f32 %v1094, %v1209
      %v1307 = vmul.f32 %v1096, %v1214
      %v1308 = vmul.f32 %v1098, %v1219
      %v1309 = vmul.f32 %v1100, %v1224
      %v1310 = vmul.f32 %v1102, %v1229
      %v1311 = vmul.f32 %v1104, %v1234
      %v1312 = vmul.f32 %v1106, %v1239
      %v1313 = vmul.f32 %v1108, %v1244
      %v1314 = vmul.f32 %v1110, %v1249
      %v1315 = vmul.f32 %v1112, %v1254
      %v1316 = vmul.f32 %v1114, %v1259
      %v1317 = vmul.f32 %v1116, %v1264
      %v1318 = vmul.f32 %v1118, %v1269
      %v1319 = vmul.f32 %v1120, %v1274
      %v1320 = vmul.f32 %v1122, %v1279
      %v1321 = vmul.f32 %v1124, %v1284
      %v1322 = vmul.f32 %v1126, %v1289
      %v1323 = vmul.f32 %v1128, %v1294
      %v1324 = vlaneseq
      %v1325 = vshrl.u32 %v1324, 7
      %v1326 = vsub.s32 0, %v1325
      %v1327 = vrot.slane %v1049, %v1326
      %v1328 = vmul.f32 %v1296, %v1327
      %v1329 = vmul.f32 %v1297, %v1327
      %v1330 = vmul.f32 %v1298, %v1327
      %v1331 = vmul.f32 %v1299, %v1327
      %v1332 = vmul.f32 %v1300, %v1327
      %v1333 = vmul.f32 %v1301, %v1327
      %v1334 = vmul.f32 %v1302, %v1327
      %v1335 = vmul.f32 %v1303, %v1327
      %v1336 = vmul.f32 %v1304, %v1327
      %v1337 = vmul.f32 %v1305, %v1327
      %v1338 = vmul.f32 %v1306, %v1327
      %v1339 = vmul.f32 %v1307, %v1327
      %v1340 = vmul.f32 %v1308, %v1327
      %v1341 = vmul.f32 %v1309, %v1327
      %v1342 = vmul.f32 %v1310, %v1327
      %v1343 = vmul.f32 %v1311, %v1327
      %v1344 = vmul.f32 %v1312, %v1327
      %v1345 = vmul.f32 %v1313, %v1327
      %v1346 = vmul.f32 %v1314, %v1327
      %v1347 = vmul.f32 %v1315, %v1327
      %v1348 = vmul.f32 %v1316, %v1327
      %v1349 = vmul.f32 %v1317, %v1327
      %v1350 = vmul.f32 %v1318, %v1327
      %v1351 = vmul.f32 %v1319, %v1327
      %v1352 = vmul.f32 %v1320, %v1327
      %v1353 = vmul.f32 %v1321, %v1327
      %v1354 = vmul.f32 %v1322, %v1327
      %v1355 = vmul.f32 %v1323, %v1327
      %1356 = vset.pattern.permute.xlu0 1
      %1357 = vperm.xlu0 %1356, %v655
      %v1358 = vpop.permute.xlu0 %1357
      %1360 = vset.pattern.permute.xlu0 1
      %1361 = vperm.xlu0 %1360, %v656
      %v1362 = vpop.permute.xlu0 %1361
      %1364 = vset.pattern.permute.xlu0 1
      %1365 = vperm.xlu0 %1364, %v657
      %v1366 = vpop.permute.xlu0 %1365
      %1368 = vset.pattern.permute.xlu0 1
      %1369 = vperm.xlu0 %1368, %v658
      %v1370 = vpop.permute.xlu0 %1369
      %1372 = vset.pattern.permute.xlu0 1
      %1373 = vperm.xlu0 %1372, %v659
      %v1374 = vpop.permute.xlu0 %1373
      %1376 = vset.pattern.permute.xlu0 1
      %1377 = vperm.xlu0 %1376, %v660
      %v1378 = vpop.permute.xlu0 %1377
      %1380 = vset.pattern.permute.xlu0 1
      %1381 = vperm.xlu0 %1380, %v661
      %v1382 = vpop.permute.xlu0 %1381
      %1384 = vset.pattern.permute.xlu0 1
      %1385 = vperm.xlu0 %1384, %v662
      %v1386 = vpop.permute.xlu0 %1385
      %1388 = vset.pattern.permute.xlu0 1
      %1389 = vperm.xlu0 %1388, %v663
      %v1390 = vpop.permute.xlu0 %1389
      %1392 = vset.pattern.permute.xlu0 1
      %1393 = vperm.xlu0 %1392, %v664
      %v1394 = vpop.permute.xlu0 %1393
      %1396 = vset.pattern.permute.xlu0 1
      %1397 = vperm.xlu0 %1396, %v665
      %v1398 = vpop.permute.xlu0 %1397
      %1400 = vset.pattern.permute.xlu0 1
      %1401 = vperm.xlu0 %1400, %v666
      %v1402 = vpop.permute.xlu0 %1401
      %1404 = vset.pattern.permute.xlu0 1
      %1405 = vperm.xlu0 %1404, %v667
      %v1406 = vpop.permute.xlu0 %1405
      %1408 = vset.pattern.permute.xlu0 1
      %1409 = vperm.xlu0 %1408, %v668
      %v1410 = vpop.permute.xlu0 %1409
      %1412 = vset.pattern.permute.xlu0 1
      %1413 = vperm.xlu0 %1412, %v669
      %v1414 = vpop.permute.xlu0 %1413
      %1416 = vset.pattern.permute.xlu0 1
      %1417 = vperm.xlu0 %1416, %v670
      %v1418 = vpop.permute.xlu0 %1417
      %1420 = vset.pattern.permute.xlu0 1
      %1421 = vperm.xlu0 %1420, %v671
      %v1422 = vpop.permute.xlu0 %1421
      %1424 = vset.pattern.permute.xlu0 1
      %1425 = vperm.xlu0 %1424, %v672
      %v1426 = vpop.permute.xlu0 %1425
      %1428 = vset.pattern.permute.xlu0 1
      %1429 = vperm.xlu0 %1428, %v673
      %v1430 = vpop.permute.xlu0 %1429
      %1432 = vset.pattern.permute.xlu0 1
      %1433 = vperm.xlu0 %1432, %v674
      %v1434 = vpop.permute.xlu0 %1433
      %1436 = vset.pattern.permute.xlu0 1
      %1437 = vperm.xlu0 %1436, %v675
      %v1438 = vpop.permute.xlu0 %1437
      %1440 = vset.pattern.permute.xlu0 1
      %1441 = vperm.xlu0 %1440, %v676
      %v1442 = vpop.permute.xlu0 %1441
      %1444 = vset.pattern.permute.xlu0 1
      %1445 = vperm.xlu0 %1444, %v677
      %v1446 = vpop.permute.xlu0 %1445
      %1448 = vset.pattern.permute.xlu0 1
      %1449 = vperm.xlu0 %1448, %v678
      %v1450 = vpop.permute.xlu0 %1449
      %1452 = vset.pattern.permute.xlu0 1
      %1453 = vperm.xlu0 %1452, %v679
      %v1454 = vpop.permute.xlu0 %1453
      %1456 = vset.pattern.permute.xlu0 1
      %1457 = vperm.xlu0 %1456, %v680
      %v1458 = vpop.permute.xlu0 %1457
      %1460 = vset.pattern.permute.xlu0 1
      %1461 = vperm.xlu0 %1460, %v681
      %v1462 = vpop.permute.xlu0 %1461
      %1464 = vset.pattern.permute.xlu0 1
      %1465 = vperm.xlu0 %1464, %v682
      %v1466 = vpop.permute.xlu0 %1465
      %v1468 = vmul.f32 %v1358, 0.0
      %v1469 = vmul.f32 %v1362, 0.0
      %v1470 = vmul.f32 %v1021, %v1366
      %v1471 = vmul.f32 %v1022, %v1370
      %v1472 = vmul.f32 %v1023, %v1374
      %v1473 = vmul.f32 %v1024, %v1378
      %v1474 = vmul.f32 %v1025, %v1382
      %v1475 = vmul.f32 %v1026, %v1386
      %v1476 = vmul.f32 %v1027, %v1390
      %v1477 = vmul.f32 %v1028, %v1394
      %v1478 = vmul.f32 %v1029, %v1398
      %v1479 = vmul.f32 %v1030, %v1402
      %v1480 = vmul.f32 %v1031, %v1406
      %v1481 = vmul.f32 %v1032, %v1410
      %v1482 = vmul.f32 %v1033, %v1414
      %v1483 = vmul.f32 %v1034, %v1418
      %v1484 = vmul.f32 %v1035, %v1422
      %v1485 = vmul.f32 %v1036, %v1426
      %v1486 = vmul.f32 %v1037, %v1430
      %v1487 = vmul.f32 %v1038, %v1434
      %v1488 = vmul.f32 %v1039, %v1438
      %v1489 = vmul.f32 %v1040, %v1442
      %v1490 = vmul.f32 %v1041, %v1446
      %v1491 = vmul.f32 %v1042, %v1450
      %v1492 = vmul.f32 %v1043, %v1454
      %v1493 = vmul.f32 %v1044, %v1458
      %v1494 = vmul.f32 %v1045, %v1462
      %v1495 = vmul.f32 %v1046, %v1466
      %v1496 = vlaneseq
      %v1497 = vshrl.u32 %v1496, 7
      %v1498 = vsub.s32 1, %v1497
      %v1499 = vrot.slane %v1049, %v1498
      %v1500 = vmul.f32 %v1468, %v1499
      %v1501 = vmul.f32 %v1469, %v1499
      %v1502 = vmul.f32 %v1470, %v1499
      %v1503 = vmul.f32 %v1471, %v1499
      %v1504 = vmul.f32 %v1472, %v1499
      %v1505 = vmul.f32 %v1473, %v1499
      %v1506 = vmul.f32 %v1474, %v1499
      %v1507 = vmul.f32 %v1475, %v1499
      %v1508 = vmul.f32 %v1476, %v1499
      %v1509 = vmul.f32 %v1477, %v1499
      %v1510 = vmul.f32 %v1478, %v1499
      %v1511 = vmul.f32 %v1479, %v1499
      %v1512 = vmul.f32 %v1480, %v1499
      %v1513 = vmul.f32 %v1481, %v1499
      %v1514 = vmul.f32 %v1482, %v1499
      %v1515 = vmul.f32 %v1483, %v1499
      %v1516 = vmul.f32 %v1484, %v1499
      %v1517 = vmul.f32 %v1485, %v1499
      %v1518 = vmul.f32 %v1486, %v1499
      %v1519 = vmul.f32 %v1487, %v1499
      %v1520 = vmul.f32 %v1488, %v1499
      %v1521 = vmul.f32 %v1489, %v1499
      %v1522 = vmul.f32 %v1490, %v1499
      %v1523 = vmul.f32 %v1491, %v1499
      %v1524 = vmul.f32 %v1492, %v1499
      %v1525 = vmul.f32 %v1493, %v1499
      %v1526 = vmul.f32 %v1494, %v1499
      %v1527 = vmul.f32 %v1495, %v1499
      %v1528 = vadd.f32 %v1328, %v1500
      %v1529 = vadd.f32 %v1329, %v1501
      %v1530 = vadd.f32 %v1330, %v1502
      %v1531 = vadd.f32 %v1331, %v1503
      %v1532 = vadd.f32 %v1332, %v1504
      %v1533 = vadd.f32 %v1333, %v1505
      %v1534 = vadd.f32 %v1334, %v1506
      %v1535 = vadd.f32 %v1335, %v1507
      %v1536 = vadd.f32 %v1336, %v1508
      %v1537 = vadd.f32 %v1337, %v1509
      %v1538 = vadd.f32 %v1338, %v1510
      %v1539 = vadd.f32 %v1339, %v1511
      %v1540 = vadd.f32 %v1340, %v1512
      %v1541 = vadd.f32 %v1341, %v1513
      %v1542 = vadd.f32 %v1342, %v1514
      %v1543 = vadd.f32 %v1343, %v1515
      %v1544 = vadd.f32 %v1344, %v1516
      %v1545 = vadd.f32 %v1345, %v1517
      %v1546 = vadd.f32 %v1346, %v1518
      %v1547 = vadd.f32 %v1347, %v1519
      %v1548 = vadd.f32 %v1348, %v1520
      %v1549 = vadd.f32 %v1349, %v1521
      %v1550 = vadd.f32 %v1350, %v1522
      %v1551 = vadd.f32 %v1351, %v1523
      %v1552 = vadd.f32 %v1352, %v1524
      %v1553 = vadd.f32 %v1353, %v1525
      %v1554 = vadd.f32 %v1354, %v1526
      %v1555 = vadd.f32 %v1355, %v1527
      %vm1557 = vcmask 1046528
      %v1558 = vrot.slane %v1021, 1
      %v1559 = vrot.slane %v1022, 1
      %v1560 = vsel %vm1557, %v1558, %v1559
      %v1561 = vrot.slane %v1023, 1
      %v1562 = vsel %vm1557, %v1559, %v1561
      %v1563 = vrot.slane %v1024, 1
      %v1564 = vsel %vm1557, %v1561, %v1563
      %v1565 = vrot.slane %v1025, 1
      %v1566 = vsel %vm1557, %v1563, %v1565
      %v1567 = vrot.slane %v1026, 1
      %v1568 = vsel %vm1557, %v1565, %v1567
      %v1569 = vrot.slane %v1027, 1
      %v1570 = vsel %vm1557, %v1567, %v1569
      %v1571 = vrot.slane %v1028, 1
      %v1572 = vsel %vm1557, %v1569, %v1571
      %v1573 = vrot.slane %v1029, 1
      %v1574 = vsel %vm1557, %v1571, %v1573
      %v1575 = vrot.slane %v1030, 1
      %v1576 = vsel %vm1557, %v1573, %v1575
      %v1577 = vrot.slane %v1031, 1
      %v1578 = vsel %vm1557, %v1575, %v1577
      %v1579 = vrot.slane %v1032, 1
      %v1580 = vsel %vm1557, %v1577, %v1579
      %v1581 = vrot.slane %v1033, 1
      %v1582 = vsel %vm1557, %v1579, %v1581
      %v1583 = vrot.slane %v1034, 1
      %v1584 = vsel %vm1557, %v1581, %v1583
      %v1585 = vrot.slane %v1035, 1
      %v1586 = vsel %vm1557, %v1583, %v1585
      %v1587 = vrot.slane %v1036, 1
      %v1588 = vsel %vm1557, %v1585, %v1587
      %v1589 = vrot.slane %v1037, 1
      %v1590 = vsel %vm1557, %v1587, %v1589
      %v1591 = vrot.slane %v1038, 1
      %v1592 = vsel %vm1557, %v1589, %v1591
      %v1593 = vrot.slane %v1039, 1
      %v1594 = vsel %vm1557, %v1591, %v1593
      %v1595 = vrot.slane %v1040, 1
      %v1596 = vsel %vm1557, %v1593, %v1595
      %v1597 = vrot.slane %v1041, 1
      %v1598 = vsel %vm1557, %v1595, %v1597
      %v1599 = vrot.slane %v1042, 1
      %v1600 = vsel %vm1557, %v1597, %v1599
      %v1601 = vrot.slane %v1043, 1
      %v1602 = vsel %vm1557, %v1599, %v1601
      %v1603 = vrot.slane %v1044, 1
      %v1604 = vsel %vm1557, %v1601, %v1603
      %v1605 = vrot.slane %v1045, 1
      %v1606 = vsel %vm1557, %v1603, %v1605
      %v1607 = vrot.slane %v1046, 1
      %v1608 = vsel %vm1557, %v1605, %v1607
      %v1609 = vrot.slane %v1047, 1
      %v1610 = vsel %vm1557, %v1607, %v1609
      %v1638 = vsel %vm1557, 0.0, %v1558
      %1639 = vset.pattern.permute.xlu0 2
      %1640 = vperm.xlu0 %1639, %v655
      %v1641 = vpop.permute.xlu0 %1640
      %1643 = vset.pattern.permute.xlu0 2
      %1644 = vperm.xlu0 %1643, %v656
      %v1645 = vpop.permute.xlu0 %1644
      %1647 = vset.pattern.permute.xlu0 2
      %1648 = vperm.xlu0 %1647, %v657
      %v1649 = vpop.permute.xlu0 %1648
      %1651 = vset.pattern.permute.xlu0 2
      %1652 = vperm.xlu0 %1651, %v658
      %v1653 = vpop.permute.xlu0 %1652
      %1655 = vset.pattern.permute.xlu0 2
      %1656 = vperm.xlu0 %1655, %v659
      %v1657 = vpop.permute.xlu0 %1656
      %1659 = vset.pattern.permute.xlu0 2
      %1660 = vperm.xlu0 %1659, %v660
      %v1661 = vpop.permute.xlu0 %1660
      %1663 = vset.pattern.permute.xlu0 2
      %1664 = vperm.xlu0 %1663, %v661
      %v1665 = vpop.permute.xlu0 %1664
      %1667 = vset.pattern.permute.xlu0 2
      %1668 = vperm.xlu0 %1667, %v662
      %v1669 = vpop.permute.xlu0 %1668
      %1671 = vset.pattern.permute.xlu0 2
      %1672 = vperm.xlu0 %1671, %v663
      %v1673 = vpop.permute.xlu0 %1672
      %1675 = vset.pattern.permute.xlu0 2
      %1676 = vperm.xlu0 %1675, %v664
      %v1677 = vpop.permute.xlu0 %1676
      %1679 = vset.pattern.permute.xlu0 2
      %1680 = vperm.xlu0 %1679, %v665
      %v1681 = vpop.permute.xlu0 %1680
      %1683 = vset.pattern.permute.xlu0 2
      %1684 = vperm.xlu0 %1683, %v666
      %v1685 = vpop.permute.xlu0 %1684
      %1687 = vset.pattern.permute.xlu0 2
      %1688 = vperm.xlu0 %1687, %v667
      %v1689 = vpop.permute.xlu0 %1688
      %1691 = vset.pattern.permute.xlu0 2
      %1692 = vperm.xlu0 %1691, %v668
      %v1693 = vpop.permute.xlu0 %1692
      %1695 = vset.pattern.permute.xlu0 2
      %1696 = vperm.xlu0 %1695, %v669
      %v1697 = vpop.permute.xlu0 %1696
      %1699 = vset.pattern.permute.xlu0 2
      %1700 = vperm.xlu0 %1699, %v670
      %v1701 = vpop.permute.xlu0 %1700
      %1703 = vset.pattern.permute.xlu0 2
      %1704 = vperm.xlu0 %1703, %v671
      %v1705 = vpop.permute.xlu0 %1704
      %1707 = vset.pattern.permute.xlu0 2
      %1708 = vperm.xlu0 %1707, %v672
      %v1709 = vpop.permute.xlu0 %1708
      %1711 = vset.pattern.permute.xlu0 2
      %1712 = vperm.xlu0 %1711, %v673
      %v1713 = vpop.permute.xlu0 %1712
      %1715 = vset.pattern.permute.xlu0 2
      %1716 = vperm.xlu0 %1715, %v674
      %v1717 = vpop.permute.xlu0 %1716
      %1719 = vset.pattern.permute.xlu0 2
      %1720 = vperm.xlu0 %1719, %v675
      %v1721 = vpop.permute.xlu0 %1720
      %1723 = vset.pattern.permute.xlu0 2
      %1724 = vperm.xlu0 %1723, %v676
      %v1725 = vpop.permute.xlu0 %1724
      %1727 = vset.pattern.permute.xlu0 2
      %1728 = vperm.xlu0 %1727, %v677
      %v1729 = vpop.permute.xlu0 %1728
      %1731 = vset.pattern.permute.xlu0 2
      %1732 = vperm.xlu0 %1731, %v678
      %v1733 = vpop.permute.xlu0 %1732
      %1735 = vset.pattern.permute.xlu0 2
      %1736 = vperm.xlu0 %1735, %v679
      %v1737 = vpop.permute.xlu0 %1736
      %1739 = vset.pattern.permute.xlu0 2
      %1740 = vperm.xlu0 %1739, %v680
      %v1741 = vpop.permute.xlu0 %1740
      %1743 = vset.pattern.permute.xlu0 2
      %1744 = vperm.xlu0 %1743, %v681
      %v1745 = vpop.permute.xlu0 %1744
      %1747 = vset.pattern.permute.xlu0 2
      %1748 = vperm.xlu0 %1747, %v682
      %v1749 = vpop.permute.xlu0 %1748
      %v1751 = vmul.f32 %v1641, 0.0
      %v1752 = vmul.f32 %v1638, %v1645
      %v1753 = vmul.f32 %v1560, %v1649
      %v1754 = vmul.f32 %v1562, %v1653
      %v1755 = vmul.f32 %v1564, %v1657
      %v1756 = vmul.f32 %v1566, %v1661
      %v1757 = vmul.f32 %v1568, %v1665
      %v1758 = vmul.f32 %v1570, %v1669
      %v1759 = vmul.f32 %v1572, %v1673
      %v1760 = vmul.f32 %v1574, %v1677
      %v1761 = vmul.f32 %v1576, %v1681
      %v1762 = vmul.f32 %v1578, %v1685
      %v1763 = vmul.f32 %v1580, %v1689
      %v1764 = vmul.f32 %v1582, %v1693
      %v1765 = vmul.f32 %v1584, %v1697
      %v1766 = vmul.f32 %v1586, %v1701
      %v1767 = vmul.f32 %v1588, %v1705
      %v1768 = vmul.f32 %v1590, %v1709
      %v1769 = vmul.f32 %v1592, %v1713
      %v1770 = vmul.f32 %v1594, %v1717
      %v1771 = vmul.f32 %v1596, %v1721
      %v1772 = vmul.f32 %v1598, %v1725
      %v1773 = vmul.f32 %v1600, %v1729
      %v1774 = vmul.f32 %v1602, %v1733
      %v1775 = vmul.f32 %v1604, %v1737
      %v1776 = vmul.f32 %v1606, %v1741
      %v1777 = vmul.f32 %v1608, %v1745
      %v1778 = vmul.f32 %v1610, %v1749
      %v1779 = vlaneseq
      %v1780 = vshrl.u32 %v1779, 7
      %v1781 = vsub.s32 2, %v1780
      %v1782 = vrot.slane %v1049, %v1781
      %v1783 = vmul.f32 %v1751, %v1782
      %v1784 = vmul.f32 %v1752, %v1782
      %v1785 = vmul.f32 %v1753, %v1782
      %v1786 = vmul.f32 %v1754, %v1782
      %v1787 = vmul.f32 %v1755, %v1782
      %v1788 = vmul.f32 %v1756, %v1782
      %v1789 = vmul.f32 %v1757, %v1782
      %v1790 = vmul.f32 %v1758, %v1782
      %v1791 = vmul.f32 %v1759, %v1782
      %v1792 = vmul.f32 %v1760, %v1782
      %v1793 = vmul.f32 %v1761, %v1782
      %v1794 = vmul.f32 %v1762, %v1782
      %v1795 = vmul.f32 %v1763, %v1782
      %v1796 = vmul.f32 %v1764, %v1782
      %v1797 = vmul.f32 %v1765, %v1782
      %v1798 = vmul.f32 %v1766, %v1782
      %v1799 = vmul.f32 %v1767, %v1782
      %v1800 = vmul.f32 %v1768, %v1782
      %v1801 = vmul.f32 %v1769, %v1782
      %v1802 = vmul.f32 %v1770, %v1782
      %v1803 = vmul.f32 %v1771, %v1782
      %v1804 = vmul.f32 %v1772, %v1782
      %v1805 = vmul.f32 %v1773, %v1782
      %v1806 = vmul.f32 %v1774, %v1782
      %v1807 = vmul.f32 %v1775, %v1782
      %v1808 = vmul.f32 %v1776, %v1782
      %v1809 = vmul.f32 %v1777, %v1782
      %v1810 = vmul.f32 %v1778, %v1782
      %v1811 = vadd.f32 %v1528, %v1783
      %v1812 = vadd.f32 %v1529, %v1784
      %v1813 = vadd.f32 %v1530, %v1785
      %v1814 = vadd.f32 %v1531, %v1786
      %v1815 = vadd.f32 %v1532, %v1787
      %v1816 = vadd.f32 %v1533, %v1788
      %v1817 = vadd.f32 %v1534, %v1789
      %v1818 = vadd.f32 %v1535, %v1790
      %v1819 = vadd.f32 %v1536, %v1791
      %v1820 = vadd.f32 %v1537, %v1792
      %v1821 = vadd.f32 %v1538, %v1793
      %v1822 = vadd.f32 %v1539, %v1794
      %v1823 = vadd.f32 %v1540, %v1795
      %v1824 = vadd.f32 %v1541, %v1796
      %v1825 = vadd.f32 %v1542, %v1797
      %v1826 = vadd.f32 %v1543, %v1798
      %v1827 = vadd.f32 %v1544, %v1799
      %v1828 = vadd.f32 %v1545, %v1800
      %v1829 = vadd.f32 %v1546, %v1801
      %v1830 = vadd.f32 %v1547, %v1802
      %v1831 = vadd.f32 %v1548, %v1803
      %v1832 = vadd.f32 %v1549, %v1804
      %v1833 = vadd.f32 %v1550, %v1805
      %v1834 = vadd.f32 %v1551, %v1806
      %v1835 = vadd.f32 %v1552, %v1807
      %v1836 = vadd.f32 %v1553, %v1808
      %v1837 = vadd.f32 %v1554, %v1809
      %v1838 = vadd.f32 %v1555, %v1810
      %v1840 = vrot.slane %v1047, 7
      %v1841 = vsel %vm812, %v1127, %v1840
      %v1842 = vrot.slane %v1048, 7
      %v1843 = vsel %vm812, %v1840, %v1842
      %1846 = vset.pattern.permute.xlu0 3
      %1847 = vperm.xlu0 %1846, %v655
      %v1848 = vpop.permute.xlu0 %1847
      %1850 = vset.pattern.permute.xlu0 3
      %1851 = vperm.xlu0 %1850, %v656
      %v1852 = vpop.permute.xlu0 %1851
      %1854 = vset.pattern.permute.xlu0 3
      %1855 = vperm.xlu0 %1854, %v657
      %v1856 = vpop.permute.xlu0 %1855
      %1858 = vset.pattern.permute.xlu0 3
      %1859 = vperm.xlu0 %1858, %v658
      %v1860 = vpop.permute.xlu0 %1859
      %1862 = vset.pattern.permute.xlu0 3
      %1863 = vperm.xlu0 %1862, %v659
      %v1864 = vpop.permute.xlu0 %1863
      %1866 = vset.pattern.permute.xlu0 3
      %1867 = vperm.xlu0 %1866, %v660
      %v1868 = vpop.permute.xlu0 %1867
      %1870 = vset.pattern.permute.xlu0 3
      %1871 = vperm.xlu0 %1870, %v661
      %v1872 = vpop.permute.xlu0 %1871
      %1874 = vset.pattern.permute.xlu0 3
      %1875 = vperm.xlu0 %1874, %v662
      %v1876 = vpop.permute.xlu0 %1875
      %1878 = vset.pattern.permute.xlu0 3
      %1879 = vperm.xlu0 %1878, %v663
      %v1880 = vpop.permute.xlu0 %1879
      %1882 = vset.pattern.permute.xlu0 3
      %1883 = vperm.xlu0 %1882, %v664
      %v1884 = vpop.permute.xlu0 %1883
      %1886 = vset.pattern.permute.xlu0 3
      %1887 = vperm.xlu0 %1886, %v665
      %v1888 = vpop.permute.xlu0 %1887
      %1890 = vset.pattern.permute.xlu0 3
      %1891 = vperm.xlu0 %1890, %v666
      %v1892 = vpop.permute.xlu0 %1891
      %1894 = vset.pattern.permute.xlu0 3
      %1895 = vperm.xlu0 %1894, %v667
      %v1896 = vpop.permute.xlu0 %1895
      %1898 = vset.pattern.permute.xlu0 3
      %1899 = vperm.xlu0 %1898, %v668
      %v1900 = vpop.permute.xlu0 %1899
      %1902 = vset.pattern.permute.xlu0 3
      %1903 = vperm.xlu0 %1902, %v669
      %v1904 = vpop.permute.xlu0 %1903
      %1906 = vset.pattern.permute.xlu0 3
      %1907 = vperm.xlu0 %1906, %v670
      %v1908 = vpop.permute.xlu0 %1907
      %1910 = vset.pattern.permute.xlu0 3
      %1911 = vperm.xlu0 %1910, %v671
      %v1912 = vpop.permute.xlu0 %1911
      %1914 = vset.pattern.permute.xlu0 3
      %1915 = vperm.xlu0 %1914, %v672
      %v1916 = vpop.permute.xlu0 %1915
      %1918 = vset.pattern.permute.xlu0 3
      %1919 = vperm.xlu0 %1918, %v673
      %v1920 = vpop.permute.xlu0 %1919
      %1922 = vset.pattern.permute.xlu0 3
      %1923 = vperm.xlu0 %1922, %v674
      %v1924 = vpop.permute.xlu0 %1923
      %1926 = vset.pattern.permute.xlu0 3
      %1927 = vperm.xlu0 %1926, %v675
      %v1928 = vpop.permute.xlu0 %1927
      %1930 = vset.pattern.permute.xlu0 3
      %1931 = vperm.xlu0 %1930, %v676
      %v1932 = vpop.permute.xlu0 %1931
      %1934 = vset.pattern.permute.xlu0 3
      %1935 = vperm.xlu0 %1934, %v677
      %v1936 = vpop.permute.xlu0 %1935
      %1938 = vset.pattern.permute.xlu0 3
      %1939 = vperm.xlu0 %1938, %v678
      %v1940 = vpop.permute.xlu0 %1939
      %1942 = vset.pattern.permute.xlu0 3
      %1943 = vperm.xlu0 %1942, %v679
      %v1944 = vpop.permute.xlu0 %1943
      %1946 = vset.pattern.permute.xlu0 3
      %1947 = vperm.xlu0 %1946, %v680
      %v1948 = vpop.permute.xlu0 %1947
      %1950 = vset.pattern.permute.xlu0 3
      %1951 = vperm.xlu0 %1950, %v681
      %v1952 = vpop.permute.xlu0 %1951
      %1954 = vset.pattern.permute.xlu0 3
      %1955 = vperm.xlu0 %1954, %v682
      %v1956 = vpop.permute.xlu0 %1955
      %v1958 = vmul.f32 %v1155, %v1848
      %v1959 = vmul.f32 %v1080, %v1852
      %v1960 = vmul.f32 %v1082, %v1856
      %v1961 = vmul.f32 %v1084, %v1860
      %v1962 = vmul.f32 %v1086, %v1864
      %v1963 = vmul.f32 %v1088, %v1868
      %v1964 = vmul.f32 %v1090, %v1872
      %v1965 = vmul.f32 %v1092, %v1876
      %v1966 = vmul.f32 %v1094, %v1880
      %v1967 = vmul.f32 %v1096, %v1884
      %v1968 = vmul.f32 %v1098, %v1888
      %v1969 = vmul.f32 %v1100, %v1892
      %v1970 = vmul.f32 %v1102, %v1896
      %v1971 = vmul.f32 %v1104, %v1900
      %v1972 = vmul.f32 %v1106, %v1904
      %v1973 = vmul.f32 %v1108, %v1908
      %v1974 = vmul.f32 %v1110, %v1912
      %v1975 = vmul.f32 %v1112, %v1916
      %v1976 = vmul.f32 %v1114, %v1920
      %v1977 = vmul.f32 %v1116, %v1924
      %v1978 = vmul.f32 %v1118, %v1928
      %v1979 = vmul.f32 %v1120, %v1932
      %v1980 = vmul.f32 %v1122, %v1936
      %v1981 = vmul.f32 %v1124, %v1940
      %v1982 = vmul.f32 %v1126, %v1944
      %v1983 = vmul.f32 %v1128, %v1948
      %v1984 = vmul.f32 %v1841, %v1952
      %v1985 = vmul.f32 %v1843, %v1956
      %v1986 = vlaneseq
      %v1987 = vshrl.u32 %v1986, 7
      %v1988 = vsub.s32 3, %v1987
      %v1989 = vrot.slane %v1049, %v1988
      %v1990 = vmul.f32 %v1958, %v1989
      %v1991 = vmul.f32 %v1959, %v1989
      %v1992 = vmul.f32 %v1960, %v1989
      %v1993 = vmul.f32 %v1961, %v1989
      %v1994 = vmul.f32 %v1962, %v1989
      %v1995 = vmul.f32 %v1963, %v1989
      %v1996 = vmul.f32 %v1964, %v1989
      %v1997 = vmul.f32 %v1965, %v1989
      %v1998 = vmul.f32 %v1966, %v1989
      %v1999 = vmul.f32 %v1967, %v1989
      %v2000 = vmul.f32 %v1968, %v1989
      %v2001 = vmul.f32 %v1969, %v1989
      %v2002 = vmul.f32 %v1970, %v1989
      %v2003 = vmul.f32 %v1971, %v1989
      %v2004 = vmul.f32 %v1972, %v1989
      %v2005 = vmul.f32 %v1973, %v1989
      %v2006 = vmul.f32 %v1974, %v1989
      %v2007 = vmul.f32 %v1975, %v1989
      %v2008 = vmul.f32 %v1976, %v1989
      %v2009 = vmul.f32 %v1977, %v1989
      %v2010 = vmul.f32 %v1978, %v1989
      %v2011 = vmul.f32 %v1979, %v1989
      %v2012 = vmul.f32 %v1980, %v1989
      %v2013 = vmul.f32 %v1981, %v1989
      %v2014 = vmul.f32 %v1982, %v1989
      %v2015 = vmul.f32 %v1983, %v1989
      %v2016 = vmul.f32 %v1984, %v1989
      %v2017 = vmul.f32 %v1985, %v1989
      %v2018 = vadd.f32 %v1811, %v1990
      %v2019 = vadd.f32 %v1812, %v1991
      %v2020 = vadd.f32 %v1813, %v1992
      %v2021 = vadd.f32 %v1814, %v1993
      %v2022 = vadd.f32 %v1815, %v1994
      %v2023 = vadd.f32 %v1816, %v1995
      %v2024 = vadd.f32 %v1817, %v1996
      %v2025 = vadd.f32 %v1818, %v1997
      %v2026 = vadd.f32 %v1819, %v1998
      %v2027 = vadd.f32 %v1820, %v1999
      %v2028 = vadd.f32 %v1821, %v2000
      %v2029 = vadd.f32 %v1822, %v2001
      %v2030 = vadd.f32 %v1823, %v2002
      %v2031 = vadd.f32 %v1824, %v2003
      %v2032 = vadd.f32 %v1825, %v2004
      %v2033 = vadd.f32 %v1826, %v2005
      %v2034 = vadd.f32 %v1827, %v2006
      %v2035 = vadd.f32 %v1828, %v2007
      %v2036 = vadd.f32 %v1829, %v2008
      %v2037 = vadd.f32 %v1830, %v2009
      %v2038 = vadd.f32 %v1831, %v2010
      %v2039 = vadd.f32 %v1832, %v2011
      %v2040 = vadd.f32 %v1833, %v2012
      %v2041 = vadd.f32 %v1834, %v2013
      %v2042 = vadd.f32 %v1835, %v2014
      %v2043 = vadd.f32 %v1836, %v2015
      %v2044 = vadd.f32 %v1837, %v2016
      %v2045 = vadd.f32 %v1838, %v2017
      %2046 = vset.pattern.permute.xlu0 4
      %2047 = vperm.xlu0 %2046, %v655
      %v2048 = vpop.permute.xlu0 %2047
      %2050 = vset.pattern.permute.xlu0 4
      %2051 = vperm.xlu0 %2050, %v656
      %v2052 = vpop.permute.xlu0 %2051
      %2054 = vset.pattern.permute.xlu0 4
      %2055 = vperm.xlu0 %2054, %v657
      %v2056 = vpop.permute.xlu0 %2055
      %2058 = vset.pattern.permute.xlu0 4
      %2059 = vperm.xlu0 %2058, %v658
      %v2060 = vpop.permute.xlu0 %2059
      %2062 = vset.pattern.permute.xlu0 4
      %2063 = vperm.xlu0 %2062, %v659
      %v2064 = vpop.permute.xlu0 %2063
      %2066 = vset.pattern.permute.xlu0 4
      %2067 = vperm.xlu0 %2066, %v660
      %v2068 = vpop.permute.xlu0 %2067
      %2070 = vset.pattern.permute.xlu0 4
      %2071 = vperm.xlu0 %2070, %v661
      %v2072 = vpop.permute.xlu0 %2071
      %2074 = vset.pattern.permute.xlu0 4
      %2075 = vperm.xlu0 %2074, %v662
      %v2076 = vpop.permute.xlu0 %2075
      %2078 = vset.pattern.permute.xlu0 4
      %2079 = vperm.xlu0 %2078, %v663
      %v2080 = vpop.permute.xlu0 %2079
      %2082 = vset.pattern.permute.xlu0 4
      %2083 = vperm.xlu0 %2082, %v664
      %v2084 = vpop.permute.xlu0 %2083
      %2086 = vset.pattern.permute.xlu0 4
      %2087 = vperm.xlu0 %2086, %v665
      %v2088 = vpop.permute.xlu0 %2087
      %2090 = vset.pattern.permute.xlu0 4
      %2091 = vperm.xlu0 %2090, %v666
      %v2092 = vpop.permute.xlu0 %2091
      %2094 = vset.pattern.permute.xlu0 4
      %2095 = vperm.xlu0 %2094, %v667
      %v2096 = vpop.permute.xlu0 %2095
      %2098 = vset.pattern.permute.xlu0 4
      %2099 = vperm.xlu0 %2098, %v668
      %v2100 = vpop.permute.xlu0 %2099
      %2102 = vset.pattern.permute.xlu0 4
      %2103 = vperm.xlu0 %2102, %v669
      %v2104 = vpop.permute.xlu0 %2103
      %2106 = vset.pattern.permute.xlu0 4
      %2107 = vperm.xlu0 %2106, %v670
      %v2108 = vpop.permute.xlu0 %2107
      %2110 = vset.pattern.permute.xlu0 4
      %2111 = vperm.xlu0 %2110, %v671
      %v2112 = vpop.permute.xlu0 %2111
      %2114 = vset.pattern.permute.xlu0 4
      %2115 = vperm.xlu0 %2114, %v672
      %v2116 = vpop.permute.xlu0 %2115
      %2118 = vset.pattern.permute.xlu0 4
      %2119 = vperm.xlu0 %2118, %v673
      %v2120 = vpop.permute.xlu0 %2119
      %2122 = vset.pattern.permute.xlu0 4
      %2123 = vperm.xlu0 %2122, %v674
      %v2124 = vpop.permute.xlu0 %2123
      %2126 = vset.pattern.permute.xlu0 4
      %2127 = vperm.xlu0 %2126, %v675
      %v2128 = vpop.permute.xlu0 %2127
      %2130 = vset.pattern.permute.xlu0 4
      %2131 = vperm.xlu0 %2130, %v676
      %v2132 = vpop.permute.xlu0 %2131
      %2134 = vset.pattern.permute.xlu0 4
      %2135 = vperm.xlu0 %2134, %v677
      %v2136 = vpop.permute.xlu0 %2135
      %2138 = vset.pattern.permute.xlu0 4
      %2139 = vperm.xlu0 %2138, %v678
      %v2140 = vpop.permute.xlu0 %2139
      %2142 = vset.pattern.permute.xlu0 4
      %2143 = vperm.xlu0 %2142, %v679
      %v2144 = vpop.permute.xlu0 %2143
      %2146 = vset.pattern.permute.xlu0 4
      %2147 = vperm.xlu0 %2146, %v680
      %v2148 = vpop.permute.xlu0 %2147
      %2150 = vset.pattern.permute.xlu0 4
      %2151 = vperm.xlu0 %2150, %v681
      %v2152 = vpop.permute.xlu0 %2151
      %2154 = vset.pattern.permute.xlu0 4
      %2155 = vperm.xlu0 %2154, %v682
      %v2156 = vpop.permute.xlu0 %2155
      %v2158 = vmul.f32 %v1021, %v2048
      %v2159 = vmul.f32 %v1022, %v2052
      %v2160 = vmul.f32 %v1023, %v2056
      %v2161 = vmul.f32 %v1024, %v2060
      %v2162 = vmul.f32 %v1025, %v2064
      %v2163 = vmul.f32 %v1026, %v2068
      %v2164 = vmul.f32 %v1027, %v2072
      %v2165 = vmul.f32 %v1028, %v2076
      %v2166 = vmul.f32 %v1029, %v2080
      %v2167 = vmul.f32 %v1030, %v2084
      %v2168 = vmul.f32 %v1031, %v2088
      %v2169 = vmul.f32 %v1032, %v2092
      %v2170 = vmul.f32 %v1033, %v2096
      %v2171 = vmul.f32 %v1034, %v2100
      %v2172 = vmul.f32 %v1035, %v2104
      %v2173 = vmul.f32 %v1036, %v2108
      %v2174 = vmul.f32 %v1037, %v2112
      %v2175 = vmul.f32 %v1038, %v2116
      %v2176 = vmul.f32 %v1039, %v2120
      %v2177 = vmul.f32 %v1040, %v2124
      %v2178 = vmul.f32 %v1041, %v2128
      %v2179 = vmul.f32 %v1042, %v2132
      %v2180 = vmul.f32 %v1043, %v2136
      %v2181 = vmul.f32 %v1044, %v2140
      %v2182 = vmul.f32 %v1045, %v2144
      %v2183 = vmul.f32 %v1046, %v2148
      %v2184 = vmul.f32 %v1047, %v2152
      %v2185 = vmul.f32 %v1048, %v2156
      %v2186 = vlaneseq
      %v2187 = vshrl.u32 %v2186, 7
      %v2188 = vsub.s32 4, %v2187
      %v2189 = vrot.slane %v1049, %v2188
      %v2190 = vmul.f32 %v2158, %v2189
      %v2191 = vmul.f32 %v2159, %v2189
      %v2192 = vmul.f32 %v2160, %v2189
      %v2193 = vmul.f32 %v2161, %v2189
      %v2194 = vmul.f32 %v2162, %v2189
      %v2195 = vmul.f32 %v2163, %v2189
      %v2196 = vmul.f32 %v2164, %v2189
      %v2197 = vmul.f32 %v2165, %v2189
      %v2198 = vmul.f32 %v2166, %v2189
      %v2199 = vmul.f32 %v2167, %v2189
      %v2200 = vmul.f32 %v2168, %v2189
      %v2201 = vmul.f32 %v2169, %v2189
      %v2202 = vmul.f32 %v2170, %v2189
      %v2203 = vmul.f32 %v2171, %v2189
      %v2204 = vmul.f32 %v2172, %v2189
      %v2205 = vmul.f32 %v2173, %v2189
      %v2206 = vmul.f32 %v2174, %v2189
      %v2207 = vmul.f32 %v2175, %v2189
      %v2208 = vmul.f32 %v2176, %v2189
      %v2209 = vmul.f32 %v2177, %v2189
      %v2210 = vmul.f32 %v2178, %v2189
      %v2211 = vmul.f32 %v2179, %v2189
      %v2212 = vmul.f32 %v2180, %v2189
      %v2213 = vmul.f32 %v2181, %v2189
      %v2214 = vmul.f32 %v2182, %v2189
      %v2215 = vmul.f32 %v2183, %v2189
      %v2216 = vmul.f32 %v2184, %v2189
      %v2217 = vmul.f32 %v2185, %v2189
      %v2218 = vadd.f32 %v2018, %v2190
      %v2219 = vadd.f32 %v2019, %v2191
      %v2220 = vadd.f32 %v2020, %v2192
      %v2221 = vadd.f32 %v2021, %v2193
      %v2222 = vadd.f32 %v2022, %v2194
      %v2223 = vadd.f32 %v2023, %v2195
      %v2224 = vadd.f32 %v2024, %v2196
      %v2225 = vadd.f32 %v2025, %v2197
      %v2226 = vadd.f32 %v2026, %v2198
      %v2227 = vadd.f32 %v2027, %v2199
      %v2228 = vadd.f32 %v2028, %v2200
      %v2229 = vadd.f32 %v2029, %v2201
      %v2230 = vadd.f32 %v2030, %v2202
      %v2231 = vadd.f32 %v2031, %v2203
      %v2232 = vadd.f32 %v2032, %v2204
      %v2233 = vadd.f32 %v2033, %v2205
      %v2234 = vadd.f32 %v2034, %v2206
      %v2235 = vadd.f32 %v2035, %v2207
      %v2236 = vadd.f32 %v2036, %v2208
      %v2237 = vadd.f32 %v2037, %v2209
      %v2238 = vadd.f32 %v2038, %v2210
      %v2239 = vadd.f32 %v2039, %v2211
      %v2240 = vadd.f32 %v2040, %v2212
      %v2241 = vadd.f32 %v2041, %v2213
      %v2242 = vadd.f32 %v2042, %v2214
      %v2243 = vadd.f32 %v2043, %v2215
      %v2244 = vadd.f32 %v2044, %v2216
      %v2245 = vadd.f32 %v2045, %v2217
      %v2246 = vrot.slane %v1048, 1
      %v2247 = vsel %vm1557, %v1609, %v2246
      %v2250 = vsel %vm1557, %v2246, 0.0
      %2251 = vset.pattern.permute.xlu0 5
      %2252 = vperm.xlu0 %2251, %v655
      %v2253 = vpop.permute.xlu0 %2252
      %2255 = vset.pattern.permute.xlu0 5
      %2256 = vperm.xlu0 %2255, %v656
      %v2257 = vpop.permute.xlu0 %2256
      %2259 = vset.pattern.permute.xlu0 5
      %2260 = vperm.xlu0 %2259, %v657
      %v2261 = vpop.permute.xlu0 %2260
      %2263 = vset.pattern.permute.xlu0 5
      %2264 = vperm.xlu0 %2263, %v658
      %v2265 = vpop.permute.xlu0 %2264
      %2267 = vset.pattern.permute.xlu0 5
      %2268 = vperm.xlu0 %2267, %v659
      %v2269 = vpop.permute.xlu0 %2268
      %2271 = vset.pattern.permute.xlu0 5
      %2272 = vperm.xlu0 %2271, %v660
      %v2273 = vpop.permute.xlu0 %2272
      %2275 = vset.pattern.permute.xlu0 5
      %2276 = vperm.xlu0 %2275, %v661
      %v2277 = vpop.permute.xlu0 %2276
      %2279 = vset.pattern.permute.xlu0 5
      %2280 = vperm.xlu0 %2279, %v662
      %v2281 = vpop.permute.xlu0 %2280
      %2283 = vset.pattern.permute.xlu0 5
      %2284 = vperm.xlu0 %2283, %v663
      %v2285 = vpop.permute.xlu0 %2284
      %2287 = vset.pattern.permute.xlu0 5
      %2288 = vperm.xlu0 %2287, %v664
      %v2289 = vpop.permute.xlu0 %2288
      %2291 = vset.pattern.permute.xlu0 5
      %2292 = vperm.xlu0 %2291, %v665
      %v2293 = vpop.permute.xlu0 %2292
      %2295 = vset.pattern.permute.xlu0 5
      %2296 = vperm.xlu0 %2295, %v666
      %v2297 = vpop.permute.xlu0 %2296
      %2299 = vset.pattern.permute.xlu0 5
      %2300 = vperm.xlu0 %2299, %v667
      %v2301 = vpop.permute.xlu0 %2300
      %2303 = vset.pattern.permute.xlu0 5
      %2304 = vperm.xlu0 %2303, %v668
      %v2305 = vpop.permute.xlu0 %2304
      %2307 = vset.pattern.permute.xlu0 5
      %2308 = vperm.xlu0 %2307, %v669
      %v2309 = vpop.permute.xlu0 %2308
      %2311 = vset.pattern.permute.xlu0 5
      %2312 = vperm.xlu0 %2311, %v670
      %v2313 = vpop.permute.xlu0 %2312
      %2315 = vset.pattern.permute.xlu0 5
      %2316 = vperm.xlu0 %2315, %v671
      %v2317 = vpop.permute.xlu0 %2316
      %2319 = vset.pattern.permute.xlu0 5
      %2320 = vperm.xlu0 %2319, %v672
      %v2321 = vpop.permute.xlu0 %2320
      %2323 = vset.pattern.permute.xlu0 5
      %2324 = vperm.xlu0 %2323, %v673
      %v2325 = vpop.permute.xlu0 %2324
      %2327 = vset.pattern.permute.xlu0 5
      %2328 = vperm.xlu0 %2327, %v674
      %v2329 = vpop.permute.xlu0 %2328
      %2331 = vset.pattern.permute.xlu0 5
      %2332 = vperm.xlu0 %2331, %v675
      %v2333 = vpop.permute.xlu0 %2332
      %2335 = vset.pattern.permute.xlu0 5
      %2336 = vperm.xlu0 %2335, %v676
      %v2337 = vpop.permute.xlu0 %2336
      %2339 = vset.pattern.permute.xlu0 5
      %2340 = vperm.xlu0 %2339, %v677
      %v2341 = vpop.permute.xlu0 %2340
      %2343 = vset.pattern.permute.xlu0 5
      %2344 = vperm.xlu0 %2343, %v678
      %v2345 = vpop.permute.xlu0 %2344
      %2347 = vset.pattern.permute.xlu0 5
      %2348 = vperm.xlu0 %2347, %v679
      %v2349 = vpop.permute.xlu0 %2348
      %2351 = vset.pattern.permute.xlu0 5
      %2352 = vperm.xlu0 %2351, %v680
      %v2353 = vpop.permute.xlu0 %2352
      %2355 = vset.pattern.permute.xlu0 5
      %2356 = vperm.xlu0 %2355, %v681
      %v2357 = vpop.permute.xlu0 %2356
      %2359 = vset.pattern.permute.xlu0 5
      %2360 = vperm.xlu0 %2359, %v682
      %v2361 = vpop.permute.xlu0 %2360
      %v2363 = vmul.f32 %v1560, %v2253
      %v2364 = vmul.f32 %v1562, %v2257
      %v2365 = vmul.f32 %v1564, %v2261
      %v2366 = vmul.f32 %v1566, %v2265
      %v2367 = vmul.f32 %v1568, %v2269
      %v2368 = vmul.f32 %v1570, %v2273
      %v2369 = vmul.f32 %v1572, %v2277
      %v2370 = vmul.f32 %v1574, %v2281
      %v2371 = vmul.f32 %v1576, %v2285
      %v2372 = vmul.f32 %v1578, %v2289
      %v2373 = vmul.f32 %v1580, %v2293
      %v2374 = vmul.f32 %v1582, %v2297
      %v2375 = vmul.f32 %v1584, %v2301
      %v2376 = vmul.f32 %v1586, %v2305
      %v2377 = vmul.f32 %v1588, %v2309
      %v2378 = vmul.f32 %v1590, %v2313
      %v2379 = vmul.f32 %v1592, %v2317
      %v2380 = vmul.f32 %v1594, %v2321
      %v2381 = vmul.f32 %v1596, %v2325
      %v2382 = vmul.f32 %v1598, %v2329
      %v2383 = vmul.f32 %v1600, %v2333
      %v2384 = vmul.f32 %v1602, %v2337
      %v2385 = vmul.f32 %v1604, %v2341
      %v2386 = vmul.f32 %v1606, %v2345
      %v2387 = vmul.f32 %v1608, %v2349
      %v2388 = vmul.f32 %v1610, %v2353
      %v2389 = vmul.f32 %v2247, %v2357
      %v2390 = vmul.f32 %v2250, %v2361
      %v2391 = vlaneseq
      %v2392 = vshrl.u32 %v2391, 7
      %v2393 = vsub.s32 5, %v2392
      %v2394 = vrot.slane %v1049, %v2393
      %v2395 = vmul.f32 %v2363, %v2394
      %v2396 = vmul.f32 %v2364, %v2394
      %v2397 = vmul.f32 %v2365, %v2394
      %v2398 = vmul.f32 %v2366, %v2394
      %v2399 = vmul.f32 %v2367, %v2394
      %v2400 = vmul.f32 %v2368, %v2394
      %v2401 = vmul.f32 %v2369, %v2394
      %v2402 = vmul.f32 %v2370, %v2394
      %v2403 = vmul.f32 %v2371, %v2394
      %v2404 = vmul.f32 %v2372, %v2394
      %v2405 = vmul.f32 %v2373, %v2394
      %v2406 = vmul.f32 %v2374, %v2394
      %v2407 = vmul.f32 %v2375, %v2394
      %v2408 = vmul.f32 %v2376, %v2394
      %v2409 = vmul.f32 %v2377, %v2394
      %v2410 = vmul.f32 %v2378, %v2394
      %v2411 = vmul.f32 %v2379, %v2394
      %v2412 = vmul.f32 %v2380, %v2394
      %v2413 = vmul.f32 %v2381, %v2394
      %v2414 = vmul.f32 %v2382, %v2394
      %v2415 = vmul.f32 %v2383, %v2394
      %v2416 = vmul.f32 %v2384, %v2394
      %v2417 = vmul.f32 %v2385, %v2394
      %v2418 = vmul.f32 %v2386, %v2394
      %v2419 = vmul.f32 %v2387, %v2394
      %v2420 = vmul.f32 %v2388, %v2394
      %v2421 = vmul.f32 %v2389, %v2394
      %v2422 = vmul.f32 %v2390, %v2394
      %v2423 = vadd.f32 %v2218, %v2395
      %v2424 = vadd.f32 %v2219, %v2396
      %v2425 = vadd.f32 %v2220, %v2397
      %v2426 = vadd.f32 %v2221, %v2398
      %v2427 = vadd.f32 %v2222, %v2399
      %v2428 = vadd.f32 %v2223, %v2400
      %v2429 = vadd.f32 %v2224, %v2401
      %v2430 = vadd.f32 %v2225, %v2402
      %v2431 = vadd.f32 %v2226, %v2403
      %v2432 = vadd.f32 %v2227, %v2404
      %v2433 = vadd.f32 %v2228, %v2405
      %v2434 = vadd.f32 %v2229, %v2406
      %v2435 = vadd.f32 %v2230, %v2407
      %v2436 = vadd.f32 %v2231, %v2408
      %v2437 = vadd.f32 %v2232, %v2409
      %v2438 = vadd.f32 %v2233, %v2410
      %v2439 = vadd.f32 %v2234, %v2411
      %v2440 = vadd.f32 %v2235, %v2412
      %v2441 = vadd.f32 %v2236, %v2413
      %v2442 = vadd.f32 %v2237, %v2414
      %v2443 = vadd.f32 %v2238, %v2415
      %v2444 = vadd.f32 %v2239, %v2416
      %v2445 = vadd.f32 %v2240, %v2417
      %v2446 = vadd.f32 %v2241, %v2418
      %v2447 = vadd.f32 %v2242, %v2419
      %v2448 = vadd.f32 %v2243, %v2420
      %v2449 = vadd.f32 %v2244, %v2421
      %v2450 = vadd.f32 %v2245, %v2422
      %v2452 = vsel %vm812, %v1842, 0.0
      %2453 = vset.pattern.permute.xlu0 6
      %2454 = vperm.xlu0 %2453, %v655
      %v2455 = vpop.permute.xlu0 %2454
      %2457 = vset.pattern.permute.xlu0 6
      %2458 = vperm.xlu0 %2457, %v656
      %v2459 = vpop.permute.xlu0 %2458
      %2461 = vset.pattern.permute.xlu0 6
      %2462 = vperm.xlu0 %2461, %v657
      %v2463 = vpop.permute.xlu0 %2462
      %2465 = vset.pattern.permute.xlu0 6
      %2466 = vperm.xlu0 %2465, %v658
      %v2467 = vpop.permute.xlu0 %2466
      %2469 = vset.pattern.permute.xlu0 6
      %2470 = vperm.xlu0 %2469, %v659
      %v2471 = vpop.permute.xlu0 %2470
      %2473 = vset.pattern.permute.xlu0 6
      %2474 = vperm.xlu0 %2473, %v660
      %v2475 = vpop.permute.xlu0 %2474
      %2477 = vset.pattern.permute.xlu0 6
      %2478 = vperm.xlu0 %2477, %v661
      %v2479 = vpop.permute.xlu0 %2478
      %2481 = vset.pattern.permute.xlu0 6
      %2482 = vperm.xlu0 %2481, %v662
      %v2483 = vpop.permute.xlu0 %2482
      %2485 = vset.pattern.permute.xlu0 6
      %2486 = vperm.xlu0 %2485, %v663
      %v2487 = vpop.permute.xlu0 %2486
      %2489 = vset.pattern.permute.xlu0 6
      %2490 = vperm.xlu0 %2489, %v664
      %v2491 = vpop.permute.xlu0 %2490
      %2493 = vset.pattern.permute.xlu0 6
      %2494 = vperm.xlu0 %2493, %v665
      %v2495 = vpop.permute.xlu0 %2494
      %2497 = vset.pattern.permute.xlu0 6
      %2498 = vperm.xlu0 %2497, %v666
      %v2499 = vpop.permute.xlu0 %2498
      %2501 = vset.pattern.permute.xlu0 6
      %2502 = vperm.xlu0 %2501, %v667
      %v2503 = vpop.permute.xlu0 %2502
      %2505 = vset.pattern.permute.xlu0 6
      %2506 = vperm.xlu0 %2505, %v668
      %v2507 = vpop.permute.xlu0 %2506
      %2509 = vset.pattern.permute.xlu0 6
      %2510 = vperm.xlu0 %2509, %v669
      %v2511 = vpop.permute.xlu0 %2510
      %2513 = vset.pattern.permute.xlu0 6
      %2514 = vperm.xlu0 %2513, %v670
      %v2515 = vpop.permute.xlu0 %2514
      %2517 = vset.pattern.permute.xlu0 6
      %2518 = vperm.xlu0 %2517, %v671
      %v2519 = vpop.permute.xlu0 %2518
      %2521 = vset.pattern.permute.xlu0 6
      %2522 = vperm.xlu0 %2521, %v672
      %v2523 = vpop.permute.xlu0 %2522
      %2525 = vset.pattern.permute.xlu0 6
      %2526 = vperm.xlu0 %2525, %v673
      %v2527 = vpop.permute.xlu0 %2526
      %2529 = vset.pattern.permute.xlu0 6
      %2530 = vperm.xlu0 %2529, %v674
      %v2531 = vpop.permute.xlu0 %2530
      %2533 = vset.pattern.permute.xlu0 6
      %2534 = vperm.xlu0 %2533, %v675
      %v2535 = vpop.permute.xlu0 %2534
      %2537 = vset.pattern.permute.xlu0 6
      %2538 = vperm.xlu0 %2537, %v676
      %v2539 = vpop.permute.xlu0 %2538
      %2541 = vset.pattern.permute.xlu0 6
      %2542 = vperm.xlu0 %2541, %v677
      %v2543 = vpop.permute.xlu0 %2542
      %2545 = vset.pattern.permute.xlu0 6
      %2546 = vperm.xlu0 %2545, %v678
      %v2547 = vpop.permute.xlu0 %2546
      %2549 = vset.pattern.permute.xlu0 6
      %2550 = vperm.xlu0 %2549, %v679
      %v2551 = vpop.permute.xlu0 %2550
      %2553 = vset.pattern.permute.xlu0 6
      %2554 = vperm.xlu0 %2553, %v680
      %v2555 = vpop.permute.xlu0 %2554
      %2557 = vset.pattern.permute.xlu0 6
      %2558 = vperm.xlu0 %2557, %v681
      %v2559 = vpop.permute.xlu0 %2558
      %2561 = vset.pattern.permute.xlu0 6
      %2562 = vperm.xlu0 %2561, %v682
      %v2563 = vpop.permute.xlu0 %2562
      %v2565 = vmul.f32 %v1082, %v2455
      %v2566 = vmul.f32 %v1084, %v2459
      %v2567 = vmul.f32 %v1086, %v2463
      %v2568 = vmul.f32 %v1088, %v2467
      %v2569 = vmul.f32 %v1090, %v2471
      %v2570 = vmul.f32 %v1092, %v2475
      %v2571 = vmul.f32 %v1094, %v2479
      %v2572 = vmul.f32 %v1096, %v2483
      %v2573 = vmul.f32 %v1098, %v2487
      %v2574 = vmul.f32 %v1100, %v2491
      %v2575 = vmul.f32 %v1102, %v2495
      %v2576 = vmul.f32 %v1104, %v2499
      %v2577 = vmul.f32 %v1106, %v2503
      %v2578 = vmul.f32 %v1108, %v2507
      %v2579 = vmul.f32 %v1110, %v2511
      %v2580 = vmul.f32 %v1112, %v2515
      %v2581 = vmul.f32 %v1114, %v2519
      %v2582 = vmul.f32 %v1116, %v2523
      %v2583 = vmul.f32 %v1118, %v2527
      %v2584 = vmul.f32 %v1120, %v2531
      %v2585 = vmul.f32 %v1122, %v2535
      %v2586 = vmul.f32 %v1124, %v2539
      %v2587 = vmul.f32 %v1126, %v2543
      %v2588 = vmul.f32 %v1128, %v2547
      %v2589 = vmul.f32 %v1841, %v2551
      %v2590 = vmul.f32 %v1843, %v2555
      %v2591 = vmul.f32 %v2452, %v2559
      %v2592 = vmul.f32 %v2563, 0.0
      %v2593 = vlaneseq
      %v2594 = vshrl.u32 %v2593, 7
      %v2595 = vsub.s32 6, %v2594
      %v2596 = vrot.slane %v1049, %v2595
      %v2597 = vmul.f32 %v2565, %v2596
      %v2598 = vmul.f32 %v2566, %v2596
      %v2599 = vmul.f32 %v2567, %v2596
      %v2600 = vmul.f32 %v2568, %v2596
      %v2601 = vmul.f32 %v2569, %v2596
      %v2602 = vmul.f32 %v2570, %v2596
      %v2603 = vmul.f32 %v2571, %v2596
      %v2604 = vmul.f32 %v2572, %v2596
      %v2605 = vmul.f32 %v2573, %v2596
      %v2606 = vmul.f32 %v2574, %v2596
      %v2607 = vmul.f32 %v2575, %v2596
      %v2608 = vmul.f32 %v2576, %v2596
      %v2609 = vmul.f32 %v2577, %v2596
      %v2610 = vmul.f32 %v2578, %v2596
      %v2611 = vmul.f32 %v2579, %v2596
      %v2612 = vmul.f32 %v2580, %v2596
      %v2613 = vmul.f32 %v2581, %v2596
      %v2614 = vmul.f32 %v2582, %v2596
      %v2615 = vmul.f32 %v2583, %v2596
      %v2616 = vmul.f32 %v2584, %v2596
      %v2617 = vmul.f32 %v2585, %v2596
      %v2618 = vmul.f32 %v2586, %v2596
      %v2619 = vmul.f32 %v2587, %v2596
      %v2620 = vmul.f32 %v2588, %v2596
      %v2621 = vmul.f32 %v2589, %v2596
      %v2622 = vmul.f32 %v2590, %v2596
      %v2623 = vmul.f32 %v2591, %v2596
      %v2624 = vmul.f32 %v2592, %v2596
      %v2625 = vadd.f32 %v2423, %v2597
      %v2626 = vadd.f32 %v2424, %v2598
      %v2627 = vadd.f32 %v2425, %v2599
      %v2628 = vadd.f32 %v2426, %v2600
      %v2629 = vadd.f32 %v2427, %v2601
      %v2630 = vadd.f32 %v2428, %v2602
      %v2631 = vadd.f32 %v2429, %v2603
      %v2632 = vadd.f32 %v2430, %v2604
      %v2633 = vadd.f32 %v2431, %v2605
      %v2634 = vadd.f32 %v2432, %v2606
      %v2635 = vadd.f32 %v2433, %v2607
      %v2636 = vadd.f32 %v2434, %v2608
      %v2637 = vadd.f32 %v2435, %v2609
      %v2638 = vadd.f32 %v2436, %v2610
      %v2639 = vadd.f32 %v2437, %v2611
      %v2640 = vadd.f32 %v2438, %v2612
      %v2641 = vadd.f32 %v2439, %v2613
      %v2642 = vadd.f32 %v2440, %v2614
      %v2643 = vadd.f32 %v2441, %v2615
      %v2644 = vadd.f32 %v2442, %v2616
      %v2645 = vadd.f32 %v2443, %v2617
      %v2646 = vadd.f32 %v2444, %v2618
      %v2647 = vadd.f32 %v2445, %v2619
      %v2648 = vadd.f32 %v2446, %v2620
      %v2649 = vadd.f32 %v2447, %v2621
      %v2650 = vadd.f32 %v2448, %v2622
      %v2651 = vadd.f32 %v2449, %v2623
      %v2652 = vadd.f32 %v2450, %v2624
      %2653 = vset.pattern.permute.xlu0 7
      %2654 = vperm.xlu0 %2653, %v655
      %v2655 = vpop.permute.xlu0 %2654
      %2657 = vset.pattern.permute.xlu0 7
      %2658 = vperm.xlu0 %2657, %v656
      %v2659 = vpop.permute.xlu0 %2658
      %2661 = vset.pattern.permute.xlu0 7
      %2662 = vperm.xlu0 %2661, %v657
      %v2663 = vpop.permute.xlu0 %2662
      %2665 = vset.pattern.permute.xlu0 7
      %2666 = vperm.xlu0 %2665, %v658
      %v2667 = vpop.permute.xlu0 %2666
      %2669 = vset.pattern.permute.xlu0 7
      %2670 = vperm.xlu0 %2669, %v659
      %v2671 = vpop.permute.xlu0 %2670
      %2673 = vset.pattern.permute.xlu0 7
      %2674 = vperm.xlu0 %2673, %v660
      %v2675 = vpop.permute.xlu0 %2674
      %2677 = vset.pattern.permute.xlu0 7
      %2678 = vperm.xlu0 %2677, %v661
      %v2679 = vpop.permute.xlu0 %2678
      %2681 = vset.pattern.permute.xlu0 7
      %2682 = vperm.xlu0 %2681, %v662
      %v2683 = vpop.permute.xlu0 %2682
      %2685 = vset.pattern.permute.xlu0 7
      %2686 = vperm.xlu0 %2685, %v663
      %v2687 = vpop.permute.xlu0 %2686
      %2689 = vset.pattern.permute.xlu0 7
      %2690 = vperm.xlu0 %2689, %v664
      %v2691 = vpop.permute.xlu0 %2690
      %2693 = vset.pattern.permute.xlu0 7
      %2694 = vperm.xlu0 %2693, %v665
      %v2695 = vpop.permute.xlu0 %2694
      %2697 = vset.pattern.permute.xlu0 7
      %2698 = vperm.xlu0 %2697, %v666
      %v2699 = vpop.permute.xlu0 %2698
      %2701 = vset.pattern.permute.xlu0 7
      %2702 = vperm.xlu0 %2701, %v667
      %v2703 = vpop.permute.xlu0 %2702
      %2705 = vset.pattern.permute.xlu0 7
      %2706 = vperm.xlu0 %2705, %v668
      %v2707 = vpop.permute.xlu0 %2706
      %2709 = vset.pattern.permute.xlu0 7
      %2710 = vperm.xlu0 %2709, %v669
      %v2711 = vpop.permute.xlu0 %2710
      %2713 = vset.pattern.permute.xlu0 7
      %2714 = vperm.xlu0 %2713, %v670
      %v2715 = vpop.permute.xlu0 %2714
      %2717 = vset.pattern.permute.xlu0 7
      %2718 = vperm.xlu0 %2717, %v671
      %v2719 = vpop.permute.xlu0 %2718
      %2721 = vset.pattern.permute.xlu0 7
      %2722 = vperm.xlu0 %2721, %v672
      %v2723 = vpop.permute.xlu0 %2722
      %2725 = vset.pattern.permute.xlu0 7
      %2726 = vperm.xlu0 %2725, %v673
      %v2727 = vpop.permute.xlu0 %2726
      %2729 = vset.pattern.permute.xlu0 7
      %2730 = vperm.xlu0 %2729, %v674
      %v2731 = vpop.permute.xlu0 %2730
      %2733 = vset.pattern.permute.xlu0 7
      %2734 = vperm.xlu0 %2733, %v675
      %v2735 = vpop.permute.xlu0 %2734
      %2737 = vset.pattern.permute.xlu0 7
      %2738 = vperm.xlu0 %2737, %v676
      %v2739 = vpop.permute.xlu0 %2738
      %2741 = vset.pattern.permute.xlu0 7
      %2742 = vperm.xlu0 %2741, %v677
      %v2743 = vpop.permute.xlu0 %2742
      %2745 = vset.pattern.permute.xlu0 7
      %2746 = vperm.xlu0 %2745, %v678
      %v2747 = vpop.permute.xlu0 %2746
      %2749 = vset.pattern.permute.xlu0 7
      %2750 = vperm.xlu0 %2749, %v679
      %v2751 = vpop.permute.xlu0 %2750
      %2753 = vset.pattern.permute.xlu0 7
      %2754 = vperm.xlu0 %2753, %v680
      %v2755 = vpop.permute.xlu0 %2754
      %2757 = vset.pattern.permute.xlu0 7
      %2758 = vperm.xlu0 %2757, %v681
      %v2759 = vpop.permute.xlu0 %2758
      %2761 = vset.pattern.permute.xlu0 7
      %2762 = vperm.xlu0 %2761, %v682
      %v2763 = vpop.permute.xlu0 %2762
      %v2765 = vmul.f32 %v1023, %v2655
      %v2766 = vmul.f32 %v1024, %v2659
      %v2767 = vmul.f32 %v1025, %v2663
      %v2768 = vmul.f32 %v1026, %v2667
      %v2769 = vmul.f32 %v1027, %v2671
      %v2770 = vmul.f32 %v1028, %v2675
      %v2771 = vmul.f32 %v1029, %v2679
      %v2772 = vmul.f32 %v1030, %v2683
      %v2773 = vmul.f32 %v1031, %v2687
      %v2774 = vmul.f32 %v1032, %v2691
      %v2775 = vmul.f32 %v1033, %v2695
      %v2776 = vmul.f32 %v1034, %v2699
      %v2777 = vmul.f32 %v1035, %v2703
      %v2778 = vmul.f32 %v1036, %v2707
      %v2779 = vmul.f32 %v1037, %v2711
      %v2780 = vmul.f32 %v1038, %v2715
      %v2781 = vmul.f32 %v1039, %v2719
      %v2782 = vmul.f32 %v1040, %v2723
      %v2783 = vmul.f32 %v1041, %v2727
      %v2784 = vmul.f32 %v1042, %v2731
      %v2785 = vmul.f32 %v1043, %v2735
      %v2786 = vmul.f32 %v1044, %v2739
      %v2787 = vmul.f32 %v1045, %v2743
      %v2788 = vmul.f32 %v1046, %v2747
      %v2789 = vmul.f32 %v1047, %v2751
      %v2790 = vmul.f32 %v1048, %v2755
      %v2791 = vmul.f32 %v2759, 0.0
      %v2792 = vmul.f32 %v2763, 0.0
      %v2793 = vlaneseq
      %v2794 = vshrl.u32 %v2793, 7
      %v2795 = vsub.s32 7, %v2794
      %v2796 = vrot.slane %v1049, %v2795
      %v2797 = vmul.f32 %v2765, %v2796
      %v2798 = vmul.f32 %v2766, %v2796
      %v2799 = vmul.f32 %v2767, %v2796
      %v2800 = vmul.f32 %v2768, %v2796
      %v2801 = vmul.f32 %v2769, %v2796
      %v2802 = vmul.f32 %v2770, %v2796
      %v2803 = vmul.f32 %v2771, %v2796
      %v2804 = vmul.f32 %v2772, %v2796
      %v2805 = vmul.f32 %v2773, %v2796
      %v2806 = vmul.f32 %v2774, %v2796
      %v2807 = vmul.f32 %v2775, %v2796
      %v2808 = vmul.f32 %v2776, %v2796
      %v2809 = vmul.f32 %v2777, %v2796
      %v2810 = vmul.f32 %v2778, %v2796
      %v2811 = vmul.f32 %v2779, %v2796
      %v2812 = vmul.f32 %v2780, %v2796
      %v2813 = vmul.f32 %v2781, %v2796
      %v2814 = vmul.f32 %v2782, %v2796
      %v2815 = vmul.f32 %v2783, %v2796
      %v2816 = vmul.f32 %v2784, %v2796
      %v2817 = vmul.f32 %v2785, %v2796
      %v2818 = vmul.f32 %v2786, %v2796
      %v2819 = vmul.f32 %v2787, %v2796
      %v2820 = vmul.f32 %v2788, %v2796
      %v2821 = vmul.f32 %v2789, %v2796
      %v2822 = vmul.f32 %v2790, %v2796
      %v2823 = vmul.f32 %v2791, %v2796
      %v2824 = vmul.f32 %v2792, %v2796
      %v2825 = vadd.f32 %v2625, %v2797
      %v2826 = vadd.f32 %v2626, %v2798
      %v2827 = vadd.f32 %v2627, %v2799
      %v2828 = vadd.f32 %v2628, %v2800
      %v2829 = vadd.f32 %v2629, %v2801
      %v2830 = vadd.f32 %v2630, %v2802
      %v2831 = vadd.f32 %v2631, %v2803
      %v2832 = vadd.f32 %v2632, %v2804
      %v2833 = vadd.f32 %v2633, %v2805
      %v2834 = vadd.f32 %v2634, %v2806
      %v2835 = vadd.f32 %v2635, %v2807
      %v2836 = vadd.f32 %v2636, %v2808
      %v2837 = vadd.f32 %v2637, %v2809
      %v2838 = vadd.f32 %v2638, %v2810
      %v2839 = vadd.f32 %v2639, %v2811
      %v2840 = vadd.f32 %v2640, %v2812
      %v2841 = vadd.f32 %v2641, %v2813
      %v2842 = vadd.f32 %v2642, %v2814
      %v2843 = vadd.f32 %v2643, %v2815
      %v2844 = vadd.f32 %v2644, %v2816
      %v2845 = vadd.f32 %v2645, %v2817
      %v2846 = vadd.f32 %v2646, %v2818
      %v2847 = vadd.f32 %v2647, %v2819
      %v2848 = vadd.f32 %v2648, %v2820
      %v2849 = vadd.f32 %v2649, %v2821
      %v2850 = vadd.f32 %v2650, %v2822
      %v2851 = vadd.f32 %v2651, %v2823
      %v2852 = vadd.f32 %v2652, %v2824
      %2853 = vset.pattern.permute.xlu0 8
      %2854 = vperm.xlu0 %2853, %v655
      %v2855 = vpop.permute.xlu0 %2854
      %2857 = vset.pattern.permute.xlu0 8
      %2858 = vperm.xlu0 %2857, %v656
      %v2859 = vpop.permute.xlu0 %2858
      %2861 = vset.pattern.permute.xlu0 8
      %2862 = vperm.xlu0 %2861, %v657
      %v2863 = vpop.permute.xlu0 %2862
      %2865 = vset.pattern.permute.xlu0 8
      %2866 = vperm.xlu0 %2865, %v658
      %v2867 = vpop.permute.xlu0 %2866
      %2869 = vset.pattern.permute.xlu0 8
      %2870 = vperm.xlu0 %2869, %v659
      %v2871 = vpop.permute.xlu0 %2870
      %2873 = vset.pattern.permute.xlu0 8
      %2874 = vperm.xlu0 %2873, %v660
      %v2875 = vpop.permute.xlu0 %2874
      %2877 = vset.pattern.permute.xlu0 8
      %2878 = vperm.xlu0 %2877, %v661
      %v2879 = vpop.permute.xlu0 %2878
      %2881 = vset.pattern.permute.xlu0 8
      %2882 = vperm.xlu0 %2881, %v662
      %v2883 = vpop.permute.xlu0 %2882
      %2885 = vset.pattern.permute.xlu0 8
      %2886 = vperm.xlu0 %2885, %v663
      %v2887 = vpop.permute.xlu0 %2886
      %2889 = vset.pattern.permute.xlu0 8
      %2890 = vperm.xlu0 %2889, %v664
      %v2891 = vpop.permute.xlu0 %2890
      %2893 = vset.pattern.permute.xlu0 8
      %2894 = vperm.xlu0 %2893, %v665
      %v2895 = vpop.permute.xlu0 %2894
      %2897 = vset.pattern.permute.xlu0 8
      %2898 = vperm.xlu0 %2897, %v666
      %v2899 = vpop.permute.xlu0 %2898
      %2901 = vset.pattern.permute.xlu0 8
      %2902 = vperm.xlu0 %2901, %v667
      %v2903 = vpop.permute.xlu0 %2902
      %2905 = vset.pattern.permute.xlu0 8
      %2906 = vperm.xlu0 %2905, %v668
      %v2907 = vpop.permute.xlu0 %2906
      %2909 = vset.pattern.permute.xlu0 8
      %2910 = vperm.xlu0 %2909, %v669
      %v2911 = vpop.permute.xlu0 %2910
      %2913 = vset.pattern.permute.xlu0 8
      %2914 = vperm.xlu0 %2913, %v670
      %v2915 = vpop.permute.xlu0 %2914
      %2917 = vset.pattern.permute.xlu0 8
      %2918 = vperm.xlu0 %2917, %v671
      %v2919 = vpop.permute.xlu0 %2918
      %2921 = vset.pattern.permute.xlu0 8
      %2922 = vperm.xlu0 %2921, %v672
      %v2923 = vpop.permute.xlu0 %2922
      %2925 = vset.pattern.permute.xlu0 8
      %2926 = vperm.xlu0 %2925, %v673
      %v2927 = vpop.permute.xlu0 %2926
      %2929 = vset.pattern.permute.xlu0 8
      %2930 = vperm.xlu0 %2929, %v674
      %v2931 = vpop.permute.xlu0 %2930
      %2933 = vset.pattern.permute.xlu0 8
      %2934 = vperm.xlu0 %2933, %v675
      %v2935 = vpop.permute.xlu0 %2934
      %2937 = vset.pattern.permute.xlu0 8
      %2938 = vperm.xlu0 %2937, %v676
      %v2939 = vpop.permute.xlu0 %2938
      %2941 = vset.pattern.permute.xlu0 8
      %2942 = vperm.xlu0 %2941, %v677
      %v2943 = vpop.permute.xlu0 %2942
      %2945 = vset.pattern.permute.xlu0 8
      %2946 = vperm.xlu0 %2945, %v678
      %v2947 = vpop.permute.xlu0 %2946
      %2949 = vset.pattern.permute.xlu0 8
      %2950 = vperm.xlu0 %2949, %v679
      %v2951 = vpop.permute.xlu0 %2950
      %2953 = vset.pattern.permute.xlu0 8
      %2954 = vperm.xlu0 %2953, %v680
      %v2955 = vpop.permute.xlu0 %2954
      %2957 = vset.pattern.permute.xlu0 8
      %2958 = vperm.xlu0 %2957, %v681
      %v2959 = vpop.permute.xlu0 %2958
      %2961 = vset.pattern.permute.xlu0 8
      %2962 = vperm.xlu0 %2961, %v682
      %v2963 = vpop.permute.xlu0 %2962
      %v2965 = vmul.f32 %v1564, %v2855
      %v2966 = vmul.f32 %v1566, %v2859
      %v2967 = vmul.f32 %v1568, %v2863
      %v2968 = vmul.f32 %v1570, %v2867
      %v2969 = vmul.f32 %v1572, %v2871
      %v2970 = vmul.f32 %v1574, %v2875
      %v2971 = vmul.f32 %v1576, %v2879
      %v2972 = vmul.f32 %v1578, %v2883
      %v2973 = vmul.f32 %v1580, %v2887
      %v2974 = vmul.f32 %v1582, %v2891
      %v2975 = vmul.f32 %v1584, %v2895
      %v2976 = vmul.f32 %v1586, %v2899
      %v2977 = vmul.f32 %v1588, %v2903
      %v2978 = vmul.f32 %v1590, %v2907
      %v2979 = vmul.f32 %v1592, %v2911
      %v2980 = vmul.f32 %v1594, %v2915
      %v2981 = vmul.f32 %v1596, %v2919
      %v2982 = vmul.f32 %v1598, %v2923
      %v2983 = vmul.f32 %v1600, %v2927
      %v2984 = vmul.f32 %v1602, %v2931
      %v2985 = vmul.f32 %v1604, %v2935
      %v2986 = vmul.f32 %v1606, %v2939
      %v2987 = vmul.f32 %v1608, %v2943
      %v2988 = vmul.f32 %v1610, %v2947
      %v2989 = vmul.f32 %v2247, %v2951
      %v2990 = vmul.f32 %v2250, %v2955
      %v2991 = vmul.f32 %v2959, 0.0
      %v2992 = vmul.f32 %v2963, 0.0
      %v2993 = vlaneseq
      %v2994 = vshrl.u32 %v2993, 7
      %v2995 = vsub.s32 0, %v2994
      %v2996 = vrot.slane %v1050, %v2995
      %v2997 = vmul.f32 %v2965, %v2996
      %v2998 = vmul.f32 %v2966, %v2996
      %v2999 = vmul.f32 %v2967, %v2996
      %v3000 = vmul.f32 %v2968, %v2996
      %v3001 = vmul.f32 %v2969, %v2996
      %v3002 = vmul.f32 %v2970, %v2996
      %v3003 = vmul.f32 %v2971, %v2996
      %v3004 = vmul.f32 %v2972, %v2996
      %v3005 = vmul.f32 %v2973, %v2996
      %v3006 = vmul.f32 %v2974, %v2996
      %v3007 = vmul.f32 %v2975, %v2996
      %v3008 = vmul.f32 %v2976, %v2996
      %v3009 = vmul.f32 %v2977, %v2996
      %v3010 = vmul.f32 %v2978, %v2996
      %v3011 = vmul.f32 %v2979, %v2996
      %v3012 = vmul.f32 %v2980, %v2996
      %v3013 = vmul.f32 %v2981, %v2996
      %v3014 = vmul.f32 %v2982, %v2996
      %v3015 = vmul.f32 %v2983, %v2996
      %v3016 = vmul.f32 %v2984, %v2996
      %v3017 = vmul.f32 %v2985, %v2996
      %v3018 = vmul.f32 %v2986, %v2996
      %v3019 = vmul.f32 %v2987, %v2996
      %v3020 = vmul.f32 %v2988, %v2996
      %v3021 = vmul.f32 %v2989, %v2996
      %v3022 = vmul.f32 %v2990, %v2996
      %v3023 = vmul.f32 %v2991, %v2996
      %v3024 = vmul.f32 %v2992, %v2996
      %v3025 = vadd.f32 %v2825, %v2997
      %v3026 = vadd.f32 %v2826, %v2998
      %v3027 = vadd.f32 %v2827, %v2999
      %v3028 = vadd.f32 %v2828, %v3000
      %v3029 = vadd.f32 %v2829, %v3001
      %v3030 = vadd.f32 %v2830, %v3002
      %v3031 = vadd.f32 %v2831, %v3003
      %v3032 = vadd.f32 %v2832, %v3004
      %v3033 = vadd.f32 %v2833, %v3005
      %v3034 = vadd.f32 %v2834, %v3006
      %v3035 = vadd.f32 %v2835, %v3007
      %v3036 = vadd.f32 %v2836, %v3008
      %v3037 = vadd.f32 %v2837, %v3009
      %v3038 = vadd.f32 %v2838, %v3010
      %v3039 = vadd.f32 %v2839, %v3011
      %v3040 = vadd.f32 %v2840, %v3012
      %v3041 = vadd.f32 %v2841, %v3013
      %v3042 = vadd.f32 %v2842, %v3014
      %v3043 = vadd.f32 %v2843, %v3015
      %v3044 = vadd.f32 %v2844, %v3016
      %v3045 = vadd.f32 %v2845, %v3017
      %v3046 = vadd.f32 %v2846, %v3018
      %v3047 = vadd.f32 %v2847, %v3019
      %v3048 = vadd.f32 %v2848, %v3020
      %v3049 = vadd.f32 %v2849, %v3021
      %v3050 = vadd.f32 %v2850, %v3022
      %v3051 = vadd.f32 %v2851, %v3023
      %v3052 = vadd.f32 %v2852, %v3024
      %v3054 = vlaneseq
      %v3055 = vshrl.u32 %v3054, 7
      %v3056 = vsub.s32 0, %v3055
      %v3057 = vrot.slane %v1051, %v3056
      %v3059 = vadd.f32 %v3025, %v3057
      %v3060 = vadd.f32 %v3026, %v3057
      %v3061 = vadd.f32 %v3027, %v3057
      %v3062 = vadd.f32 %v3028, %v3057
      %v3063 = vadd.f32 %v3029, %v3057
      %v3064 = vadd.f32 %v3030, %v3057
      %v3065 = vadd.f32 %v3031, %v3057
      %v3066 = vadd.f32 %v3032, %v3057
      %v3067 = vadd.f32 %v3033, %v3057
      %v3068 = vadd.f32 %v3034, %v3057
      %v3069 = vadd.f32 %v3035, %v3057
      %v3070 = vadd.f32 %v3036, %v3057
      %v3071 = vadd.f32 %v3037, %v3057
      %v3072 = vadd.f32 %v3038, %v3057
      %v3073 = vadd.f32 %v3039, %v3057
      %v3074 = vadd.f32 %v3040, %v3057
      %v3075 = vadd.f32 %v3041, %v3057
      %v3076 = vadd.f32 %v3042, %v3057
      %v3077 = vadd.f32 %v3043, %v3057
      %v3078 = vadd.f32 %v3044, %v3057
      %v3079 = vadd.f32 %v3045, %v3057
      %v3080 = vadd.f32 %v3046, %v3057
      %v3081 = vadd.f32 %v3047, %v3057
      %v3082 = vadd.f32 %v3048, %v3057
      %v3083 = vadd.f32 %v3049, %v3057
      %v3084 = vadd.f32 %v3050, %v3057
      %v3085 = vadd.f32 %v3051, %v3057
      %v3086 = vadd.f32 %v3052, %v3057
      %v3087 = vmax.f32 %v3059, 0.0
      %v3088 = vmax.f32 %v3060, 0.0
      %v3089 = vmax.f32 %v3061, 0.0
      %v3090 = vmax.f32 %v3062, 0.0
      %v3091 = vmax.f32 %v3063, 0.0
      %v3092 = vmax.f32 %v3064, 0.0
      %v3093 = vmax.f32 %v3065, 0.0
      %v3094 = vmax.f32 %v3066, 0.0
      %v3095 = vmax.f32 %v3067, 0.0
      %v3096 = vmax.f32 %v3068, 0.0
      %v3097 = vmax.f32 %v3069, 0.0
      %v3098 = vmax.f32 %v3070, 0.0
      %v3099 = vmax.f32 %v3071, 0.0
      %v3100 = vmax.f32 %v3072, 0.0
      %v3101 = vmax.f32 %v3073, 0.0
      %v3102 = vmax.f32 %v3074, 0.0
      %v3103 = vmax.f32 %v3075, 0.0
      %v3104 = vmax.f32 %v3076, 0.0
      %v3105 = vmax.f32 %v3077, 0.0
      %v3106 = vmax.f32 %v3078, 0.0
      %v3107 = vmax.f32 %v3079, 0.0
      %v3108 = vmax.f32 %v3080, 0.0
      %v3109 = vmax.f32 %v3081, 0.0
      %v3110 = vmax.f32 %v3082, 0.0
      %v3111 = vmax.f32 %v3083, 0.0
      %v3112 = vmax.f32 %v3084, 0.0
      %v3113 = vmax.f32 %v3085, 0.0
      %v3114 = vmax.f32 %v3086, 0.0
      %v3115 = vld [vmem:[%s9] sm:$0xff]
      %v3116 = vld [vmem:[%s9 + $0x8] sm:$0xff]
      %v3117 = vld [vmem:[%s9 + $0x10] sm:$0xff]
      %v3118 = vld [vmem:[%s9 + $0x18] sm:$0xff]
      %v3119 = vld [vmem:[%s9 + $0x20] sm:$0xff]
      %v3120 = vld [vmem:[%s9 + $0x28] sm:$0xff]
      %v3121 = vld [vmem:[%s9 + $0x30] sm:$0xff]
      %v3122 = vld [vmem:[%s9 + $0x38] sm:$0xff]
      %v3123 = vld [vmem:[%s9 + $0x40] sm:$0xff]
      %v3124 = vld [vmem:[%s9 + $0x48] sm:$0xff]
      %v3125 = vld [vmem:[%s9 + $0x50] sm:$0xff]
      %v3126 = vld [vmem:[%s9 + $0x58] sm:$0xff]
      %v3127 = vld [vmem:[%s9 + $0x60] sm:$0xff]
      %v3128 = vld [vmem:[%s9 + $0x68] sm:$0xff]
      %v3129 = vld [vmem:[%s9 + $0x70] sm:$0xff]
      %v3130 = vld [vmem:[%s9 + $0x78] sm:$0xff]
      %v3131 = vld [vmem:[%s10] sm:$0x1]
      %v3133 = vlaneseq
      %v3134 = vshrl.u32 %v3133, 7
      %v3135 = vsub.s32 0, %v3134
      %v3136 = vrot.slane %v3131, %v3135
      %3138 = vmatprep.subr.mxu0 0.0
      %3139 = vmatpush1.msra.mxu0 %v3115
      %3140 = vmatprep.subr.mxu0 0.0
      %3141 = vmatpush1.msra.mxu0 %v3116
      %3142 = vmatprep.subr.mxu0 0.0
      %3143 = vmatpush1.msra.mxu0 %v3117
      %3144 = vmatprep.subr.mxu0 0.0
      %3145 = vmatpush1.msra.mxu0 %v3118
      %3146 = vmatprep.subr.mxu0 0.0
      %3147 = vmatpush1.msra.mxu0 %v3119
      %3148 = vmatprep.subr.mxu0 0.0
      %3149 = vmatpush1.msra.mxu0 %v3120
      %3150 = vmatprep.subr.mxu0 0.0
      %3151 = vmatpush1.msra.mxu0 %v3121
      %3152 = vmatprep.subr.mxu0 0.0
      %3153 = vmatpush1.msra.mxu0 %v3122
      %3154 = vmatprep.subr.mxu0 0.0
      %3155 = vmatpush1.msra.mxu0 %v3123
      %3156 = vmatprep.subr.mxu0 0.0
      %3157 = vmatpush1.msra.mxu0 %v3124
      %3158 = vmatprep.subr.mxu0 0.0
      %3159 = vmatpush1.msra.mxu0 %v3125
      %3160 = vmatprep.subr.mxu0 0.0
      %3161 = vmatpush1.msra.mxu0 %v3126
      %3162 = vmatprep.subr.mxu0 0.0
      %3163 = vmatpush1.msra.mxu0 %v3127
      %3164 = vmatprep.subr.mxu0 0.0
      %3165 = vmatpush1.msra.mxu0 %v3128
      %3166 = vmatprep.subr.mxu0 0.0
      %3167 = vmatpush1.msra.mxu0 %v3129
      %3168 = vmatprep.subr.mxu0 0.0
      %3169 = vmatpush1.msra.mxu0 %v3130
      %3170 = vmatprep.subr.mxu0 0.0
      %3171 = vmatpush1.msra.mxu0 0.0
      %3172 = vmatprep.subr.mxu0 0.0
      %3173 = vmatpush1.msra.mxu0 0.0
      %3174 = vmatprep.subr.mxu0 0.0
      %3175 = vmatpush1.msra.mxu0 0.0
      %3176 = vmatprep.subr.mxu0 0.0
      %3177 = vmatpush1.msra.mxu0 0.0
      %3178 = vmatprep.subr.mxu0 0.0
      %3179 = vmatpush1.msra.mxu0 0.0
      %3180 = vmatprep.subr.mxu0 0.0
      %3181 = vmatpush1.msra.mxu0 0.0
      %3182 = vmatprep.subr.mxu0 0.0
      %3183 = vmatpush1.msra.mxu0 0.0
      %3184 = vmatprep.subr.mxu0 0.0
      %3185 = vmatpush1.msra.mxu0 0.0
      %3186 = vmatprep.subr.mxu0 0.0
      %3187 = vmatpush1.msra.mxu0 0.0
      %3188 = vmatprep.subr.mxu0 0.0
      %3189 = vmatpush1.msra.mxu0 0.0
      %3190 = vmatprep.subr.mxu0 0.0
      %3191 = vmatpush1.msra.mxu0 0.0
      %3192 = vmatprep.subr.mxu0 0.0
      %3193 = vmatpush1.msra.mxu0 0.0
      %3194 = vmatprep.subr.mxu0 0.0
      %3195 = vmatpush1.msra.mxu0 0.0
      %3196 = vmatprep.subr.mxu0 0.0
      %3197 = vmatpush1.msra.mxu0 0.0
      %3198 = vmatprep.subr.mxu0 0.0
      %3199 = vmatpush1.msra.mxu0 0.0
      %3200 = vmatprep.subr.mxu0 0.0
      %3201 = vmatpush1.msra.mxu0 0.0
      %3202 = vmatprep.mubr.f32.mxu0 0.0
      %3203 = vmatmul.mubr.f32.gmra.mrb[0].mxu0 %v3087
      %v3204 = vpop.f32.mrb[0].mxu0
      %v3205 = vadd.f32 %v3136, %v3204
      %v3206 = vpop.f32.mrb[0].mxu0
      %3207 = vmatprep.mubr.f32.mxu0 0.0
      %3208 = vmatmul.mubr.f32.gmra.mrb[0].mxu0 %v3088
      %v3209 = vpop.f32.mrb[0].mxu0
      %v3210 = vadd.f32 %v3136, %v3209
      %v3211 = vpop.f32.mrb[0].mxu0
      %3212 = vmatprep.mubr.f32.mxu0 0.0
      %3213 = vmatmul.mubr.f32.gmra.mrb[0].mxu0 %v3089
      %v3214 = vpop.f32.mrb[0].mxu0
      %v3215 = vadd.f32 %v3136, %v3214
      %v3216 = vpop.f32.mrb[0].mxu0
      %3217 = vmatprep.mubr.f32.mxu0 0.0
      %3218 = vmatmul.mubr.f32.gmra.mrb[0].mxu0 %v3090
      %v3219 = vpop.f32.mrb[0].mxu0
      %v3220 = vadd.f32 %v3136, %v3219
      %v3221 = vpop.f32.mrb[0].mxu0
      %3222 = vmatprep.mubr.f32.mxu0 0.0
      %3223 = vmatmul.mubr.f32.gmra.mrb[0].mxu0 %v3091
      %v3224 = vpop.f32.mrb[0].mxu0
      %v3225 = vadd.f32 %v3136, %v3224
      %v3226 = vpop.f32.mrb[0].mxu0
      %3227 = vmatprep.mubr.f32.mxu0 0.0
      %3228 = vmatmul.mubr.f32.gmra.mrb[0].mxu0 %v3092
      %v3229 = vpop.f32.mrb[0].mxu0
      %v3230 = vadd.f32 %v3136, %v3229
      %v3231 = vpop.f32.mrb[0].mxu0
      %3232 = vmatprep.mubr.f32.mxu0 0.0
      %3233 = vmatmul.mubr.f32.gmra.mrb[0].mxu0 %v3093
      %v3234 = vpop.f32.mrb[0].mxu0
      %v3235 = vadd.f32 %v3136, %v3234
      %v3236 = vpop.f32.mrb[0].mxu0
      %3237 = vmatprep.mubr.f32.mxu0 0.0
      %3238 = vmatmul.mubr.f32.gmra.mrb[0].mxu0 %v3094
      %v3239 = vpop.f32.mrb[0].mxu0
      %v3240 = vadd.f32 %v3136, %v3239
      %v3241 = vpop.f32.mrb[0].mxu0
      %3242 = vmatprep.mubr.f32.mxu0 0.0
      %3243 = vmatmul.mubr.f32.gmra.mrb[0].mxu0 %v3095
      %v3244 = vpop.f32.mrb[0].mxu0
      %v3245 = vadd.f32 %v3136, %v3244
      %v3246 = vpop.f32.mrb[0].mxu0
      %3247 = vmatprep.mubr.f32.mxu0 0.0
      %3248 = vmatmul.mubr.f32.gmra.mrb[0].mxu0 %v3096
      %v3249 = vpop.f32.mrb[0].mxu0
      %v3250 = vadd.f32 %v3136, %v3249
      %v3251 = vpop.f32.mrb[0].mxu0
      %3252 = vmatprep.mubr.f32.mxu0 0.0
      %3253 = vmatmul.mubr.f32.gmra.mrb[0].mxu0 %v3097
      %v3254 = vpop.f32.mrb[0].mxu0
      %v3255 = vadd.f32 %v3136, %v3254
      %v3256 = vpop.f32.mrb[0].mxu0
      %3257 = vmatprep.mubr.f32.mxu0 0.0
      %3258 = vmatmul.mubr.f32.gmra.mrb[0].mxu0 %v3098
      %v3259 = vpop.f32.mrb[0].mxu0
      %v3260 = vadd.f32 %v3136, %v3259
      %v3261 = vpop.f32.mrb[0].mxu0
      %3262 = vmatprep.mubr.f32.mxu0 0.0
      %3263 = vmatmul.mubr.f32.gmra.mrb[0].mxu0 %v3099
      %v3264 = vpop.f32.mrb[0].mxu0
      %v3265 = vadd.f32 %v3136, %v3264
      %v3266 = vpop.f32.mrb[0].mxu0
      %3267 = vmatprep.mubr.f32.mxu0 0.0
      %3268 = vmatmul.mubr.f32.gmra.mrb[0].mxu0 %v3100
      %v3269 = vpop.f32.mrb[0].mxu0
      %v3270 = vadd.f32 %v3136, %v3269
      %v3271 = vpop.f32.mrb[0].mxu0
      %3272 = vmatprep.mubr.f32.mxu0 0.0
      %3273 = vmatmul.mubr.f32.gmra.mrb[0].mxu0 %v3101
      %v3274 = vpop.f32.mrb[0].mxu0
      %v3275 = vadd.f32 %v3136, %v3274
      %v3276 = vpop.f32.mrb[0].mxu0
      %3277 = vmatprep.mubr.f32.mxu0 0.0
      %3278 = vmatmul.mubr.f32.gmra.mrb[0].mxu0 %v3102
      %v3279 = vpop.f32.mrb[0].mxu0
      %v3280 = vadd.f32 %v3136, %v3279
      %v3281 = vpop.f32.mrb[0].mxu0
      %3282 = vmatprep.mubr.f32.mxu0 0.0
      %3283 = vmatmul.mubr.f32.gmra.mrb[0].mxu0 %v3103
      %v3284 = vpop.f32.mrb[0].mxu0
      %v3285 = vadd.f32 %v3136, %v3284
      %v3286 = vpop.f32.mrb[0].mxu0
      %3287 = vmatprep.mubr.f32.mxu0 0.0
      %3288 = vmatmul.mubr.f32.gmra.mrb[0].mxu0 %v3104
      %v3289 = vpop.f32.mrb[0].mxu0
      %v3290 = vadd.f32 %v3136, %v3289
      %v3291 = vpop.f32.mrb[0].mxu0
      %3292 = vmatprep.mubr.f32.mxu0 0.0
      %3293 = vmatmul.mubr.f32.gmra.mrb[0].mxu0 %v3105
      %v3294 = vpop.f32.mrb[0].mxu0
      %v3295 = vadd.f32 %v3136, %v3294
      %v3296 = vpop.f32.mrb[0].mxu0
      %3297 = vmatprep.mubr.f32.mxu0 0.0
      %3298 = vmatmul.mubr.f32.gmra.mrb[0].mxu0 %v3106
      %v3299 = vpop.f32.mrb[0].mxu0
      %v3300 = vadd.f32 %v3136, %v3299
      %v3301 = vpop.f32.mrb[0].mxu0
      %3302 = vmatprep.mubr.f32.mxu0 0.0
      %3303 = vmatmul.mubr.f32.gmra.mrb[0].mxu0 %v3107
      %v3304 = vpop.f32.mrb[0].mxu0
      %v3305 = vadd.f32 %v3136, %v3304
      %v3306 = vpop.f32.mrb[0].mxu0
      %3307 = vmatprep.mubr.f32.mxu0 0.0
      %3308 = vmatmul.mubr.f32.gmra.mrb[0].mxu0 %v3108
      %v3309 = vpop.f32.mrb[0].mxu0
      %v3310 = vadd.f32 %v3136, %v3309
      %v3311 = vpop.f32.mrb[0].mxu0
      %3312 = vmatprep.mubr.f32.mxu0 0.0
      %3313 = vmatmul.mubr.f32.gmra.mrb[0].mxu0 %v3109
      %v3314 = vpop.f32.mrb[0].mxu0
      %v3315 = vadd.f32 %v3136, %v3314
      %v3316 = vpop.f32.mrb[0].mxu0
      %3317 = vmatprep.mubr.f32.mxu0 0.0
      %3318 = vmatmul.mubr.f32.gmra.mrb[0].mxu0 %v3110
      %v3319 = vpop.f32.mrb[0].mxu0
      %v3320 = vadd.f32 %v3136, %v3319
      %v3321 = vpop.f32.mrb[0].mxu0
      %3322 = vmatprep.mubr.f32.mxu0 0.0
      %3323 = vmatmul.mubr.f32.gmra.mrb[0].mxu0 %v3111
      %v3324 = vpop.f32.mrb[0].mxu0
      %v3325 = vadd.f32 %v3136, %v3324
      %v3326 = vpop.f32.mrb[0].mxu0
      %3327 = vmatprep.mubr.f32.mxu0 0.0
      %3328 = vmatmul.mubr.f32.gmra.mrb[0].mxu0 %v3112
      %v3329 = vpop.f32.mrb[0].mxu0
      %v3330 = vadd.f32 %v3136, %v3329
      %v3331 = vpop.f32.mrb[0].mxu0
      %3332 = vmatprep.mubr.f32.mxu0 0.0
      %3333 = vmatmul.mubr.f32.gmra.mrb[0].mxu0 %v3113
      %v3334 = vpop.f32.mrb[0].mxu0
      %v3335 = vadd.f32 %v3136, %v3334
      %v3336 = vpop.f32.mrb[0].mxu0
      %3337 = vmatprep.mubr.f32.mxu0 0.0
      %3338 = vmatmul.mubr.f32.gmra.mrb[0].mxu0 %v3114
      %v3339 = vpop.f32.mrb[0].mxu0
      %v3340 = vadd.f32 %v3136, %v3339
      %v3341 = vpop.f32.mrb[0].mxu0
      %3342 = vdwg.mxu0
      %v3343 = vmax.f32 %v3205, 0.0
      %v3344 = vmax.f32 %v3210, 0.0
      %v3345 = vmax.f32 %v3215, 0.0
      %v3346 = vmax.f32 %v3220, 0.0
      %v3347 = vmax.f32 %v3225, 0.0
      %v3348 = vmax.f32 %v3230, 0.0
      %v3349 = vmax.f32 %v3235, 0.0
      %v3350 = vmax.f32 %v3240, 0.0
      %v3351 = vmax.f32 %v3245, 0.0
      %v3352 = vmax.f32 %v3250, 0.0
      %v3353 = vmax.f32 %v3255, 0.0
      %v3354 = vmax.f32 %v3260, 0.0
      %v3355 = vmax.f32 %v3265, 0.0
      %v3356 = vmax.f32 %v3270, 0.0
      %v3357 = vmax.f32 %v3275, 0.0
      %v3358 = vmax.f32 %v3280, 0.0
      %v3359 = vmax.f32 %v3285, 0.0
      %v3360 = vmax.f32 %v3290, 0.0
      %v3361 = vmax.f32 %v3295, 0.0
      %v3362 = vmax.f32 %v3300, 0.0
      %v3363 = vmax.f32 %v3305, 0.0
      %v3364 = vmax.f32 %v3310, 0.0
      %v3365 = vmax.f32 %v3315, 0.0
      %v3366 = vmax.f32 %v3320, 0.0
      %v3367 = vmax.f32 %v3325, 0.0
      %v3368 = vmax.f32 %v3330, 0.0
      %v3369 = vmax.f32 %v3335, 0.0
      %v3370 = vmax.f32 %v3340, 0.0
      %v3371 = vld [vmem:[%s11] sm:$0xff]
      %v3372 = vld [vmem:[%s11 + $0x8] sm:$0x1]
      %v3373 = vld [vmem:[%s12] sm:$0x1]
      %v3400 = vrot.slane %v3343, 7
      %v3401 = vrot.slane %v3344, 7
      %v3402 = vsel %vm812, %v3400, %v3401
      %v3403 = vrot.slane %v3345, 7
      %v3404 = vsel %vm812, %v3401, %v3403
      %v3405 = vrot.slane %v3346, 7
      %v3406 = vsel %vm812, %v3403, %v3405
      %v3407 = vrot.slane %v3347, 7
      %v3408 = vsel %vm812, %v3405, %v3407
      %v3409 = vrot.slane %v3348, 7
      %v3410 = vsel %vm812, %v3407, %v3409
      %v3411 = vrot.slane %v3349, 7
      %v3412 = vsel %vm812, %v3409, %v3411
      %v3413 = vrot.slane %v3350, 7
      %v3414 = vsel %vm812, %v3411, %v3413
      %v3415 = vrot.slane %v3351, 7
      %v3416 = vsel %vm812, %v3413, %v3415
      %v3417 = vrot.slane %v3352, 7
      %v3418 = vsel %vm812, %v3415, %v3417
      %v3419 = vrot.slane %v3353, 7
      %v3420 = vsel %vm812, %v3417, %v3419
      %v3421 = vrot.slane %v3354, 7
      %v3422 = vsel %vm812, %v3419, %v3421
      %v3423 = vrot.slane %v3355, 7
      %v3424 = vsel %vm812, %v3421, %v3423
      %v3425 = vrot.slane %v3356, 7
      %v3426 = vsel %vm812, %v3423, %v3425
      %v3427 = vrot.slane %v3357, 7
      %v3428 = vsel %vm812, %v3425, %v3427
      %v3429 = vrot.slane %v3358, 7
      %v3430 = vsel %vm812, %v3427, %v3429
      %v3431 = vrot.slane %v3359, 7
      %v3432 = vsel %vm812, %v3429, %v3431
      %v3433 = vrot.slane %v3360, 7
      %v3434 = vsel %vm812, %v3431, %v3433
      %v3435 = vrot.slane %v3361, 7
      %v3436 = vsel %vm812, %v3433, %v3435
      %v3437 = vrot.slane %v3362, 7
      %v3438 = vsel %vm812, %v3435, %v3437
      %v3439 = vrot.slane %v3363, 7
      %v3440 = vsel %vm812, %v3437, %v3439
      %v3441 = vrot.slane %v3364, 7
      %v3442 = vsel %vm812, %v3439, %v3441
      %v3443 = vrot.slane %v3365, 7
      %v3444 = vsel %vm812, %v3441, %v3443
      %v3445 = vrot.slane %v3366, 7
      %v3446 = vsel %vm812, %v3443, %v3445
      %v3447 = vrot.slane %v3367, 7
      %v3448 = vsel %vm812, %v3445, %v3447
      %v3449 = vrot.slane %v3368, 7
      %v3450 = vsel %vm812, %v3447, %v3449
      %v3477 = vsel %vm812, 0.0, %v3400
      %v3478 = vmul.f32 %v3477, %v1169
      %v3479 = vmul.f32 %v3402, %v1174
      %v3480 = vmul.f32 %v3404, %v1179
      %v3481 = vmul.f32 %v3406, %v1184
      %v3482 = vmul.f32 %v3408, %v1189
      %v3483 = vmul.f32 %v3410, %v1194
      %v3484 = vmul.f32 %v3412, %v1199
      %v3485 = vmul.f32 %v3414, %v1204
      %v3486 = vmul.f32 %v3416, %v1209
      %v3487 = vmul.f32 %v3418, %v1214
      %v3488 = vmul.f32 %v3420, %v1219
      %v3489 = vmul.f32 %v3422, %v1224
      %v3490 = vmul.f32 %v3424, %v1229
      %v3491 = vmul.f32 %v3426, %v1234
      %v3492 = vmul.f32 %v3428, %v1239
      %v3493 = vmul.f32 %v3430, %v1244
      %v3494 = vmul.f32 %v3432, %v1249
      %v3495 = vmul.f32 %v3434, %v1254
      %v3496 = vmul.f32 %v3436, %v1259
      %v3497 = vmul.f32 %v3438, %v1264
      %v3498 = vmul.f32 %v3440, %v1269
      %v3499 = vmul.f32 %v3442, %v1274
      %v3500 = vmul.f32 %v3444, %v1279
      %v3501 = vmul.f32 %v3446, %v1284
      %v3502 = vmul.f32 %v3448, %v1289
      %v3503 = vmul.f32 %v3450, %v1294
      %v3504 = vlaneseq
      %v3505 = vshrl.u32 %v3504, 7
      %v3506 = vsub.s32 0, %v3505
      %v3507 = vrot.slane %v3371, %v3506
      %v3508 = vmul.f32 %v1296, %v3507
      %v3509 = vmul.f32 %v1297, %v3507
      %v3510 = vmul.f32 %v3478, %v3507
      %v3511 = vmul.f32 %v3479, %v3507
      %v3512 = vmul.f32 %v3480, %v3507
      %v3513 = vmul.f32 %v3481, %v3507
      %v3514 = vmul.f32 %v3482, %v3507
      %v3515 = vmul.f32 %v3483, %v3507
      %v3516 = vmul.f32 %v3484, %v3507
      %v3517 = vmul.f32 %v3485, %v3507
      %v3518 = vmul.f32 %v3486, %v3507
      %v3519 = vmul.f32 %v3487, %v3507
      %v3520 = vmul.f32 %v3488, %v3507
      %v3521 = vmul.f32 %v3489, %v3507
      %v3522 = vmul.f32 %v3490, %v3507
      %v3523 = vmul.f32 %v3491, %v3507
      %v3524 = vmul.f32 %v3492, %v3507
      %v3525 = vmul.f32 %v3493, %v3507
      %v3526 = vmul.f32 %v3494, %v3507
      %v3527 = vmul.f32 %v3495, %v3507
      %v3528 = vmul.f32 %v3496, %v3507
      %v3529 = vmul.f32 %v3497, %v3507
      %v3530 = vmul.f32 %v3498, %v3507
      %v3531 = vmul.f32 %v3499, %v3507
      %v3532 = vmul.f32 %v3500, %v3507
      %v3533 = vmul.f32 %v3501, %v3507
      %v3534 = vmul.f32 %v3502, %v3507
      %v3535 = vmul.f32 %v3503, %v3507
      %v3536 = vmul.f32 %v3343, %v1366
      %v3537 = vmul.f32 %v3344, %v1370
      %v3538 = vmul.f32 %v3345, %v1374
      %v3539 = vmul.f32 %v3346, %v1378
      %v3540 = vmul.f32 %v3347, %v1382
      %v3541 = vmul.f32 %v3348, %v1386
      %v3542 = vmul.f32 %v3349, %v1390
      %v3543 = vmul.f32 %v3350, %v1394
      %v3544 = vmul.f32 %v3351, %v1398
      %v3545 = vmul.f32 %v3352, %v1402
      %v3546 = vmul.f32 %v3353, %v1406
      %v3547 = vmul.f32 %v3354, %v1410
      %v3548 = vmul.f32 %v3355, %v1414
      %v3549 = vmul.f32 %v3356, %v1418
      %v3550 = vmul.f32 %v3357, %v1422
      %v3551 = vmul.f32 %v3358, %v1426
      %v3552 = vmul.f32 %v3359, %v1430
      %v3553 = vmul.f32 %v3360, %v1434
      %v3554 = vmul.f32 %v3361, %v1438
      %v3555 = vmul.f32 %v3362, %v1442
      %v3556 = vmul.f32 %v3363, %v1446
      %v3557 = vmul.f32 %v3364, %v1450
      %v3558 = vmul.f32 %v3365, %v1454
      %v3559 = vmul.f32 %v3366, %v1458
      %v3560 = vmul.f32 %v3367, %v1462
      %v3561 = vmul.f32 %v3368, %v1466
      %v3562 = vlaneseq
      %v3563 = vshrl.u32 %v3562, 7
      %v3564 = vsub.s32 1, %v3563
      %v3565 = vrot.slane %v3371, %v3564
      %v3566 = vmul.f32 %v1468, %v3565
      %v3567 = vmul.f32 %v1469, %v3565
      %v3568 = vmul.f32 %v3536, %v3565
      %v3569 = vmul.f32 %v3537, %v3565
      %v3570 = vmul.f32 %v3538, %v3565
      %v3571 = vmul.f32 %v3539, %v3565
      %v3572 = vmul.f32 %v3540, %v3565
      %v3573 = vmul.f32 %v3541, %v3565
      %v3574 = vmul.f32 %v3542, %v3565
      %v3575 = vmul.f32 %v3543, %v3565
      %v3576 = vmul.f32 %v3544, %v3565
      %v3577 = vmul.f32 %v3545, %v3565
      %v3578 = vmul.f32 %v3546, %v3565
      %v3579 = vmul.f32 %v3547, %v3565
      %v3580 = vmul.f32 %v3548, %v3565
      %v3581 = vmul.f32 %v3549, %v3565
      %v3582 = vmul.f32 %v3550, %v3565
      %v3583 = vmul.f32 %v3551, %v3565
      %v3584 = vmul.f32 %v3552, %v3565
      %v3585 = vmul.f32 %v3553, %v3565
      %v3586 = vmul.f32 %v3554, %v3565
      %v3587 = vmul.f32 %v3555, %v3565
      %v3588 = vmul.f32 %v3556, %v3565
      %v3589 = vmul.f32 %v3557, %v3565
      %v3590 = vmul.f32 %v3558, %v3565
      %v3591 = vmul.f32 %v3559, %v3565
      %v3592 = vmul.f32 %v3560, %v3565
      %v3593 = vmul.f32 %v3561, %v3565
      %v3594 = vadd.f32 %v3508, %v3566
      %v3595 = vadd.f32 %v3509, %v3567
      %v3596 = vadd.f32 %v3510, %v3568
      %v3597 = vadd.f32 %v3511, %v3569
      %v3598 = vadd.f32 %v3512, %v3570
      %v3599 = vadd.f32 %v3513, %v3571
      %v3600 = vadd.f32 %v3514, %v3572
      %v3601 = vadd.f32 %v3515, %v3573
      %v3602 = vadd.f32 %v3516, %v3574
      %v3603 = vadd.f32 %v3517, %v3575
      %v3604 = vadd.f32 %v3518, %v3576
      %v3605 = vadd.f32 %v3519, %v3577
      %v3606 = vadd.f32 %v3520, %v3578
      %v3607 = vadd.f32 %v3521, %v3579
      %v3608 = vadd.f32 %v3522, %v3580
      %v3609 = vadd.f32 %v3523, %v3581
      %v3610 = vadd.f32 %v3524, %v3582
      %v3611 = vadd.f32 %v3525, %v3583
      %v3612 = vadd.f32 %v3526, %v3584
      %v3613 = vadd.f32 %v3527, %v3585
      %v3614 = vadd.f32 %v3528, %v3586
      %v3615 = vadd.f32 %v3529, %v3587
      %v3616 = vadd.f32 %v3530, %v3588
      %v3617 = vadd.f32 %v3531, %v3589
      %v3618 = vadd.f32 %v3532, %v3590
      %v3619 = vadd.f32 %v3533, %v3591
      %v3620 = vadd.f32 %v3534, %v3592
      %v3621 = vadd.f32 %v3535, %v3593
      %v3623 = vrot.slane %v3343, 1
      %v3624 = vrot.slane %v3344, 1
      %v3625 = vsel %vm1557, %v3623, %v3624
      %v3626 = vrot.slane %v3345, 1
      %v3627 = vsel %vm1557, %v3624, %v3626
      %v3628 = vrot.slane %v3346, 1
      %v3629 = vsel %vm1557, %v3626, %v3628
      %v3630 = vrot.slane %v3347, 1
      %v3631 = vsel %vm1557, %v3628, %v3630
      %v3632 = vrot.slane %v3348, 1
      %v3633 = vsel %vm1557, %v3630, %v3632
      %v3634 = vrot.slane %v3349, 1
      %v3635 = vsel %vm1557, %v3632, %v3634
      %v3636 = vrot.slane %v3350, 1
      %v3637 = vsel %vm1557, %v3634, %v3636
      %v3638 = vrot.slane %v3351, 1
      %v3639 = vsel %vm1557, %v3636, %v3638
      %v3640 = vrot.slane %v3352, 1
      %v3641 = vsel %vm1557, %v3638, %v3640
      %v3642 = vrot.slane %v3353, 1
      %v3643 = vsel %vm1557, %v3640, %v3642
      %v3644 = vrot.slane %v3354, 1
      %v3645 = vsel %vm1557, %v3642, %v3644
      %v3646 = vrot.slane %v3355, 1
      %v3647 = vsel %vm1557, %v3644, %v3646
      %v3648 = vrot.slane %v3356, 1
      %v3649 = vsel %vm1557, %v3646, %v3648
      %v3650 = vrot.slane %v3357, 1
      %v3651 = vsel %vm1557, %v3648, %v3650
      %v3652 = vrot.slane %v3358, 1
      %v3653 = vsel %vm1557, %v3650, %v3652
      %v3654 = vrot.slane %v3359, 1
      %v3655 = vsel %vm1557, %v3652, %v3654
      %v3656 = vrot.slane %v3360, 1
      %v3657 = vsel %vm1557, %v3654, %v3656
      %v3658 = vrot.slane %v3361, 1
      %v3659 = vsel %vm1557, %v3656, %v3658
      %v3660 = vrot.slane %v3362, 1
      %v3661 = vsel %vm1557, %v3658, %v3660
      %v3662 = vrot.slane %v3363, 1
      %v3663 = vsel %vm1557, %v3660, %v3662
      %v3664 = vrot.slane %v3364, 1
      %v3665 = vsel %vm1557, %v3662, %v3664
      %v3666 = vrot.slane %v3365, 1
      %v3667 = vsel %vm1557, %v3664, %v3666
      %v3668 = vrot.slane %v3366, 1
      %v3669 = vsel %vm1557, %v3666, %v3668
      %v3670 = vrot.slane %v3367, 1
      %v3671 = vsel %vm1557, %v3668, %v3670
      %v3672 = vrot.slane %v3368, 1
      %v3673 = vsel %vm1557, %v3670, %v3672
      %v3674 = vrot.slane %v3369, 1
      %v3675 = vsel %vm1557, %v3672, %v3674
      %v3703 = vsel %vm1557, 0.0, %v3623
      %v3704 = vmul.f32 %v3703, %v1645
      %v3705 = vmul.f32 %v3625, %v1649
      %v3706 = vmul.f32 %v3627, %v1653
      %v3707 = vmul.f32 %v3629, %v1657
      %v3708 = vmul.f32 %v3631, %v1661
      %v3709 = vmul.f32 %v3633, %v1665
      %v3710 = vmul.f32 %v3635, %v1669
      %v3711 = vmul.f32 %v3637, %v1673
      %v3712 = vmul.f32 %v3639, %v1677
      %v3713 = vmul.f32 %v3641, %v1681
      %v3714 = vmul.f32 %v3643, %v1685
      %v3715 = vmul.f32 %v3645, %v1689
      %v3716 = vmul.f32 %v3647, %v1693
      %v3717 = vmul.f32 %v3649, %v1697
      %v3718 = vmul.f32 %v3651, %v1701
      %v3719 = vmul.f32 %v3653, %v1705
      %v3720 = vmul.f32 %v3655, %v1709
      %v3721 = vmul.f32 %v3657, %v1713
      %v3722 = vmul.f32 %v3659, %v1717
      %v3723 = vmul.f32 %v3661, %v1721
      %v3724 = vmul.f32 %v3663, %v1725
      %v3725 = vmul.f32 %v3665, %v1729
      %v3726 = vmul.f32 %v3667, %v1733
      %v3727 = vmul.f32 %v3669, %v1737
      %v3728 = vmul.f32 %v3671, %v1741
      %v3729 = vmul.f32 %v3673, %v1745
      %v3730 = vmul.f32 %v3675, %v1749
      %v3731 = vlaneseq
      %v3732 = vshrl.u32 %v3731, 7
      %v3733 = vsub.s32 2, %v3732
      %v3734 = vrot.slane %v3371, %v3733
      %v3735 = vmul.f32 %v1751, %v3734
      %v3736 = vmul.f32 %v3704, %v3734
      %v3737 = vmul.f32 %v3705, %v3734
      %v3738 = vmul.f32 %v3706, %v3734
      %v3739 = vmul.f32 %v3707, %v3734
      %v3740 = vmul.f32 %v3708, %v3734
      %v3741 = vmul.f32 %v3709, %v3734
      %v3742 = vmul.f32 %v3710, %v3734
      %v3743 = vmul.f32 %v3711, %v3734
      %v3744 = vmul.f32 %v3712, %v3734
      %v3745 = vmul.f32 %v3713, %v3734
      %v3746 = vmul.f32 %v3714, %v3734
      %v3747 = vmul.f32 %v3715, %v3734
      %v3748 = vmul.f32 %v3716, %v3734
      %v3749 = vmul.f32 %v3717, %v3734
      %v3750 = vmul.f32 %v3718, %v3734
      %v3751 = vmul.f32 %v3719, %v3734
      %v3752 = vmul.f32 %v3720, %v3734
      %v3753 = vmul.f32 %v3721, %v3734
      %v3754 = vmul.f32 %v3722, %v3734
      %v3755 = vmul.f32 %v3723, %v3734
      %v3756 = vmul.f32 %v3724, %v3734
      %v3757 = vmul.f32 %v3725, %v3734
      %v3758 = vmul.f32 %v3726, %v3734
      %v3759 = vmul.f32 %v3727, %v3734
      %v3760 = vmul.f32 %v3728, %v3734
      %v3761 = vmul.f32 %v3729, %v3734
      %v3762 = vmul.f32 %v3730, %v3734
      %v3763 = vadd.f32 %v3594, %v3735
      %v3764 = vadd.f32 %v3595, %v3736
      %v3765 = vadd.f32 %v3596, %v3737
      %v3766 = vadd.f32 %v3597, %v3738
      %v3767 = vadd.f32 %v3598, %v3739
      %v3768 = vadd.f32 %v3599, %v3740
      %v3769 = vadd.f32 %v3600, %v3741
      %v3770 = vadd.f32 %v3601, %v3742
      %v3771 = vadd.f32 %v3602, %v3743
      %v3772 = vadd.f32 %v3603, %v3744
      %v3773 = vadd.f32 %v3604, %v3745
      %v3774 = vadd.f32 %v3605, %v3746
      %v3775 = vadd.f32 %v3606, %v3747
      %v3776 = vadd.f32 %v3607, %v3748
      %v3777 = vadd.f32 %v3608, %v3749
      %v3778 = vadd.f32 %v3609, %v3750
      %v3779 = vadd.f32 %v3610, %v3751
      %v3780 = vadd.f32 %v3611, %v3752
      %v3781 = vadd.f32 %v3612, %v3753
      %v3782 = vadd.f32 %v3613, %v3754
      %v3783 = vadd.f32 %v3614, %v3755
      %v3784 = vadd.f32 %v3615, %v3756
      %v3785 = vadd.f32 %v3616, %v3757
      %v3786 = vadd.f32 %v3617, %v3758
      %v3787 = vadd.f32 %v3618, %v3759
      %v3788 = vadd.f32 %v3619, %v3760
      %v3789 = vadd.f32 %v3620, %v3761
      %v3790 = vadd.f32 %v3621, %v3762
      %v3792 = vrot.slane %v3369, 7
      %v3793 = vsel %vm812, %v3449, %v3792
      %v3794 = vrot.slane %v3370, 7
      %v3795 = vsel %vm812, %v3792, %v3794
      %v3798 = vmul.f32 %v3477, %v1848
      %v3799 = vmul.f32 %v3402, %v1852
      %v3800 = vmul.f32 %v3404, %v1856
      %v3801 = vmul.f32 %v3406, %v1860
      %v3802 = vmul.f32 %v3408, %v1864
      %v3803 = vmul.f32 %v3410, %v1868
      %v3804 = vmul.f32 %v3412, %v1872
      %v3805 = vmul.f32 %v3414, %v1876
      %v3806 = vmul.f32 %v3416, %v1880
      %v3807 = vmul.f32 %v3418, %v1884
      %v3808 = vmul.f32 %v3420, %v1888
      %v3809 = vmul.f32 %v3422, %v1892
      %v3810 = vmul.f32 %v3424, %v1896
      %v3811 = vmul.f32 %v3426, %v1900
      %v3812 = vmul.f32 %v3428, %v1904
      %v3813 = vmul.f32 %v3430, %v1908
      %v3814 = vmul.f32 %v3432, %v1912
      %v3815 = vmul.f32 %v3434, %v1916
      %v3816 = vmul.f32 %v3436, %v1920
      %v3817 = vmul.f32 %v3438, %v1924
      %v3818 = vmul.f32 %v3440, %v1928
      %v3819 = vmul.f32 %v3442, %v1932
      %v3820 = vmul.f32 %v3444, %v1936
      %v3821 = vmul.f32 %v3446, %v1940
      %v3822 = vmul.f32 %v3448, %v1944
      %v3823 = vmul.f32 %v3450, %v1948
      %v3824 = vmul.f32 %v3793, %v1952
      %v3825 = vmul.f32 %v3795, %v1956
      %v3826 = vlaneseq
      %v3827 = vshrl.u32 %v3826, 7
      %v3828 = vsub.s32 3, %v3827
      %v3829 = vrot.slane %v3371, %v3828
      %v3830 = vmul.f32 %v3798, %v3829
      %v3831 = vmul.f32 %v3799, %v3829
      %v3832 = vmul.f32 %v3800, %v3829
      %v3833 = vmul.f32 %v3801, %v3829
      %v3834 = vmul.f32 %v3802, %v3829
      %v3835 = vmul.f32 %v3803, %v3829
      %v3836 = vmul.f32 %v3804, %v3829
      %v3837 = vmul.f32 %v3805, %v3829
      %v3838 = vmul.f32 %v3806, %v3829
      %v3839 = vmul.f32 %v3807, %v3829
      %v3840 = vmul.f32 %v3808, %v3829
      %v3841 = vmul.f32 %v3809, %v3829
      %v3842 = vmul.f32 %v3810, %v3829
      %v3843 = vmul.f32 %v3811, %v3829
      %v3844 = vmul.f32 %v3812, %v3829
      %v3845 = vmul.f32 %v3813, %v3829
      %v3846 = vmul.f32 %v3814, %v3829
      %v3847 = vmul.f32 %v3815, %v3829
      %v3848 = vmul.f32 %v3816, %v3829
      %v3849 = vmul.f32 %v3817, %v3829
      %v3850 = vmul.f32 %v3818, %v3829
      %v3851 = vmul.f32 %v3819, %v3829
      %v3852 = vmul.f32 %v3820, %v3829
      %v3853 = vmul.f32 %v3821, %v3829
      %v3854 = vmul.f32 %v3822, %v3829
      %v3855 = vmul.f32 %v3823, %v3829
      %v3856 = vmul.f32 %v3824, %v3829
      %v3857 = vmul.f32 %v3825, %v3829
      %v3858 = vadd.f32 %v3763, %v3830
      %v3859 = vadd.f32 %v3764, %v3831
      %v3860 = vadd.f32 %v3765, %v3832
      %v3861 = vadd.f32 %v3766, %v3833
      %v3862 = vadd.f32 %v3767, %v3834
      %v3863 = vadd.f32 %v3768, %v3835
      %v3864 = vadd.f32 %v3769, %v3836
      %v3865 = vadd.f32 %v3770, %v3837
      %v3866 = vadd.f32 %v3771, %v3838
      %v3867 = vadd.f32 %v3772, %v3839
      %v3868 = vadd.f32 %v3773, %v3840
      %v3869 = vadd.f32 %v3774, %v3841
      %v3870 = vadd.f32 %v3775, %v3842
      %v3871 = vadd.f32 %v3776, %v3843
      %v3872 = vadd.f32 %v3777, %v3844
      %v3873 = vadd.f32 %v3778, %v3845
      %v3874 = vadd.f32 %v3779, %v3846
      %v3875 = vadd.f32 %v3780, %v3847
      %v3876 = vadd.f32 %v3781, %v3848
      %v3877 = vadd.f32 %v3782, %v3849
      %v3878 = vadd.f32 %v3783, %v3850
      %v3879 = vadd.f32 %v3784, %v3851
      %v3880 = vadd.f32 %v3785, %v3852
      %v3881 = vadd.f32 %v3786, %v3853
      %v3882 = vadd.f32 %v3787, %v3854
      %v3883 = vadd.f32 %v3788, %v3855
      %v3884 = vadd.f32 %v3789, %v3856
      %v3885 = vadd.f32 %v3790, %v3857
      %v3886 = vmul.f32 %v3343, %v2048
      %v3887 = vmul.f32 %v3344, %v2052
      %v3888 = vmul.f32 %v3345, %v2056
      %v3889 = vmul.f32 %v3346, %v2060
      %v3890 = vmul.f32 %v3347, %v2064
      %v3891 = vmul.f32 %v3348, %v2068
      %v3892 = vmul.f32 %v3349, %v2072
      %v3893 = vmul.f32 %v3350, %v2076
      %v3894 = vmul.f32 %v3351, %v2080
      %v3895 = vmul.f32 %v3352, %v2084
      %v3896 = vmul.f32 %v3353, %v2088
      %v3897 = vmul.f32 %v3354, %v2092
      %v3898 = vmul.f32 %v3355, %v2096
      %v3899 = vmul.f32 %v3356, %v2100
      %v3900 = vmul.f32 %v3357, %v2104
      %v3901 = vmul.f32 %v3358, %v2108
      %v3902 = vmul.f32 %v3359, %v2112
      %v3903 = vmul.f32 %v3360, %v2116
      %v3904 = vmul.f32 %v3361, %v2120
      %v3905 = vmul.f32 %v3362, %v2124
      %v3906 = vmul.f32 %v3363, %v2128
      %v3907 = vmul.f32 %v3364, %v2132
      %v3908 = vmul.f32 %v3365, %v2136
      %v3909 = vmul.f32 %v3366, %v2140
      %v3910 = vmul.f32 %v3367, %v2144
      %v3911 = vmul.f32 %v3368, %v2148
      %v3912 = vmul.f32 %v3369, %v2152
      %v3913 = vmul.f32 %v3370, %v2156
      %v3914 = vlaneseq
      %v3915 = vshrl.u32 %v3914, 7
      %v3916 = vsub.s32 4, %v3915
      %v3917 = vrot.slane %v3371, %v3916
      %v3918 = vmul.f32 %v3886, %v3917
      %v3919 = vmul.f32 %v3887, %v3917
      %v3920 = vmul.f32 %v3888, %v3917
      %v3921 = vmul.f32 %v3889, %v3917
      %v3922 = vmul.f32 %v3890, %v3917
      %v3923 = vmul.f32 %v3891, %v3917
      %v3924 = vmul.f32 %v3892, %v3917
      %v3925 = vmul.f32 %v3893, %v3917
      %v3926 = vmul.f32 %v3894, %v3917
      %v3927 = vmul.f32 %v3895, %v3917
      %v3928 = vmul.f32 %v3896, %v3917
      %v3929 = vmul.f32 %v3897, %v3917
      %v3930 = vmul.f32 %v3898, %v3917
      %v3931 = vmul.f32 %v3899, %v3917
      %v3932 = vmul.f32 %v3900, %v3917
      %v3933 = vmul.f32 %v3901, %v3917
      %v3934 = vmul.f32 %v3902, %v3917
      %v3935 = vmul.f32 %v3903, %v3917
      %v3936 = vmul.f32 %v3904, %v3917
      %v3937 = vmul.f32 %v3905, %v3917
      %v3938 = vmul.f32 %v3906, %v3917
      %v3939 = vmul.f32 %v3907, %v3917
      %v3940 = vmul.f32 %v3908, %v3917
      %v3941 = vmul.f32 %v3909, %v3917
      %v3942 = vmul.f32 %v3910, %v3917
      %v3943 = vmul.f32 %v3911, %v3917
      %v3944 = vmul.f32 %v3912, %v3917
      %v3945 = vmul.f32 %v3913, %v3917
      %v3946 = vadd.f32 %v3858, %v3918
      %v3947 = vadd.f32 %v3859, %v3919
      %v3948 = vadd.f32 %v3860, %v3920
      %v3949 = vadd.f32 %v3861, %v3921
      %v3950 = vadd.f32 %v3862, %v3922
      %v3951 = vadd.f32 %v3863, %v3923
      %v3952 = vadd.f32 %v3864, %v3924
      %v3953 = vadd.f32 %v3865, %v3925
      %v3954 = vadd.f32 %v3866, %v3926
      %v3955 = vadd.f32 %v3867, %v3927
      %v3956 = vadd.f32 %v3868, %v3928
      %v3957 = vadd.f32 %v3869, %v3929
      %v3958 = vadd.f32 %v3870, %v3930
      %v3959 = vadd.f32 %v3871, %v3931
      %v3960 = vadd.f32 %v3872, %v3932
      %v3961 = vadd.f32 %v3873, %v3933
      %v3962 = vadd.f32 %v3874, %v3934
      %v3963 = vadd.f32 %v3875, %v3935
      %v3964 = vadd.f32 %v3876, %v3936
      %v3965 = vadd.f32 %v3877, %v3937
      %v3966 = vadd.f32 %v3878, %v3938
      %v3967 = vadd.f32 %v3879, %v3939
      %v3968 = vadd.f32 %v3880, %v3940
      %v3969 = vadd.f32 %v3881, %v3941
      %v3970 = vadd.f32 %v3882, %v3942
      %v3971 = vadd.f32 %v3883, %v3943
      %v3972 = vadd.f32 %v3884, %v3944
      %v3973 = vadd.f32 %v3885, %v3945
      %v3974 = vrot.slane %v3370, 1
      %v3975 = vsel %vm1557, %v3674, %v3974
      %v3978 = vsel %vm1557, %v3974, 0.0
      %v3979 = vmul.f32 %v3625, %v2253
      %v3980 = vmul.f32 %v3627, %v2257
      %v3981 = vmul.f32 %v3629, %v2261
      %v3982 = vmul.f32 %v3631, %v2265
      %v3983 = vmul.f32 %v3633, %v2269
      %v3984 = vmul.f32 %v3635, %v2273
      %v3985 = vmul.f32 %v3637, %v2277
      %v3986 = vmul.f32 %v3639, %v2281
      %v3987 = vmul.f32 %v3641, %v2285
      %v3988 = vmul.f32 %v3643, %v2289
      %v3989 = vmul.f32 %v3645, %v2293
      %v3990 = vmul.f32 %v3647, %v2297
      %v3991 = vmul.f32 %v3649, %v2301
      %v3992 = vmul.f32 %v3651, %v2305
      %v3993 = vmul.f32 %v3653, %v2309
      %v3994 = vmul.f32 %v3655, %v2313
      %v3995 = vmul.f32 %v3657, %v2317
      %v3996 = vmul.f32 %v3659, %v2321
      %v3997 = vmul.f32 %v3661, %v2325
      %v3998 = vmul.f32 %v3663, %v2329
      %v3999 = vmul.f32 %v3665, %v2333
      %v4000 = vmul.f32 %v3667, %v2337
      %v4001 = vmul.f32 %v3669, %v2341
      %v4002 = vmul.f32 %v3671, %v2345
      %v4003 = vmul.f32 %v3673, %v2349
      %v4004 = vmul.f32 %v3675, %v2353
      %v4005 = vmul.f32 %v3975, %v2357
      %v4006 = vmul.f32 %v3978, %v2361
      %v4007 = vlaneseq
      %v4008 = vshrl.u32 %v4007, 7
      %v4009 = vsub.s32 5, %v4008
      %v4010 = vrot.slane %v3371, %v4009
      %v4011 = vmul.f32 %v3979, %v4010
      %v4012 = vmul.f32 %v3980, %v4010
      %v4013 = vmul.f32 %v3981, %v4010
      %v4014 = vmul.f32 %v3982, %v4010
      %v4015 = vmul.f32 %v3983, %v4010
      %v4016 = vmul.f32 %v3984, %v4010
      %v4017 = vmul.f32 %v3985, %v4010
      %v4018 = vmul.f32 %v3986, %v4010
      %v4019 = vmul.f32 %v3987, %v4010
      %v4020 = vmul.f32 %v3988, %v4010
      %v4021 = vmul.f32 %v3989, %v4010
      %v4022 = vmul.f32 %v3990, %v4010
      %v4023 = vmul.f32 %v3991, %v4010
      %v4024 = vmul.f32 %v3992, %v4010
      %v4025 = vmul.f32 %v3993, %v4010
      %v4026 = vmul.f32 %v3994, %v4010
      %v4027 = vmul.f32 %v3995, %v4010
      %v4028 = vmul.f32 %v3996, %v4010
      %v4029 = vmul.f32 %v3997, %v4010
      %v4030 = vmul.f32 %v3998, %v4010
      %v4031 = vmul.f32 %v3999, %v4010
      %v4032 = vmul.f32 %v4000, %v4010
      %v4033 = vmul.f32 %v4001, %v4010
      %v4034 = vmul.f32 %v4002, %v4010
      %v4035 = vmul.f32 %v4003, %v4010
      %v4036 = vmul.f32 %v4004, %v4010
      %v4037 = vmul.f32 %v4005, %v4010
      %v4038 = vmul.f32 %v4006, %v4010
      %v4039 = vadd.f32 %v3946, %v4011
      %v4040 = vadd.f32 %v3947, %v4012
      %v4041 = vadd.f32 %v3948, %v4013
      %v4042 = vadd.f32 %v3949, %v4014
      %v4043 = vadd.f32 %v3950, %v4015
      %v4044 = vadd.f32 %v3951, %v4016
      %v4045 = vadd.f32 %v3952, %v4017
      %v4046 = vadd.f32 %v3953, %v4018
      %v4047 = vadd.f32 %v3954, %v4019
      %v4048 = vadd.f32 %v3955, %v4020
      %v4049 = vadd.f32 %v3956, %v4021
      %v4050 = vadd.f32 %v3957, %v4022
      %v4051 = vadd.f32 %v3958, %v4023
      %v4052 = vadd.f32 %v3959, %v4024
      %v4053 = vadd.f32 %v3960, %v4025
      %v4054 = vadd.f32 %v3961, %v4026
      %v4055 = vadd.f32 %v3962, %v4027
      %v4056 = vadd.f32 %v3963, %v4028
      %v4057 = vadd.f32 %v3964, %v4029
      %v4058 = vadd.f32 %v3965, %v4030
      %v4059 = vadd.f32 %v3966, %v4031
      %v4060 = vadd.f32 %v3967, %v4032
      %v4061 = vadd.f32 %v3968, %v4033
      %v4062 = vadd.f32 %v3969, %v4034
      %v4063 = vadd.f32 %v3970, %v4035
      %v4064 = vadd.f32 %v3971, %v4036
      %v4065 = vadd.f32 %v3972, %v4037
      %v4066 = vadd.f32 %v3973, %v4038
      %v4068 = vsel %vm812, %v3794, 0.0
      %v4069 = vmul.f32 %v3404, %v2455
      %v4070 = vmul.f32 %v3406, %v2459
      %v4071 = vmul.f32 %v3408, %v2463
      %v4072 = vmul.f32 %v3410, %v2467
      %v4073 = vmul.f32 %v3412, %v2471
      %v4074 = vmul.f32 %v3414, %v2475
      %v4075 = vmul.f32 %v3416, %v2479
      %v4076 = vmul.f32 %v3418, %v2483
      %v4077 = vmul.f32 %v3420, %v2487
      %v4078 = vmul.f32 %v3422, %v2491
      %v4079 = vmul.f32 %v3424, %v2495
      %v4080 = vmul.f32 %v3426, %v2499
      %v4081 = vmul.f32 %v3428, %v2503
      %v4082 = vmul.f32 %v3430, %v2507
      %v4083 = vmul.f32 %v3432, %v2511
      %v4084 = vmul.f32 %v3434, %v2515
      %v4085 = vmul.f32 %v3436, %v2519
      %v4086 = vmul.f32 %v3438, %v2523
      %v4087 = vmul.f32 %v3440, %v2527
      %v4088 = vmul.f32 %v3442, %v2531
      %v4089 = vmul.f32 %v3444, %v2535
      %v4090 = vmul.f32 %v3446, %v2539
      %v4091 = vmul.f32 %v3448, %v2543
      %v4092 = vmul.f32 %v3450, %v2547
      %v4093 = vmul.f32 %v3793, %v2551
      %v4094 = vmul.f32 %v3795, %v2555
      %v4095 = vmul.f32 %v4068, %v2559
      %v4096 = vlaneseq
      %v4097 = vshrl.u32 %v4096, 7
      %v4098 = vsub.s32 6, %v4097
      %v4099 = vrot.slane %v3371, %v4098
      %v4100 = vmul.f32 %v4069, %v4099
      %v4101 = vmul.f32 %v4070, %v4099
      %v4102 = vmul.f32 %v4071, %v4099
      %v4103 = vmul.f32 %v4072, %v4099
      %v4104 = vmul.f32 %v4073, %v4099
      %v4105 = vmul.f32 %v4074, %v4099
      %v4106 = vmul.f32 %v4075, %v4099
      %v4107 = vmul.f32 %v4076, %v4099
      %v4108 = vmul.f32 %v4077, %v4099
      %v4109 = vmul.f32 %v4078, %v4099
      %v4110 = vmul.f32 %v4079, %v4099
      %v4111 = vmul.f32 %v4080, %v4099
      %v4112 = vmul.f32 %v4081, %v4099
      %v4113 = vmul.f32 %v4082, %v4099
      %v4114 = vmul.f32 %v4083, %v4099
      %v4115 = vmul.f32 %v4084, %v4099
      %v4116 = vmul.f32 %v4085, %v4099
      %v4117 = vmul.f32 %v4086, %v4099
      %v4118 = vmul.f32 %v4087, %v4099
      %v4119 = vmul.f32 %v4088, %v4099
      %v4120 = vmul.f32 %v4089, %v4099
      %v4121 = vmul.f32 %v4090, %v4099
      %v4122 = vmul.f32 %v4091, %v4099
      %v4123 = vmul.f32 %v4092, %v4099
      %v4124 = vmul.f32 %v4093, %v4099
      %v4125 = vmul.f32 %v4094, %v4099
      %v4126 = vmul.f32 %v4095, %v4099
      %v4127 = vmul.f32 %v2592, %v4099
      %v4128 = vadd.f32 %v4039, %v4100
      %v4129 = vadd.f32 %v4040, %v4101
      %v4130 = vadd.f32 %v4041, %v4102
      %v4131 = vadd.f32 %v4042, %v4103
      %v4132 = vadd.f32 %v4043, %v4104
      %v4133 = vadd.f32 %v4044, %v4105
      %v4134 = vadd.f32 %v4045, %v4106
      %v4135 = vadd.f32 %v4046, %v4107
      %v4136 = vadd.f32 %v4047, %v4108
      %v4137 = vadd.f32 %v4048, %v4109
      %v4138 = vadd.f32 %v4049, %v4110
      %v4139 = vadd.f32 %v4050, %v4111
      %v4140 = vadd.f32 %v4051, %v4112
      %v4141 = vadd.f32 %v4052, %v4113
      %v4142 = vadd.f32 %v4053, %v4114
      %v4143 = vadd.f32 %v4054, %v4115
      %v4144 = vadd.f32 %v4055, %v4116
      %v4145 = vadd.f32 %v4056, %v4117
      %v4146 = vadd.f32 %v4057, %v4118
      %v4147 = vadd.f32 %v4058, %v4119
      %v4148 = vadd.f32 %v4059, %v4120
      %v4149 = vadd.f32 %v4060, %v4121
      %v4150 = vadd.f32 %v4061, %v4122
      %v4151 = vadd.f32 %v4062, %v4123
      %v4152 = vadd.f32 %v4063, %v4124
      %v4153 = vadd.f32 %v4064, %v4125
      %v4154 = vadd.f32 %v4065, %v4126
      %v4155 = vadd.f32 %v4066, %v4127
      %v4156 = vmul.f32 %v3345, %v2655
      %v4157 = vmul.f32 %v3346, %v2659
      %v4158 = vmul.f32 %v3347, %v2663
      %v4159 = vmul.f32 %v3348, %v2667
      %v4160 = vmul.f32 %v3349, %v2671
      %v4161 = vmul.f32 %v3350, %v2675
      %v4162 = vmul.f32 %v3351, %v2679
      %v4163 = vmul.f32 %v3352, %v2683
      %v4164 = vmul.f32 %v3353, %v2687
      %v4165 = vmul.f32 %v3354, %v2691
      %v4166 = vmul.f32 %v3355, %v2695
      %v4167 = vmul.f32 %v3356, %v2699
      %v4168 = vmul.f32 %v3357, %v2703
      %v4169 = vmul.f32 %v3358, %v2707
      %v4170 = vmul.f32 %v3359, %v2711
      %v4171 = vmul.f32 %v3360, %v2715
      %v4172 = vmul.f32 %v3361, %v2719
      %v4173 = vmul.f32 %v3362, %v2723
      %v4174 = vmul.f32 %v3363, %v2727
      %v4175 = vmul.f32 %v3364, %v2731
      %v4176 = vmul.f32 %v3365, %v2735
      %v4177 = vmul.f32 %v3366, %v2739
      %v4178 = vmul.f32 %v3367, %v2743
      %v4179 = vmul.f32 %v3368, %v2747
      %v4180 = vmul.f32 %v3369, %v2751
      %v4181 = vmul.f32 %v3370, %v2755
      %v4182 = vlaneseq
      %v4183 = vshrl.u32 %v4182, 7
      %v4184 = vsub.s32 7, %v4183
      %v4185 = vrot.slane %v3371, %v4184
      %v4186 = vmul.f32 %v4156, %v4185
      %v4187 = vmul.f32 %v4157, %v4185
      %v4188 = vmul.f32 %v4158, %v4185
      %v4189 = vmul.f32 %v4159, %v4185
      %v4190 = vmul.f32 %v4160, %v4185
      %v4191 = vmul.f32 %v4161, %v4185
      %v4192 = vmul.f32 %v4162, %v4185
      %v4193 = vmul.f32 %v4163, %v4185
      %v4194 = vmul.f32 %v4164, %v4185
      %v4195 = vmul.f32 %v4165, %v4185
      %v4196 = vmul.f32 %v4166, %v4185
      %v4197 = vmul.f32 %v4167, %v4185
      %v4198 = vmul.f32 %v4168, %v4185
      %v4199 = vmul.f32 %v4169, %v4185
      %v4200 = vmul.f32 %v4170, %v4185
      %v4201 = vmul.f32 %v4171, %v4185
      %v4202 = vmul.f32 %v4172, %v4185
      %v4203 = vmul.f32 %v4173, %v4185
      %v4204 = vmul.f32 %v4174, %v4185
      %v4205 = vmul.f32 %v4175, %v4185
      %v4206 = vmul.f32 %v4176, %v4185
      %v4207 = vmul.f32 %v4177, %v4185
      %v4208 = vmul.f32 %v4178, %v4185
      %v4209 = vmul.f32 %v4179, %v4185
      %v4210 = vmul.f32 %v4180, %v4185
      %v4211 = vmul.f32 %v4181, %v4185
      %v4212 = vmul.f32 %v2791, %v4185
      %v4213 = vmul.f32 %v2792, %v4185
      %v4214 = vadd.f32 %v4128, %v4186
      %v4215 = vadd.f32 %v4129, %v4187
      %v4216 = vadd.f32 %v4130, %v4188
      %v4217 = vadd.f32 %v4131, %v4189
      %v4218 = vadd.f32 %v4132, %v4190
      %v4219 = vadd.f32 %v4133, %v4191
      %v4220 = vadd.f32 %v4134, %v4192
      %v4221 = vadd.f32 %v4135, %v4193
      %v4222 = vadd.f32 %v4136, %v4194
      %v4223 = vadd.f32 %v4137, %v4195
      %v4224 = vadd.f32 %v4138, %v4196
      %v4225 = vadd.f32 %v4139, %v4197
      %v4226 = vadd.f32 %v4140, %v4198
      %v4227 = vadd.f32 %v4141, %v4199
      %v4228 = vadd.f32 %v4142, %v4200
      %v4229 = vadd.f32 %v4143, %v4201
      %v4230 = vadd.f32 %v4144, %v4202
      %v4231 = vadd.f32 %v4145, %v4203
      %v4232 = vadd.f32 %v4146, %v4204
      %v4233 = vadd.f32 %v4147, %v4205
      %v4234 = vadd.f32 %v4148, %v4206
      %v4235 = vadd.f32 %v4149, %v4207
      %v4236 = vadd.f32 %v4150, %v4208
      %v4237 = vadd.f32 %v4151, %v4209
      %v4238 = vadd.f32 %v4152, %v4210
      %v4239 = vadd.f32 %v4153, %v4211
      %v4240 = vadd.f32 %v4154, %v4212
      %v4241 = vadd.f32 %v4155, %v4213
      %v4242 = vmul.f32 %v3629, %v2855
      %v4243 = vmul.f32 %v3631, %v2859
      %v4244 = vmul.f32 %v3633, %v2863
      %v4245 = vmul.f32 %v3635, %v2867
      %v4246 = vmul.f32 %v3637, %v2871
      %v4247 = vmul.f32 %v3639, %v2875
      %v4248 = vmul.f32 %v3641, %v2879
      %v4249 = vmul.f32 %v3643, %v2883
      %v4250 = vmul.f32 %v3645, %v2887
      %v4251 = vmul.f32 %v3647, %v2891
      %v4252 = vmul.f32 %v3649, %v2895
      %v4253 = vmul.f32 %v3651, %v2899
      %v4254 = vmul.f32 %v3653, %v2903
      %v4255 = vmul.f32 %v3655, %v2907
      %v4256 = vmul.f32 %v3657, %v2911
      %v4257 = vmul.f32 %v3659, %v2915
      %v4258 = vmul.f32 %v3661, %v2919
      %v4259 = vmul.f32 %v3663, %v2923
      %v4260 = vmul.f32 %v3665, %v2927
      %v4261 = vmul.f32 %v3667, %v2931
      %v4262 = vmul.f32 %v3669, %v2935
      %v4263 = vmul.f32 %v3671, %v2939
      %v4264 = vmul.f32 %v3673, %v2943
      %v4265 = vmul.f32 %v3675, %v2947
      %v4266 = vmul.f32 %v3975, %v2951
      %v4267 = vmul.f32 %v3978, %v2955
      %v4268 = vlaneseq
      %v4269 = vshrl.u32 %v4268, 7
      %v4270 = vsub.s32 0, %v4269
      %v4271 = vrot.slane %v3372, %v4270
      %v4272 = vmul.f32 %v4242, %v4271
      %v4273 = vmul.f32 %v4243, %v4271
      %v4274 = vmul.f32 %v4244, %v4271
      %v4275 = vmul.f32 %v4245, %v4271
      %v4276 = vmul.f32 %v4246, %v4271
      %v4277 = vmul.f32 %v4247, %v4271
      %v4278 = vmul.f32 %v4248, %v4271
      %v4279 = vmul.f32 %v4249, %v4271
      %v4280 = vmul.f32 %v4250, %v4271
      %v4281 = vmul.f32 %v4251, %v4271
      %v4282 = vmul.f32 %v4252, %v4271
      %v4283 = vmul.f32 %v4253, %v4271
      %v4284 = vmul.f32 %v4254, %v4271
      %v4285 = vmul.f32 %v4255, %v4271
      %v4286 = vmul.f32 %v4256, %v4271
      %v4287 = vmul.f32 %v4257, %v4271
      %v4288 = vmul.f32 %v4258, %v4271
      %v4289 = vmul.f32 %v4259, %v4271
      %v4290 = vmul.f32 %v4260, %v4271
      %v4291 = vmul.f32 %v4261, %v4271
      %v4292 = vmul.f32 %v4262, %v4271
      %v4293 = vmul.f32 %v4263, %v4271
      %v4294 = vmul.f32 %v4264, %v4271
      %v4295 = vmul.f32 %v4265, %v4271
      %v4296 = vmul.f32 %v4266, %v4271
      %v4297 = vmul.f32 %v4267, %v4271
      %v4298 = vmul.f32 %v2991, %v4271
      %v4299 = vmul.f32 %v2992, %v4271
      %v4300 = vadd.f32 %v4214, %v4272
      %v4301 = vadd.f32 %v4215, %v4273
      %v4302 = vadd.f32 %v4216, %v4274
      %v4303 = vadd.f32 %v4217, %v4275
      %v4304 = vadd.f32 %v4218, %v4276
      %v4305 = vadd.f32 %v4219, %v4277
      %v4306 = vadd.f32 %v4220, %v4278
      %v4307 = vadd.f32 %v4221, %v4279
      %v4308 = vadd.f32 %v4222, %v4280
      %v4309 = vadd.f32 %v4223, %v4281
      %v4310 = vadd.f32 %v4224, %v4282
      %v4311 = vadd.f32 %v4225, %v4283
      %v4312 = vadd.f32 %v4226, %v4284
      %v4313 = vadd.f32 %v4227, %v4285
      %v4314 = vadd.f32 %v4228, %v4286
      %v4315 = vadd.f32 %v4229, %v4287
      %v4316 = vadd.f32 %v4230, %v4288
      %v4317 = vadd.f32 %v4231, %v4289
      %v4318 = vadd.f32 %v4232, %v4290
      %v4319 = vadd.f32 %v4233, %v4291
      %v4320 = vadd.f32 %v4234, %v4292
      %v4321 = vadd.f32 %v4235, %v4293
      %v4322 = vadd.f32 %v4236, %v4294
      %v4323 = vadd.f32 %v4237, %v4295
      %v4324 = vadd.f32 %v4238, %v4296
      %v4325 = vadd.f32 %v4239, %v4297
      %v4326 = vadd.f32 %v4240, %v4298
      %v4327 = vadd.f32 %v4241, %v4299
      %v4329 = vlaneseq
      %v4330 = vshrl.u32 %v4329, 7
      %v4331 = vsub.s32 0, %v4330
      %v4332 = vrot.slane %v3373, %v4331
      %v4334 = vadd.f32 %v4300, %v4332
      %v4335 = vadd.f32 %v4301, %v4332
      %v4336 = vadd.f32 %v4302, %v4332
      %v4337 = vadd.f32 %v4303, %v4332
      %v4338 = vadd.f32 %v4304, %v4332
      %v4339 = vadd.f32 %v4305, %v4332
      %v4340 = vadd.f32 %v4306, %v4332
      %v4341 = vadd.f32 %v4307, %v4332
      %v4342 = vadd.f32 %v4308, %v4332
      %v4343 = vadd.f32 %v4309, %v4332
      %v4344 = vadd.f32 %v4310, %v4332
      %v4345 = vadd.f32 %v4311, %v4332
      %v4346 = vadd.f32 %v4312, %v4332
      %v4347 = vadd.f32 %v4313, %v4332
      %v4348 = vadd.f32 %v4314, %v4332
      %v4349 = vadd.f32 %v4315, %v4332
      %v4350 = vadd.f32 %v4316, %v4332
      %v4351 = vadd.f32 %v4317, %v4332
      %v4352 = vadd.f32 %v4318, %v4332
      %v4353 = vadd.f32 %v4319, %v4332
      %v4354 = vadd.f32 %v4320, %v4332
      %v4355 = vadd.f32 %v4321, %v4332
      %v4356 = vadd.f32 %v4322, %v4332
      %v4357 = vadd.f32 %v4323, %v4332
      %v4358 = vadd.f32 %v4324, %v4332
      %v4359 = vadd.f32 %v4325, %v4332
      %v4360 = vadd.f32 %v4326, %v4332
      %v4361 = vadd.f32 %v4327, %v4332
      %v4362 = vmax.f32 %v4334, 0.0
      %v4363 = vmax.f32 %v4335, 0.0
      %v4364 = vmax.f32 %v4336, 0.0
      %v4365 = vmax.f32 %v4337, 0.0
      %v4366 = vmax.f32 %v4338, 0.0
      %v4367 = vmax.f32 %v4339, 0.0
      %v4368 = vmax.f32 %v4340, 0.0
      %v4369 = vmax.f32 %v4341, 0.0
      %v4370 = vmax.f32 %v4342, 0.0
      %v4371 = vmax.f32 %v4343, 0.0
      %v4372 = vmax.f32 %v4344, 0.0
      %v4373 = vmax.f32 %v4345, 0.0
      %v4374 = vmax.f32 %v4346, 0.0
      %v4375 = vmax.f32 %v4347, 0.0
      %v4376 = vmax.f32 %v4348, 0.0
      %v4377 = vmax.f32 %v4349, 0.0
      %v4378 = vmax.f32 %v4350, 0.0
      %v4379 = vmax.f32 %v4351, 0.0
      %v4380 = vmax.f32 %v4352, 0.0
      %v4381 = vmax.f32 %v4353, 0.0
      %v4382 = vmax.f32 %v4354, 0.0
      %v4383 = vmax.f32 %v4355, 0.0
      %v4384 = vmax.f32 %v4356, 0.0
      %v4385 = vmax.f32 %v4357, 0.0
      %v4386 = vmax.f32 %v4358, 0.0
      %v4387 = vmax.f32 %v4359, 0.0
      %v4388 = vmax.f32 %v4360, 0.0
      %v4389 = vmax.f32 %v4361, 0.0
      %v4390 = vld [vmem:[%s3] sm:$0xff]
      %v4391 = vld [vmem:[%s3 + $0x8] sm:$0xff]
      %v4392 = vld [vmem:[%s3 + $0x10] sm:$0xff]
      %v4393 = vld [vmem:[%s3 + $0x18] sm:$0xff]
      %v4394 = vld [vmem:[%s3 + $0x20] sm:$0xff]
      %v4395 = vld [vmem:[%s3 + $0x28] sm:$0xff]
      %v4396 = vld [vmem:[%s3 + $0x30] sm:$0xff]
      %v4397 = vld [vmem:[%s3 + $0x38] sm:$0xff]
      %v4398 = vld [vmem:[%s3 + $0x40] sm:$0xff]
      %v4399 = vld [vmem:[%s3 + $0x48] sm:$0xff]
      %v4400 = vld [vmem:[%s3 + $0x50] sm:$0xff]
      %v4401 = vld [vmem:[%s3 + $0x58] sm:$0xff]
      %v4402 = vld [vmem:[%s3 + $0x60] sm:$0xff]
      %v4403 = vld [vmem:[%s3 + $0x68] sm:$0xff]
      %vm4404 = vcmask 785408
      %v4406 = vsel %vm4404, %v4391, 0
      %v4409 = vsel %vm4404, %v4393, 0
      %v4412 = vsel %vm4404, %v4395, 0
      %v4415 = vsel %vm4404, %v4397, 0
      %v4418 = vsel %vm4404, %v4399, 0
      %v4421 = vsel %vm4404, %v4401, 0
      %v4424 = vsel %vm4404, %v4403, 0
      %4426 = vmatprep.subr.mxu0 0.0
      %4427 = vmatpush1.msra.mxu0 %v4362
      %4428 = vmatprep.subr.mxu0 0.0
      %4429 = vmatpush1.msra.mxu0 %v4363
      %4430 = vmatprep.subr.mxu0 0.0
      %4431 = vmatpush1.msra.mxu0 %v4364
      %4432 = vmatprep.subr.mxu0 0.0
      %4433 = vmatpush1.msra.mxu0 %v4365
      %4434 = vmatprep.subr.mxu0 0.0
      %4435 = vmatpush1.msra.mxu0 %v4366
      %4436 = vmatprep.subr.mxu0 0.0
      %4437 = vmatpush1.msra.mxu0 %v4367
      %4438 = vmatprep.subr.mxu0 0.0
      %4439 = vmatpush1.msra.mxu0 %v4368
      %4440 = vmatprep.subr.mxu0 0.0
      %4441 = vmatpush1.msra.mxu0 %v4369
      %4442 = vmatprep.subr.mxu0 0.0
      %4443 = vmatpush1.msra.mxu0 %v4370
      %4444 = vmatprep.subr.mxu0 0.0
      %4445 = vmatpush1.msra.mxu0 %v4371
      %4446 = vmatprep.subr.mxu0 0.0
      %4447 = vmatpush1.msra.mxu0 %v4372
      %4448 = vmatprep.subr.mxu0 0.0
      %4449 = vmatpush1.msra.mxu0 %v4373
      %4450 = vmatprep.subr.mxu0 0.0
      %4451 = vmatpush1.msra.mxu0 %v4374
      %4452 = vmatprep.subr.mxu0 0.0
      %4453 = vmatpush1.msra.mxu0 %v4375
      %4454 = vmatprep.subr.mxu0 0.0
      %4455 = vmatpush1.msra.mxu0 %v4376
      %4456 = vmatprep.subr.mxu0 0.0
      %4457 = vmatpush1.msra.mxu0 %v4377
      %4458 = vmatprep.subr.mxu0 0.0
      %4459 = vmatpush1.msra.mxu0 %v4378
      %4460 = vmatprep.subr.mxu0 0.0
      %4461 = vmatpush1.msra.mxu0 %v4379
      %4462 = vmatprep.subr.mxu0 0.0
      %4463 = vmatpush1.msra.mxu0 %v4380
      %4464 = vmatprep.subr.mxu0 0.0
      %4465 = vmatpush1.msra.mxu0 %v4381
      %4466 = vmatprep.subr.mxu0 0.0
      %4467 = vmatpush1.msra.mxu0 %v4382
      %4468 = vmatprep.subr.mxu0 0.0
      %4469 = vmatpush1.msra.mxu0 %v4383
      %4470 = vmatprep.subr.mxu0 0.0
      %4471 = vmatpush1.msra.mxu0 %v4384
      %4472 = vmatprep.subr.mxu0 0.0
      %4473 = vmatpush1.msra.mxu0 %v4385
      %4474 = vmatprep.subr.mxu0 0.0
      %4475 = vmatpush1.msra.mxu0 %v4386
      %4476 = vmatprep.subr.mxu0 0.0
      %4477 = vmatpush1.msra.mxu0 %v4387
      %4478 = vmatprep.subr.mxu0 0.0
      %4479 = vmatpush1.msra.mxu0 %v4388
      %4480 = vmatprep.subr.mxu0 0.0
      %4481 = vmatpush1.msra.mxu0 %v4389
      %4482 = vmatprep.subr.mxu0 0.0
      %4483 = vmatpush1.msra.mxu0 0.0
      %4484 = vmatprep.subr.mxu0 0.0
      %4485 = vmatpush1.msra.mxu0 0.0
      %4486 = vmatprep.subr.mxu0 0.0
      %4487 = vmatpush1.msra.mxu0 0.0
      %4488 = vmatprep.subr.mxu0 0.0
      %4489 = vmatpush1.msra.mxu0 0.0
      %4490 = vmatprep.mubr.f32.mxu0 %v4406
      %4491 = vmatmul.mubr.f32.gmra.mrb[0].mxu0 %v4390
      %v4492 = vpop.f32.mrb[0].mxu0
      %v4493 = vadd.f32 0.0, %v4492
      %v4494 = vpop.f32.mrb[0].mxu0
      %4495 = vmatprep.mubr.f32.mxu0 %v4409
      %4496 = vmatmul.mubr.f32.gmra.mrb[0].mxu0 %v4392
      %v4497 = vpop.f32.mrb[0].mxu0
      %v4498 = vadd.f32 0.0, %v4497
      %v4499 = vpop.f32.mrb[0].mxu0
      %4500 = vmatprep.mubr.f32.mxu0 %v4412
      %4501 = vmatmul.mubr.f32.gmra.mrb[0].mxu0 %v4394
      %v4502 = vpop.f32.mrb[0].mxu0
      %v4503 = vadd.f32 0.0, %v4502
      %v4504 = vpop.f32.mrb[0].mxu0
      %4505 = vmatprep.mubr.f32.mxu0 %v4415
      %4506 = vmatmul.mubr.f32.gmra.mrb[0].mxu0 %v4396
      %v4507 = vpop.f32.mrb[0].mxu0
      %v4508 = vadd.f32 0.0, %v4507
      %v4509 = vpop.f32.mrb[0].mxu0
      %4510 = vmatprep.mubr.f32.mxu0 %v4418
      %4511 = vmatmul.mubr.f32.gmra.mrb[0].mxu0 %v4398
      %v4512 = vpop.f32.mrb[0].mxu0
      %v4513 = vadd.f32 0.0, %v4512
      %v4514 = vpop.f32.mrb[0].mxu0
      %4515 = vmatprep.mubr.f32.mxu0 %v4421
      %4516 = vmatmul.mubr.f32.gmra.mrb[0].mxu0 %v4400
      %v4517 = vpop.f32.mrb[0].mxu0
      %v4518 = vadd.f32 0.0, %v4517
      %v4519 = vpop.f32.mrb[0].mxu0
      %4520 = vmatprep.mubr.f32.mxu0 %v4424
      %4521 = vmatmul.mubr.f32.gmra.mrb[0].mxu0 %v4402
      %v4522 = vpop.f32.mrb[0].mxu0
      %v4523 = vadd.f32 0.0, %v4522
      %v4524 = vpop.f32.mrb[0].mxu0
      %4525 = vdwg.mxu0
      %v4526 = vld [vmem:[%s13] sm:$0xff]
      %v4527 = vld [vmem:[%s13 + $0x8] sm:$0xff]
      %v4528 = vld [vmem:[%s13 + $0x10] sm:$0xff]
      %v4529 = vld [vmem:[%s13 + $0x18] sm:$0xff]
      %v4530 = vld [vmem:[%s13 + $0x20] sm:$0xff]
      %v4531 = vld [vmem:[%s13 + $0x28] sm:$0xff]
      %v4532 = vld [vmem:[%s13 + $0x30] sm:$0xff]
      %v4533 = vld [vmem:[%s13 + $0x38] sm:$0xff]
      %v4534 = vld [vmem:[%s13 + $0x40] sm:$0xff]
      %v4535 = vld [vmem:[%s13 + $0x48] sm:$0xff]
      %v4536 = vld [vmem:[%s13 + $0x50] sm:$0xff]
      %v4537 = vld [vmem:[%s13 + $0x58] sm:$0xff]
      %v4538 = vld [vmem:[%s13 + $0x60] sm:$0xff]
      %v4539 = vld [vmem:[%s13 + $0x68] sm:$0xff]
      %v4540 = vld [vmem:[%s13 + $0x70] sm:$0xff]
      %v4541 = vld [vmem:[%s13 + $0x78] sm:$0xff]
      %v4542 = vld [vmem:[%s14] sm:$0x1]
      %v4544 = vlaneseq
      %v4545 = vshrl.u32 %v4544, 7
      %v4546 = vsub.s32 0, %v4545
      %v4547 = vrot.slane %v4542, %v4546
      %4549 = vmatprep.subr.mxu0 0.0
      %4550 = vmatpush1.msra.mxu0 %v4526
      %4551 = vmatprep.subr.mxu0 0.0
      %4552 = vmatpush1.msra.mxu0 %v4527
      %4553 = vmatprep.subr.mxu0 0.0
      %4554 = vmatpush1.msra.mxu0 %v4528
      %4555 = vmatprep.subr.mxu0 0.0
      %4556 = vmatpush1.msra.mxu0 %v4529
      %4557 = vmatprep.subr.mxu0 0.0
      %4558 = vmatpush1.msra.mxu0 %v4530
      %4559 = vmatprep.subr.mxu0 0.0
      %4560 = vmatpush1.msra.mxu0 %v4531
      %4561 = vmatprep.subr.mxu0 0.0
      %4562 = vmatpush1.msra.mxu0 %v4532
      %4563 = vmatprep.subr.mxu0 0.0
      %4564 = vmatpush1.msra.mxu0 %v4533
      %4565 = vmatprep.subr.mxu0 0.0
      %4566 = vmatpush1.msra.mxu0 %v4534
      %4567 = vmatprep.subr.mxu0 0.0
      %4568 = vmatpush1.msra.mxu0 %v4535
      %4569 = vmatprep.subr.mxu0 0.0
      %4570 = vmatpush1.msra.mxu0 %v4536
      %4571 = vmatprep.subr.mxu0 0.0
      %4572 = vmatpush1.msra.mxu0 %v4537
      %4573 = vmatprep.subr.mxu0 0.0
      %4574 = vmatpush1.msra.mxu0 %v4538
      %4575 = vmatprep.subr.mxu0 0.0
      %4576 = vmatpush1.msra.mxu0 %v4539
      %4577 = vmatprep.subr.mxu0 0.0
      %4578 = vmatpush1.msra.mxu0 %v4540
      %4579 = vmatprep.subr.mxu0 0.0
      %4580 = vmatpush1.msra.mxu0 %v4541
      %4581 = vmatprep.subr.mxu0 0.0
      %4582 = vmatpush1.msra.mxu0 0.0
      %4583 = vmatprep.subr.mxu0 0.0
      %4584 = vmatpush1.msra.mxu0 0.0
      %4585 = vmatprep.subr.mxu0 0.0
      %4586 = vmatpush1.msra.mxu0 0.0
      %4587 = vmatprep.subr.mxu0 0.0
      %4588 = vmatpush1.msra.mxu0 0.0
      %4589 = vmatprep.subr.mxu0 0.0
      %4590 = vmatpush1.msra.mxu0 0.0
      %4591 = vmatprep.subr.mxu0 0.0
      %4592 = vmatpush1.msra.mxu0 0.0
      %4593 = vmatprep.subr.mxu0 0.0
      %4594 = vmatpush1.msra.mxu0 0.0
      %4595 = vmatprep.subr.mxu0 0.0
      %4596 = vmatpush1.msra.mxu0 0.0
      %4597 = vmatprep.subr.mxu0 0.0
      %4598 = vmatpush1.msra.mxu0 0.0
      %4599 = vmatprep.subr.mxu0 0.0
      %4600 = vmatpush1.msra.mxu0 0.0
      %4601 = vmatprep.subr.mxu0 0.0
      %4602 = vmatpush1.msra.mxu0 0.0
      %4603 = vmatprep.subr.mxu0 0.0
      %4604 = vmatpush1.msra.mxu0 0.0
      %4605 = vmatprep.subr.mxu0 0.0
      %4606 = vmatpush1.msra.mxu0 0.0
      %4607 = vmatprep.subr.mxu0 0.0
      %4608 = vmatpush1.msra.mxu0 0.0
      %4609 = vmatprep.subr.mxu0 0.0
      %4610 = vmatpush1.msra.mxu0 0.0
      %4611 = vmatprep.subr.mxu0 0.0
      %4612 = vmatpush1.msra.mxu0 0.0
      %4613 = vmatprep.mubr.f32.mxu0 0.0
      %4614 = vmatmul.mubr.f32.gmra.mrb[0].mxu0 %v4493
      %v4615 = vpop.f32.mrb[0].mxu0
      %v4616 = vadd.f32 %v4547, %v4615
      %v4617 = vpop.f32.mrb[0].mxu0
      %4618 = vmatprep.mubr.f32.mxu0 0.0
      %4619 = vmatmul.mubr.f32.gmra.mrb[0].mxu0 %v4498
      %v4620 = vpop.f32.mrb[0].mxu0
      %v4621 = vadd.f32 %v4547, %v4620
      %v4622 = vpop.f32.mrb[0].mxu0
      %4623 = vmatprep.mubr.f32.mxu0 0.0
      %4624 = vmatmul.mubr.f32.gmra.mrb[0].mxu0 %v4503
      %v4625 = vpop.f32.mrb[0].mxu0
      %v4626 = vadd.f32 %v4547, %v4625
      %v4627 = vpop.f32.mrb[0].mxu0
      %4628 = vmatprep.mubr.f32.mxu0 0.0
      %4629 = vmatmul.mubr.f32.gmra.mrb[0].mxu0 %v4508
      %v4630 = vpop.f32.mrb[0].mxu0
      %v4631 = vadd.f32 %v4547, %v4630
      %v4632 = vpop.f32.mrb[0].mxu0
      %4633 = vmatprep.mubr.f32.mxu0 0.0
      %4634 = vmatmul.mubr.f32.gmra.mrb[0].mxu0 %v4513
      %v4635 = vpop.f32.mrb[0].mxu0
      %v4636 = vadd.f32 %v4547, %v4635
      %v4637 = vpop.f32.mrb[0].mxu0
      %4638 = vmatprep.mubr.f32.mxu0 0.0
      %4639 = vmatmul.mubr.f32.gmra.mrb[0].mxu0 %v4518
      %v4640 = vpop.f32.mrb[0].mxu0
      %v4641 = vadd.f32 %v4547, %v4640
      %v4642 = vpop.f32.mrb[0].mxu0
      %4643 = vmatprep.mubr.f32.mxu0 0.0
      %4644 = vmatmul.mubr.f32.gmra.mrb[0].mxu0 %v4523
      %v4645 = vpop.f32.mrb[0].mxu0
      %v4646 = vadd.f32 %v4547, %v4645
      %v4647 = vpop.f32.mrb[0].mxu0
      %4648 = vdwg.mxu0
      %v4649 = vmax.f32 %v4616, 0.0
      %v4650 = vmax.f32 %v4621, 0.0
      %v4651 = vmax.f32 %v4626, 0.0
      %v4652 = vmax.f32 %v4631, 0.0
      %v4653 = vmax.f32 %v4636, 0.0
      %v4654 = vmax.f32 %v4641, 0.0
      %v4655 = vmax.f32 %v4646, 0.0
      %v4656 = vld [vmem:[%s15] sm:$0xff]
      %v4657 = vld [vmem:[%s15 + $0x8] sm:$0x1]
      %v4658 = vld [vmem:[%s16] sm:$0x1]
      %v4665 = vrot.slane %v4649, 7
      %v4666 = vrot.slane %v4650, 7
      %v4667 = vsel %vm812, %v4665, %v4666
      %v4668 = vrot.slane %v4651, 7
      %v4669 = vsel %vm812, %v4666, %v4668
      %v4670 = vrot.slane %v4652, 7
      %v4671 = vsel %vm812, %v4668, %v4670
      %v4672 = vrot.slane %v4653, 7
      %v4673 = vsel %vm812, %v4670, %v4672
      %v4674 = vrot.slane %v4654, 7
      %v4675 = vsel %vm812, %v4672, %v4674
      %v4682 = vsel %vm812, 0.0, %v4665
      %4684 = vset.pattern.permute.xlu0 0
      %4685 = vperm.xlu0 %4684, %v683
      %v4686 = vpop.permute.xlu0 %4685
      %4689 = vset.pattern.permute.xlu0 0
      %4690 = vperm.xlu0 %4689, %v684
      %v4691 = vpop.permute.xlu0 %4690
      %4694 = vset.pattern.permute.xlu0 0
      %4695 = vperm.xlu0 %4694, %v685
      %v4696 = vpop.permute.xlu0 %4695
      %4699 = vset.pattern.permute.xlu0 0
      %4700 = vperm.xlu0 %4699, %v686
      %v4701 = vpop.permute.xlu0 %4700
      %4704 = vset.pattern.permute.xlu0 0
      %4705 = vperm.xlu0 %4704, %v687
      %v4706 = vpop.permute.xlu0 %4705
      %4709 = vset.pattern.permute.xlu0 0
      %4710 = vperm.xlu0 %4709, %v688
      %v4711 = vpop.permute.xlu0 %4710
      %4714 = vset.pattern.permute.xlu0 0
      %4715 = vperm.xlu0 %4714, %v689
      %v4716 = vpop.permute.xlu0 %4715
      %v4718 = vmul.f32 %v4686, 0.0
      %v4719 = vmul.f32 %v4682, %v4691
      %v4720 = vmul.f32 %v4667, %v4696
      %v4721 = vmul.f32 %v4669, %v4701
      %v4722 = vmul.f32 %v4671, %v4706
      %v4723 = vmul.f32 %v4673, %v4711
      %v4724 = vmul.f32 %v4675, %v4716
      %v4725 = vlaneseq
      %v4726 = vshrl.u32 %v4725, 7
      %v4727 = vsub.s32 0, %v4726
      %v4728 = vrot.slane %v4656, %v4727
      %v4729 = vmul.f32 %v4718, %v4728
      %v4730 = vmul.f32 %v4719, %v4728
      %v4731 = vmul.f32 %v4720, %v4728
      %v4732 = vmul.f32 %v4721, %v4728
      %v4733 = vmul.f32 %v4722, %v4728
      %v4734 = vmul.f32 %v4723, %v4728
      %v4735 = vmul.f32 %v4724, %v4728
      %4736 = vset.pattern.permute.xlu0 1
      %4737 = vperm.xlu0 %4736, %v683
      %v4738 = vpop.permute.xlu0 %4737
      %4740 = vset.pattern.permute.xlu0 1
      %4741 = vperm.xlu0 %4740, %v684
      %v4742 = vpop.permute.xlu0 %4741
      %4744 = vset.pattern.permute.xlu0 1
      %4745 = vperm.xlu0 %4744, %v685
      %v4746 = vpop.permute.xlu0 %4745
      %4748 = vset.pattern.permute.xlu0 1
      %4749 = vperm.xlu0 %4748, %v686
      %v4750 = vpop.permute.xlu0 %4749
      %4752 = vset.pattern.permute.xlu0 1
      %4753 = vperm.xlu0 %4752, %v687
      %v4754 = vpop.permute.xlu0 %4753
      %4756 = vset.pattern.permute.xlu0 1
      %4757 = vperm.xlu0 %4756, %v688
      %v4758 = vpop.permute.xlu0 %4757
      %4760 = vset.pattern.permute.xlu0 1
      %4761 = vperm.xlu0 %4760, %v689
      %v4762 = vpop.permute.xlu0 %4761
      %v4764 = vmul.f32 %v4738, 0.0
      %v4765 = vmul.f32 %v4649, %v4742
      %v4766 = vmul.f32 %v4650, %v4746
      %v4767 = vmul.f32 %v4651, %v4750
      %v4768 = vmul.f32 %v4652, %v4754
      %v4769 = vmul.f32 %v4653, %v4758
      %v4770 = vmul.f32 %v4654, %v4762
      %v4771 = vlaneseq
      %v4772 = vshrl.u32 %v4771, 7
      %v4773 = vsub.s32 1, %v4772
      %v4774 = vrot.slane %v4656, %v4773
      %v4775 = vmul.f32 %v4764, %v4774
      %v4776 = vmul.f32 %v4765, %v4774
      %v4777 = vmul.f32 %v4766, %v4774
      %v4778 = vmul.f32 %v4767, %v4774
      %v4779 = vmul.f32 %v4768, %v4774
      %v4780 = vmul.f32 %v4769, %v4774
      %v4781 = vmul.f32 %v4770, %v4774
      %v4782 = vadd.f32 %v4729, %v4775
      %v4783 = vadd.f32 %v4730, %v4776
      %v4784 = vadd.f32 %v4731, %v4777
      %v4785 = vadd.f32 %v4732, %v4778
      %v4786 = vadd.f32 %v4733, %v4779
      %v4787 = vadd.f32 %v4734, %v4780
      %v4788 = vadd.f32 %v4735, %v4781
      %v4790 = vrot.slane %v4649, 1
      %v4791 = vrot.slane %v4650, 1
      %v4792 = vsel %vm1557, %v4790, %v4791
      %v4793 = vrot.slane %v4651, 1
      %v4794 = vsel %vm1557, %v4791, %v4793
      %v4795 = vrot.slane %v4652, 1
      %v4796 = vsel %vm1557, %v4793, %v4795
      %v4797 = vrot.slane %v4653, 1
      %v4798 = vsel %vm1557, %v4795, %v4797
      %v4799 = vrot.slane %v4654, 1
      %v4800 = vsel %vm1557, %v4797, %v4799
      %v4801 = vrot.slane %v4655, 1
      %v4802 = vsel %vm1557, %v4799, %v4801
      %v4810 = vsel %vm1557, 0.0, %v4790
      %4811 = vset.pattern.permute.xlu0 2
      %4812 = vperm.xlu0 %4811, %v683
      %v4813 = vpop.permute.xlu0 %4812
      %4815 = vset.pattern.permute.xlu0 2
      %4816 = vperm.xlu0 %4815, %v684
      %v4817 = vpop.permute.xlu0 %4816
      %4819 = vset.pattern.permute.xlu0 2
      %4820 = vperm.xlu0 %4819, %v685
      %v4821 = vpop.permute.xlu0 %4820
      %4823 = vset.pattern.permute.xlu0 2
      %4824 = vperm.xlu0 %4823, %v686
      %v4825 = vpop.permute.xlu0 %4824
      %4827 = vset.pattern.permute.xlu0 2
      %4828 = vperm.xlu0 %4827, %v687
      %v4829 = vpop.permute.xlu0 %4828
      %4831 = vset.pattern.permute.xlu0 2
      %4832 = vperm.xlu0 %4831, %v688
      %v4833 = vpop.permute.xlu0 %4832
      %4835 = vset.pattern.permute.xlu0 2
      %4836 = vperm.xlu0 %4835, %v689
      %v4837 = vpop.permute.xlu0 %4836
      %v4839 = vmul.f32 %v4810, %v4813
      %v4840 = vmul.f32 %v4792, %v4817
      %v4841 = vmul.f32 %v4794, %v4821
      %v4842 = vmul.f32 %v4796, %v4825
      %v4843 = vmul.f32 %v4798, %v4829
      %v4844 = vmul.f32 %v4800, %v4833
      %v4845 = vmul.f32 %v4802, %v4837
      %v4846 = vlaneseq
      %v4847 = vshrl.u32 %v4846, 7
      %v4848 = vsub.s32 2, %v4847
      %v4849 = vrot.slane %v4656, %v4848
      %v4850 = vmul.f32 %v4839, %v4849
      %v4851 = vmul.f32 %v4840, %v4849
      %v4852 = vmul.f32 %v4841, %v4849
      %v4853 = vmul.f32 %v4842, %v4849
      %v4854 = vmul.f32 %v4843, %v4849
      %v4855 = vmul.f32 %v4844, %v4849
      %v4856 = vmul.f32 %v4845, %v4849
      %v4857 = vadd.f32 %v4782, %v4850
      %v4858 = vadd.f32 %v4783, %v4851
      %v4859 = vadd.f32 %v4784, %v4852
      %v4860 = vadd.f32 %v4785, %v4853
      %v4861 = vadd.f32 %v4786, %v4854
      %v4862 = vadd.f32 %v4787, %v4855
      %v4863 = vadd.f32 %v4788, %v4856
      %v4864 = vrot.slane %v4655, 7
      %v4865 = vsel %vm812, %v4674, %v4864
      %4867 = vset.pattern.permute.xlu0 3
      %4868 = vperm.xlu0 %4867, %v683
      %v4869 = vpop.permute.xlu0 %4868
      %4871 = vset.pattern.permute.xlu0 3
      %4872 = vperm.xlu0 %4871, %v684
      %v4873 = vpop.permute.xlu0 %4872
      %4875 = vset.pattern.permute.xlu0 3
      %4876 = vperm.xlu0 %4875, %v685
      %v4877 = vpop.permute.xlu0 %4876
      %4879 = vset.pattern.permute.xlu0 3
      %4880 = vperm.xlu0 %4879, %v686
      %v4881 = vpop.permute.xlu0 %4880
      %4883 = vset.pattern.permute.xlu0 3
      %4884 = vperm.xlu0 %4883, %v687
      %v4885 = vpop.permute.xlu0 %4884
      %4887 = vset.pattern.permute.xlu0 3
      %4888 = vperm.xlu0 %4887, %v688
      %v4889 = vpop.permute.xlu0 %4888
      %4891 = vset.pattern.permute.xlu0 3
      %4892 = vperm.xlu0 %4891, %v689
      %v4893 = vpop.permute.xlu0 %4892
      %v4895 = vmul.f32 %v4682, %v4869
      %v4896 = vmul.f32 %v4667, %v4873
      %v4897 = vmul.f32 %v4669, %v4877
      %v4898 = vmul.f32 %v4671, %v4881
      %v4899 = vmul.f32 %v4673, %v4885
      %v4900 = vmul.f32 %v4675, %v4889
      %v4901 = vmul.f32 %v4865, %v4893
      %v4902 = vlaneseq
      %v4903 = vshrl.u32 %v4902, 7
      %v4904 = vsub.s32 3, %v4903
      %v4905 = vrot.slane %v4656, %v4904
      %v4906 = vmul.f32 %v4895, %v4905
      %v4907 = vmul.f32 %v4896, %v4905
      %v4908 = vmul.f32 %v4897, %v4905
      %v4909 = vmul.f32 %v4898, %v4905
      %v4910 = vmul.f32 %v4899, %v4905
      %v4911 = vmul.f32 %v4900, %v4905
      %v4912 = vmul.f32 %v4901, %v4905
      %v4913 = vadd.f32 %v4857, %v4906
      %v4914 = vadd.f32 %v4858, %v4907
      %v4915 = vadd.f32 %v4859, %v4908
      %v4916 = vadd.f32 %v4860, %v4909
      %v4917 = vadd.f32 %v4861, %v4910
      %v4918 = vadd.f32 %v4862, %v4911
      %v4919 = vadd.f32 %v4863, %v4912
      %4920 = vset.pattern.permute.xlu0 4
      %4921 = vperm.xlu0 %4920, %v683
      %v4922 = vpop.permute.xlu0 %4921
      %4924 = vset.pattern.permute.xlu0 4
      %4925 = vperm.xlu0 %4924, %v684
      %v4926 = vpop.permute.xlu0 %4925
      %4928 = vset.pattern.permute.xlu0 4
      %4929 = vperm.xlu0 %4928, %v685
      %v4930 = vpop.permute.xlu0 %4929
      %4932 = vset.pattern.permute.xlu0 4
      %4933 = vperm.xlu0 %4932, %v686
      %v4934 = vpop.permute.xlu0 %4933
      %4936 = vset.pattern.permute.xlu0 4
      %4937 = vperm.xlu0 %4936, %v687
      %v4938 = vpop.permute.xlu0 %4937
      %4940 = vset.pattern.permute.xlu0 4
      %4941 = vperm.xlu0 %4940, %v688
      %v4942 = vpop.permute.xlu0 %4941
      %4944 = vset.pattern.permute.xlu0 4
      %4945 = vperm.xlu0 %4944, %v689
      %v4946 = vpop.permute.xlu0 %4945
      %v4948 = vmul.f32 %v4649, %v4922
      %v4949 = vmul.f32 %v4650, %v4926
      %v4950 = vmul.f32 %v4651, %v4930
      %v4951 = vmul.f32 %v4652, %v4934
      %v4952 = vmul.f32 %v4653, %v4938
      %v4953 = vmul.f32 %v4654, %v4942
      %v4954 = vmul.f32 %v4655, %v4946
      %v4955 = vlaneseq
      %v4956 = vshrl.u32 %v4955, 7
      %v4957 = vsub.s32 4, %v4956
      %v4958 = vrot.slane %v4656, %v4957
      %v4959 = vmul.f32 %v4948, %v4958
      %v4960 = vmul.f32 %v4949, %v4958
      %v4961 = vmul.f32 %v4950, %v4958
      %v4962 = vmul.f32 %v4951, %v4958
      %v4963 = vmul.f32 %v4952, %v4958
      %v4964 = vmul.f32 %v4953, %v4958
      %v4965 = vmul.f32 %v4954, %v4958
      %v4966 = vadd.f32 %v4913, %v4959
      %v4967 = vadd.f32 %v4914, %v4960
      %v4968 = vadd.f32 %v4915, %v4961
      %v4969 = vadd.f32 %v4916, %v4962
      %v4970 = vadd.f32 %v4917, %v4963
      %v4971 = vadd.f32 %v4918, %v4964
      %v4972 = vadd.f32 %v4919, %v4965
      %v4974 = vsel %vm1557, %v4801, 0.0
      %4975 = vset.pattern.permute.xlu0 5
      %4976 = vperm.xlu0 %4975, %v683
      %v4977 = vpop.permute.xlu0 %4976
      %4979 = vset.pattern.permute.xlu0 5
      %4980 = vperm.xlu0 %4979, %v684
      %v4981 = vpop.permute.xlu0 %4980
      %4983 = vset.pattern.permute.xlu0 5
      %4984 = vperm.xlu0 %4983, %v685
      %v4985 = vpop.permute.xlu0 %4984
      %4987 = vset.pattern.permute.xlu0 5
      %4988 = vperm.xlu0 %4987, %v686
      %v4989 = vpop.permute.xlu0 %4988
      %4991 = vset.pattern.permute.xlu0 5
      %4992 = vperm.xlu0 %4991, %v687
      %v4993 = vpop.permute.xlu0 %4992
      %4995 = vset.pattern.permute.xlu0 5
      %4996 = vperm.xlu0 %4995, %v688
      %v4997 = vpop.permute.xlu0 %4996
      %4999 = vset.pattern.permute.xlu0 5
      %5000 = vperm.xlu0 %4999, %v689
      %v5001 = vpop.permute.xlu0 %5000
      %v5003 = vmul.f32 %v4792, %v4977
      %v5004 = vmul.f32 %v4794, %v4981
      %v5005 = vmul.f32 %v4796, %v4985
      %v5006 = vmul.f32 %v4798, %v4989
      %v5007 = vmul.f32 %v4800, %v4993
      %v5008 = vmul.f32 %v4802, %v4997
      %v5009 = vmul.f32 %v4974, %v5001
      %v5010 = vlaneseq
      %v5011 = vshrl.u32 %v5010, 7
      %v5012 = vsub.s32 5, %v5011
      %v5013 = vrot.slane %v4656, %v5012
      %v5014 = vmul.f32 %v5003, %v5013
      %v5015 = vmul.f32 %v5004, %v5013
      %v5016 = vmul.f32 %v5005, %v5013
      %v5017 = vmul.f32 %v5006, %v5013
      %v5018 = vmul.f32 %v5007, %v5013
      %v5019 = vmul.f32 %v5008, %v5013
      %v5020 = vmul.f32 %v5009, %v5013
      %v5021 = vadd.f32 %v4966, %v5014
      %v5022 = vadd.f32 %v4967, %v5015
      %v5023 = vadd.f32 %v4968, %v5016
      %v5024 = vadd.f32 %v4969, %v5017
      %v5025 = vadd.f32 %v4970, %v5018
      %v5026 = vadd.f32 %v4971, %v5019
      %v5027 = vadd.f32 %v4972, %v5020
      %v5029 = vsel %vm812, %v4864, 0.0
      %5030 = vset.pattern.permute.xlu0 6
      %5031 = vperm.xlu0 %5030, %v683
      %v5032 = vpop.permute.xlu0 %5031
      %5034 = vset.pattern.permute.xlu0 6
      %5035 = vperm.xlu0 %5034, %v684
      %v5036 = vpop.permute.xlu0 %5035
      %5038 = vset.pattern.permute.xlu0 6
      %5039 = vperm.xlu0 %5038, %v685
      %v5040 = vpop.permute.xlu0 %5039
      %5042 = vset.pattern.permute.xlu0 6
      %5043 = vperm.xlu0 %5042, %v686
      %v5044 = vpop.permute.xlu0 %5043
      %5046 = vset.pattern.permute.xlu0 6
      %5047 = vperm.xlu0 %5046, %v687
      %v5048 = vpop.permute.xlu0 %5047
      %5050 = vset.pattern.permute.xlu0 6
      %5051 = vperm.xlu0 %5050, %v688
      %v5052 = vpop.permute.xlu0 %5051
      %5054 = vset.pattern.permute.xlu0 6
      %5055 = vperm.xlu0 %5054, %v689
      %v5056 = vpop.permute.xlu0 %5055
      %v5058 = vmul.f32 %v4667, %v5032
      %v5059 = vmul.f32 %v4669, %v5036
      %v5060 = vmul.f32 %v4671, %v5040
      %v5061 = vmul.f32 %v4673, %v5044
      %v5062 = vmul.f32 %v4675, %v5048
      %v5063 = vmul.f32 %v4865, %v5052
      %v5064 = vmul.f32 %v5029, %v5056
      %v5065 = vlaneseq
      %v5066 = vshrl.u32 %v5065, 7
      %v5067 = vsub.s32 6, %v5066
      %v5068 = vrot.slane %v4656, %v5067
      %v5069 = vmul.f32 %v5058, %v5068
      %v5070 = vmul.f32 %v5059, %v5068
      %v5071 = vmul.f32 %v5060, %v5068
      %v5072 = vmul.f32 %v5061, %v5068
      %v5073 = vmul.f32 %v5062, %v5068
      %v5074 = vmul.f32 %v5063, %v5068
      %v5075 = vmul.f32 %v5064, %v5068
      %v5076 = vadd.f32 %v5021, %v5069
      %v5077 = vadd.f32 %v5022, %v5070
      %v5078 = vadd.f32 %v5023, %v5071
      %v5079 = vadd.f32 %v5024, %v5072
      %v5080 = vadd.f32 %v5025, %v5073
      %v5081 = vadd.f32 %v5026, %v5074
      %v5082 = vadd.f32 %v5027, %v5075
      %5083 = vset.pattern.permute.xlu0 7
      %5084 = vperm.xlu0 %5083, %v683
      %v5085 = vpop.permute.xlu0 %5084
      %5087 = vset.pattern.permute.xlu0 7
      %5088 = vperm.xlu0 %5087, %v684
      %v5089 = vpop.permute.xlu0 %5088
      %5091 = vset.pattern.permute.xlu0 7
      %5092 = vperm.xlu0 %5091, %v685
      %v5093 = vpop.permute.xlu0 %5092
      %5095 = vset.pattern.permute.xlu0 7
      %5096 = vperm.xlu0 %5095, %v686
      %v5097 = vpop.permute.xlu0 %5096
      %5099 = vset.pattern.permute.xlu0 7
      %5100 = vperm.xlu0 %5099, %v687
      %v5101 = vpop.permute.xlu0 %5100
      %5103 = vset.pattern.permute.xlu0 7
      %5104 = vperm.xlu0 %5103, %v688
      %v5105 = vpop.permute.xlu0 %5104
      %5107 = vset.pattern.permute.xlu0 7
      %5108 = vperm.xlu0 %5107, %v689
      %v5109 = vpop.permute.xlu0 %5108
      %v5111 = vmul.f32 %v4650, %v5085
      %v5112 = vmul.f32 %v4651, %v5089
      %v5113 = vmul.f32 %v4652, %v5093
      %v5114 = vmul.f32 %v4653, %v5097
      %v5115 = vmul.f32 %v4654, %v5101
      %v5116 = vmul.f32 %v4655, %v5105
      %v5117 = vmul.f32 %v5109, 0.0
      %v5118 = vlaneseq
      %v5119 = vshrl.u32 %v5118, 7
      %v5120 = vsub.s32 7, %v5119
      %v5121 = vrot.slane %v4656, %v5120
      %v5122 = vmul.f32 %v5111, %v5121
      %v5123 = vmul.f32 %v5112, %v5121
      %v5124 = vmul.f32 %v5113, %v5121
      %v5125 = vmul.f32 %v5114, %v5121
      %v5126 = vmul.f32 %v5115, %v5121
      %v5127 = vmul.f32 %v5116, %v5121
      %v5128 = vmul.f32 %v5117, %v5121
      %v5129 = vadd.f32 %v5076, %v5122
      %v5130 = vadd.f32 %v5077, %v5123
      %v5131 = vadd.f32 %v5078, %v5124
      %v5132 = vadd.f32 %v5079, %v5125
      %v5133 = vadd.f32 %v5080, %v5126
      %v5134 = vadd.f32 %v5081, %v5127
      %v5135 = vadd.f32 %v5082, %v5128
      %5136 = vset.pattern.permute.xlu0 8
      %5137 = vperm.xlu0 %5136, %v683
      %v5138 = vpop.permute.xlu0 %5137
      %5140 = vset.pattern.permute.xlu0 8
      %5141 = vperm.xlu0 %5140, %v684
      %v5142 = vpop.permute.xlu0 %5141
      %5144 = vset.pattern.permute.xlu0 8
      %5145 = vperm.xlu0 %5144, %v685
      %v5146 = vpop.permute.xlu0 %5145
      %5148 = vset.pattern.permute.xlu0 8
      %5149 = vperm.xlu0 %5148, %v686
      %v5150 = vpop.permute.xlu0 %5149
      %5152 = vset.pattern.permute.xlu0 8
      %5153 = vperm.xlu0 %5152, %v687
      %v5154 = vpop.permute.xlu0 %5153
      %5156 = vset.pattern.permute.xlu0 8
      %5157 = vperm.xlu0 %5156, %v688
      %v5158 = vpop.permute.xlu0 %5157
      %5160 = vset.pattern.permute.xlu0 8
      %5161 = vperm.xlu0 %5160, %v689
      %v5162 = vpop.permute.xlu0 %5161
      %v5164 = vmul.f32 %v4794, %v5138
      %v5165 = vmul.f32 %v4796, %v5142
      %v5166 = vmul.f32 %v4798, %v5146
      %v5167 = vmul.f32 %v4800, %v5150
      %v5168 = vmul.f32 %v4802, %v5154
      %v5169 = vmul.f32 %v4974, %v5158
      %v5170 = vmul.f32 %v5162, 0.0
      %v5171 = vlaneseq
      %v5172 = vshrl.u32 %v5171, 7
      %v5173 = vsub.s32 0, %v5172
      %v5174 = vrot.slane %v4657, %v5173
      %v5175 = vmul.f32 %v5164, %v5174
      %v5176 = vmul.f32 %v5165, %v5174
      %v5177 = vmul.f32 %v5166, %v5174
      %v5178 = vmul.f32 %v5167, %v5174
      %v5179 = vmul.f32 %v5168, %v5174
      %v5180 = vmul.f32 %v5169, %v5174
      %v5181 = vmul.f32 %v5170, %v5174
      %v5182 = vadd.f32 %v5129, %v5175
      %v5183 = vadd.f32 %v5130, %v5176
      %v5184 = vadd.f32 %v5131, %v5177
      %v5185 = vadd.f32 %v5132, %v5178
      %v5186 = vadd.f32 %v5133, %v5179
      %v5187 = vadd.f32 %v5134, %v5180
      %v5188 = vadd.f32 %v5135, %v5181
      %v5190 = vlaneseq
      %v5191 = vshrl.u32 %v5190, 7
      %v5192 = vsub.s32 0, %v5191
      %v5193 = vrot.slane %v4658, %v5192
      %v5195 = vadd.f32 %v5182, %v5193
      %v5196 = vadd.f32 %v5183, %v5193
      %v5197 = vadd.f32 %v5184, %v5193
      %v5198 = vadd.f32 %v5185, %v5193
      %v5199 = vadd.f32 %v5186, %v5193
      %v5200 = vadd.f32 %v5187, %v5193
      %v5201 = vadd.f32 %v5188, %v5193
      %v5202 = vmax.f32 %v5195, 0.0
      %v5203 = vmax.f32 %v5196, 0.0
      %v5204 = vmax.f32 %v5197, 0.0
      %v5205 = vmax.f32 %v5198, 0.0
      %v5206 = vmax.f32 %v5199, 0.0
      %v5207 = vmax.f32 %v5200, 0.0
      %v5208 = vmax.f32 %v5201, 0.0
      %v5209 = vld [vmem:[%s17] sm:$0xff]
      %v5210 = vld [vmem:[%s17 + $0x8] sm:$0xff]
      %v5211 = vld [vmem:[%s17 + $0x10] sm:$0xff]
      %v5212 = vld [vmem:[%s17 + $0x18] sm:$0xff]
      %v5213 = vld [vmem:[%s17 + $0x20] sm:$0xff]
      %v5214 = vld [vmem:[%s17 + $0x28] sm:$0xff]
      %v5215 = vld [vmem:[%s17 + $0x30] sm:$0xff]
      %v5216 = vld [vmem:[%s17 + $0x38] sm:$0xff]
      %v5217 = vld [vmem:[%s17 + $0x40] sm:$0xff]
      %v5218 = vld [vmem:[%s17 + $0x48] sm:$0xff]
      %v5219 = vld [vmem:[%s17 + $0x50] sm:$0xff]
      %v5220 = vld [vmem:[%s17 + $0x58] sm:$0xff]
      %v5221 = vld [vmem:[%s17 + $0x60] sm:$0xff]
      %v5222 = vld [vmem:[%s17 + $0x68] sm:$0xff]
      %v5223 = vld [vmem:[%s17 + $0x70] sm:$0xff]
      %v5224 = vld [vmem:[%s17 + $0x78] sm:$0xff]
      %v5225 = vld [vmem:[%s18] sm:$0x1]
      %v5227 = vlaneseq
      %v5228 = vshrl.u32 %v5227, 7
      %v5229 = vsub.s32 0, %v5228
      %v5230 = vrot.slane %v5225, %v5229
      %5232 = vmatprep.subr.mxu0 0.0
      %5233 = vmatpush1.msra.mxu0 %v5209
      %5234 = vmatprep.subr.mxu0 0.0
      %5235 = vmatpush1.msra.mxu0 %v5210
      %5236 = vmatprep.subr.mxu0 0.0
      %5237 = vmatpush1.msra.mxu0 %v5211
      %5238 = vmatprep.subr.mxu0 0.0
      %5239 = vmatpush1.msra.mxu0 %v5212
      %5240 = vmatprep.subr.mxu0 0.0
      %5241 = vmatpush1.msra.mxu0 %v5213
      %5242 = vmatprep.subr.mxu0 0.0
      %5243 = vmatpush1.msra.mxu0 %v5214
      %5244 = vmatprep.subr.mxu0 0.0
      %5245 = vmatpush1.msra.mxu0 %v5215
      %5246 = vmatprep.subr.mxu0 0.0
      %5247 = vmatpush1.msra.mxu0 %v5216
      %5248 = vmatprep.subr.mxu0 0.0
      %5249 = vmatpush1.msra.mxu0 %v5217
      %5250 = vmatprep.subr.mxu0 0.0
      %5251 = vmatpush1.msra.mxu0 %v5218
      %5252 = vmatprep.subr.mxu0 0.0
      %5253 = vmatpush1.msra.mxu0 %v5219
      %5254 = vmatprep.subr.mxu0 0.0
      %5255 = vmatpush1.msra.mxu0 %v5220
      %5256 = vmatprep.subr.mxu0 0.0
      %5257 = vmatpush1.msra.mxu0 %v5221
      %5258 = vmatprep.subr.mxu0 0.0
      %5259 = vmatpush1.msra.mxu0 %v5222
      %5260 = vmatprep.subr.mxu0 0.0
      %5261 = vmatpush1.msra.mxu0 %v5223
      %5262 = vmatprep.subr.mxu0 0.0
      %5263 = vmatpush1.msra.mxu0 %v5224
      %5264 = vmatprep.subr.mxu0 0.0
      %5265 = vmatpush1.msra.mxu0 0.0
      %5266 = vmatprep.subr.mxu0 0.0
      %5267 = vmatpush1.msra.mxu0 0.0
      %5268 = vmatprep.subr.mxu0 0.0
      %5269 = vmatpush1.msra.mxu0 0.0
      %5270 = vmatprep.subr.mxu0 0.0
      %5271 = vmatpush1.msra.mxu0 0.0
      %5272 = vmatprep.subr.mxu0 0.0
      %5273 = vmatpush1.msra.mxu0 0.0
      %5274 = vmatprep.subr.mxu0 0.0
      %5275 = vmatpush1.msra.mxu0 0.0
      %5276 = vmatprep.subr.mxu0 0.0
      %5277 = vmatpush1.msra.mxu0 0.0
      %5278 = vmatprep.subr.mxu0 0.0
      %5279 = vmatpush1.msra.mxu0 0.0
      %5280 = vmatprep.subr.mxu0 0.0
      %5281 = vmatpush1.msra.mxu0 0.0
      %5282 = vmatprep.subr.mxu0 0.0
      %5283 = vmatpush1.msra.mxu0 0.0
      %5284 = vmatprep.subr.mxu0 0.0
      %5285 = vmatpush1.msra.mxu0 0.0
      %5286 = vmatprep.subr.mxu0 0.0
      %5287 = vmatpush1.msra.mxu0 0.0
      %5288 = vmatprep.subr.mxu0 0.0
      %5289 = vmatpush1.msra.mxu0 0.0
      %5290 = vmatprep.subr.mxu0 0.0
      %5291 = vmatpush1.msra.mxu0 0.0
      %5292 = vmatprep.subr.mxu0 0.0
      %5293 = vmatpush1.msra.mxu0 0.0
      %5294 = vmatprep.subr.mxu0 0.0
      %5295 = vmatpush1.msra.mxu0 0.0
      %5296 = vmatprep.mubr.f32.mxu0 0.0
      %5297 = vmatmul.mubr.f32.gmra.mrb[0].mxu0 %v5202
      %v5298 = vpop.f32.mrb[0].mxu0
      %v5299 = vadd.f32 %v5230, %v5298
      %v5300 = vpop.f32.mrb[0].mxu0
      %5301 = vmatprep.mubr.f32.mxu0 0.0
      %5302 = vmatmul.mubr.f32.gmra.mrb[0].mxu0 %v5203
      %v5303 = vpop.f32.mrb[0].mxu0
      %v5304 = vadd.f32 %v5230, %v5303
      %v5305 = vpop.f32.mrb[0].mxu0
      %5306 = vmatprep.mubr.f32.mxu0 0.0
      %5307 = vmatmul.mubr.f32.gmra.mrb[0].mxu0 %v5204
      %v5308 = vpop.f32.mrb[0].mxu0
      %v5309 = vadd.f32 %v5230, %v5308
      %v5310 = vpop.f32.mrb[0].mxu0
      %5311 = vmatprep.mubr.f32.mxu0 0.0
      %5312 = vmatmul.mubr.f32.gmra.mrb[0].mxu0 %v5205
      %v5313 = vpop.f32.mrb[0].mxu0
      %v5314 = vadd.f32 %v5230, %v5313
      %v5315 = vpop.f32.mrb[0].mxu0
      %5316 = vmatprep.mubr.f32.mxu0 0.0
      %5317 = vmatmul.mubr.f32.gmra.mrb[0].mxu0 %v5206
      %v5318 = vpop.f32.mrb[0].mxu0
      %v5319 = vadd.f32 %v5230, %v5318
      %v5320 = vpop.f32.mrb[0].mxu0
      %5321 = vmatprep.mubr.f32.mxu0 0.0
      %5322 = vmatmul.mubr.f32.gmra.mrb[0].mxu0 %v5207
      %v5323 = vpop.f32.mrb[0].mxu0
      %v5324 = vadd.f32 %v5230, %v5323
      %v5325 = vpop.f32.mrb[0].mxu0
      %5326 = vmatprep.mubr.f32.mxu0 0.0
      %5327 = vmatmul.mubr.f32.gmra.mrb[0].mxu0 %v5208
      %v5328 = vpop.f32.mrb[0].mxu0
      %v5329 = vadd.f32 %v5230, %v5328
      %v5330 = vpop.f32.mrb[0].mxu0
      %5331 = vdwg.mxu0
      %v5332 = vmax.f32 %v5299, 0.0
      %v5333 = vmax.f32 %v5304, 0.0
      %v5334 = vmax.f32 %v5309, 0.0
      %v5335 = vmax.f32 %v5314, 0.0
      %v5336 = vmax.f32 %v5319, 0.0
      %v5337 = vmax.f32 %v5324, 0.0
      %v5338 = vmax.f32 %v5329, 0.0
      %v5339 = vld [vmem:[%s4] sm:$0x1]
      %vm5340 = vcmask 457728
      %v5342 = vsel %vm5340, %v5339, 0
      %5344 = vmatprep.subr.mxu0 0.0
      %5345 = vmatpush1.msra.mxu0 %v5332
      %5346 = vmatprep.subr.mxu0 0.0
      %5347 = vmatpush1.msra.mxu0 %v5333
      %5348 = vmatprep.subr.mxu0 0.0
      %5349 = vmatpush1.msra.mxu0 %v5334
      %5350 = vmatprep.subr.mxu0 0.0
      %5351 = vmatpush1.msra.mxu0 %v5335
      %5352 = vmatprep.subr.mxu0 0.0
      %5353 = vmatpush1.msra.mxu0 %v5336
      %5354 = vmatprep.subr.mxu0 0.0
      %5355 = vmatpush1.msra.mxu0 %v5337
      %5356 = vmatprep.subr.mxu0 0.0
      %5357 = vmatpush1.msra.mxu0 %v5338
      %5358 = vmatprep.subr.mxu0 0.0
      %5359 = vmatpush1.msra.mxu0 0.0
      %5360 = vmatprep.subr.mxu0 0.0
      %5361 = vmatpush1.msra.mxu0 0.0
      %5362 = vmatprep.subr.mxu0 0.0
      %5363 = vmatpush1.msra.mxu0 0.0
      %5364 = vmatprep.subr.mxu0 0.0
      %5365 = vmatpush1.msra.mxu0 0.0
      %5366 = vmatprep.subr.mxu0 0.0
      %5367 = vmatpush1.msra.mxu0 0.0
      %5368 = vmatprep.subr.mxu0 0.0
      %5369 = vmatpush1.msra.mxu0 0.0
      %5370 = vmatprep.subr.mxu0 0.0
      %5371 = vmatpush1.msra.mxu0 0.0
      %5372 = vmatprep.subr.mxu0 0.0
      %5373 = vmatpush1.msra.mxu0 0.0
      %5374 = vmatprep.subr.mxu0 0.0
      %5375 = vmatpush1.msra.mxu0 0.0
      %5376 = vmatprep.subr.mxu0 0.0
      %5377 = vmatpush1.msra.mxu0 0.0
      %5378 = vmatprep.subr.mxu0 0.0
      %5379 = vmatpush1.msra.mxu0 0.0
      %5380 = vmatprep.subr.mxu0 0.0
      %5381 = vmatpush1.msra.mxu0 0.0
      %5382 = vmatprep.subr.mxu0 0.0
      %5383 = vmatpush1.msra.mxu0 0.0
      %5384 = vmatprep.subr.mxu0 0.0
      %5385 = vmatpush1.msra.mxu0 0.0
      %5386 = vmatprep.subr.mxu0 0.0
      %5387 = vmatpush1.msra.mxu0 0.0
      %5388 = vmatprep.subr.mxu0 0.0
      %5389 = vmatpush1.msra.mxu0 0.0
      %5390 = vmatprep.subr.mxu0 0.0
      %5391 = vmatpush1.msra.mxu0 0.0
      %5392 = vmatprep.subr.mxu0 0.0
      %5393 = vmatpush1.msra.mxu0 0.0
      %5394 = vmatprep.subr.mxu0 0.0
      %5395 = vmatpush1.msra.mxu0 0.0
      %5396 = vmatprep.subr.mxu0 0.0
      %5397 = vmatpush1.msra.mxu0 0.0
      %5398 = vmatprep.subr.mxu0 0.0
      %5399 = vmatpush1.msra.mxu0 0.0
      %5400 = vmatprep.subr.mxu0 0.0
      %5401 = vmatpush1.msra.mxu0 0.0
      %5402 = vmatprep.subr.mxu0 0.0
      %5403 = vmatpush1.msra.mxu0 0.0
      %5404 = vmatprep.subr.mxu0 0.0
      %5405 = vmatpush1.msra.mxu0 0.0
      %5406 = vmatprep.subr.mxu0 0.0
      %5407 = vmatpush1.msra.mxu0 0.0
      %5408 = vmatprep.mubr.f32.mxu0 0.0
      %5409 = vmatmul.mubr.f32.gmra.mrb[0].mxu0 %v5342
      %v5410 = vpop.f32.mrb[0].mxu0
      %v5411 = vadd.f32 0.0, %v5410
      %v5412 = vpop.f32.mrb[0].mxu0
      %5413 = vdwg.mxu0
      %v5414 = vld [vmem:[%s19] sm:$0xff]
      %v5415 = vld [vmem:[%s19 + $0x8] sm:$0xff]
      %v5416 = vld [vmem:[%s19 + $0x10] sm:$0xff]
      %v5417 = vld [vmem:[%s19 + $0x18] sm:$0xff]
      %v5418 = vld [vmem:[%s19 + $0x20] sm:$0xff]
      %v5419 = vld [vmem:[%s19 + $0x28] sm:$0xff]
      %v5420 = vld [vmem:[%s19 + $0x30] sm:$0xff]
      %v5421 = vld [vmem:[%s19 + $0x38] sm:$0xff]
      %v5422 = vld [vmem:[%s19 + $0x40] sm:$0xff]
      %v5423 = vld [vmem:[%s19 + $0x48] sm:$0xff]
      %v5424 = vld [vmem:[%s19 + $0x50] sm:$0xff]
      %v5425 = vld [vmem:[%s19 + $0x58] sm:$0xff]
      %v5426 = vld [vmem:[%s19 + $0x60] sm:$0xff]
      %v5427 = vld [vmem:[%s19 + $0x68] sm:$0xff]
      %v5428 = vld [vmem:[%s19 + $0x70] sm:$0xff]
      %v5429 = vld [vmem:[%s19 + $0x78] sm:$0xff]
      %v5430 = vld [vmem:[%s19 + $0x80] sm:$0xff]
      %v5431 = vld [vmem:[%s19 + $0x88] sm:$0xff]
      %v5432 = vld [vmem:[%s19 + $0x90] sm:$0xff]
      %v5433 = vld [vmem:[%s19 + $0x98] sm:$0xff]
      %v5434 = vld [vmem:[%s19 + $0xa0] sm:$0xff]
      %v5435 = vld [vmem:[%s19 + $0xa8] sm:$0xff]
      %v5436 = vld [vmem:[%s19 + $0xb0] sm:$0xff]
      %v5437 = vld [vmem:[%s19 + $0xb8] sm:$0xff]
      %v5438 = vld [vmem:[%s19 + $0xc0] sm:$0xff]
      %v5439 = vld [vmem:[%s19 + $0xc8] sm:$0xff]
      %v5440 = vld [vmem:[%s19 + $0xd0] sm:$0xff]
      %v5441 = vld [vmem:[%s19 + $0xd8] sm:$0xff]
      %v5442 = vld [vmem:[%s19 + $0xe0] sm:$0xff]
      %v5443 = vld [vmem:[%s19 + $0xe8] sm:$0xff]
      %v5444 = vld [vmem:[%s19 + $0xf0] sm:$0xff]
      %v5445 = vld [vmem:[%s19 + $0xf8] sm:$0xff]
      %v5446 = vld [vmem:[%s19 + $0x100] sm:$0xff]
      %v5447 = vld [vmem:[%s19 + $0x108] sm:$0xff]
      %v5448 = vld [vmem:[%s19 + $0x110] sm:$0xff]
      %v5449 = vld [vmem:[%s19 + $0x118] sm:$0xff]
      %v5450 = vld [vmem:[%s19 + $0x120] sm:$0xff]
      %v5451 = vld [vmem:[%s19 + $0x128] sm:$0xff]
      %v5452 = vld [vmem:[%s19 + $0x130] sm:$0xff]
      %v5453 = vld [vmem:[%s19 + $0x138] sm:$0xff]
      %v5454 = vld [vmem:[%s19 + $0x140] sm:$0xff]
      %v5455 = vld [vmem:[%s19 + $0x148] sm:$0xff]
      %v5456 = vld [vmem:[%s19 + $0x150] sm:$0xff]
      %v5457 = vld [vmem:[%s19 + $0x158] sm:$0xff]
      %v5458 = vld [vmem:[%s19 + $0x160] sm:$0xff]
      %v5459 = vld [vmem:[%s19 + $0x168] sm:$0xff]
      %v5460 = vld [vmem:[%s19 + $0x170] sm:$0xff]
      %v5461 = vld [vmem:[%s19 + $0x178] sm:$0xff]
      %v5462 = vld [vmem:[%s20] sm:$0x7]
      %v5464 = vlaneseq
      %v5465 = vshrl.u32 %v5464, 7
      %v5466 = vsub.s32 0, %v5465
      %v5467 = vrot.slane %v5462, %v5466
      %v5468 = vlaneseq
      %v5469 = vshrl.u32 %v5468, 7
      %v5470 = vsub.s32 1, %v5469
      %v5471 = vrot.slane %v5462, %v5470
      %v5472 = vlaneseq
      %v5473 = vshrl.u32 %v5472, 7
      %v5474 = vsub.s32 2, %v5473
      %v5475 = vrot.slane %v5462, %v5474
      %5479 = vmatprep.subr.mxu0 %v5415
      %5480 = vmatpush1.msra.mxu0 %v5414
      %5481 = vmatprep.subr.mxu0 %v5418
      %5482 = vmatpush1.msra.mxu0 %v5417
      %5483 = vmatprep.subr.mxu0 %v5421
      %5484 = vmatpush1.msra.mxu0 %v5420
      %5485 = vmatprep.subr.mxu0 %v5424
      %5486 = vmatpush1.msra.mxu0 %v5423
      %5487 = vmatprep.subr.mxu0 %v5427
      %5488 = vmatpush1.msra.mxu0 %v5426
      %5489 = vmatprep.subr.mxu0 %v5430
      %5490 = vmatpush1.msra.mxu0 %v5429
      %5491 = vmatprep.subr.mxu0 %v5433
      %5492 = vmatpush1.msra.mxu0 %v5432
      %5493 = vmatprep.subr.mxu0 %v5436
      %5494 = vmatpush1.msra.mxu0 %v5435
      %5495 = vmatprep.subr.mxu0 %v5439
      %5496 = vmatpush1.msra.mxu0 %v5438
      %5497 = vmatprep.subr.mxu0 %v5442
      %5498 = vmatpush1.msra.mxu0 %v5441
      %5499 = vmatprep.subr.mxu0 %v5445
      %5500 = vmatpush1.msra.mxu0 %v5444
      %5501 = vmatprep.subr.mxu0 %v5448
      %5502 = vmatpush1.msra.mxu0 %v5447
      %5503 = vmatprep.subr.mxu0 %v5451
      %5504 = vmatpush1.msra.mxu0 %v5450
      %5505 = vmatprep.subr.mxu0 %v5454
      %5506 = vmatpush1.msra.mxu0 %v5453
      %5507 = vmatprep.subr.mxu0 %v5457
      %5508 = vmatpush1.msra.mxu0 %v5456
      %5509 = vmatprep.subr.mxu0 %v5460
      %5510 = vmatpush1.msra.mxu0 %v5459
      %5511 = vmatprep.subr.mxu0 0.0
      %5512 = vmatpush1.msra.mxu0 0.0
      %5513 = vmatprep.subr.mxu0 0.0
      %5514 = vmatpush1.msra.mxu0 0.0
      %5515 = vmatprep.subr.mxu0 0.0
      %5516 = vmatpush1.msra.mxu0 0.0
      %5517 = vmatprep.subr.mxu0 0.0
      %5518 = vmatpush1.msra.mxu0 0.0
      %5519 = vmatprep.subr.mxu0 0.0
      %5520 = vmatpush1.msra.mxu0 0.0
      %5521 = vmatprep.subr.mxu0 0.0
      %5522 = vmatpush1.msra.mxu0 0.0
      %5523 = vmatprep.subr.mxu0 0.0
      %5524 = vmatpush1.msra.mxu0 0.0
      %5525 = vmatprep.subr.mxu0 0.0
      %5526 = vmatpush1.msra.mxu0 0.0
      %5527 = vmatprep.subr.mxu0 0.0
      %5528 = vmatpush1.msra.mxu0 0.0
      %5529 = vmatprep.subr.mxu0 0.0
      %5530 = vmatpush1.msra.mxu0 0.0
      %5531 = vmatprep.subr.mxu0 0.0
      %5532 = vmatpush1.msra.mxu0 0.0
      %5533 = vmatprep.subr.mxu0 0.0
      %5534 = vmatpush1.msra.mxu0 0.0
      %5535 = vmatprep.subr.mxu0 0.0
      %5536 = vmatpush1.msra.mxu0 0.0
      %5537 = vmatprep.subr.mxu0 0.0
      %5538 = vmatpush1.msra.mxu0 0.0
      %5539 = vmatprep.subr.mxu0 0.0
      %5540 = vmatpush1.msra.mxu0 0.0
      %5541 = vmatprep.subr.mxu0 0.0
      %5542 = vmatpush1.msra.mxu0 0.0
      %5543 = vmatprep.mubr.f32.mxu0 0.0
      %5544 = vmatmul.mubr.f32.gmra.mrb[0].mxu0 %v5411
      %v5545 = vpop.f32.mrb[0].mxu0
      %v5546 = vadd.f32 %v5467, %v5545
      %v5547 = vpop.f32.mrb[0].mxu0
      %v5548 = vadd.f32 %v5471, %v5547
      %5549 = vdwg.mxu0
      %5550 = vmatprep.subr.mxu0 0.0
      %5551 = vmatpush1.msra.mxu0 %v5416
      %5552 = vmatprep.subr.mxu0 0.0
      %5553 = vmatpush1.msra.mxu0 %v5419
      %5554 = vmatprep.subr.mxu0 0.0
      %5555 = vmatpush1.msra.mxu0 %v5422
      %5556 = vmatprep.subr.mxu0 0.0
      %5557 = vmatpush1.msra.mxu0 %v5425
      %5558 = vmatprep.subr.mxu0 0.0
      %5559 = vmatpush1.msra.mxu0 %v5428
      %5560 = vmatprep.subr.mxu0 0.0
      %5561 = vmatpush1.msra.mxu0 %v5431
      %5562 = vmatprep.subr.mxu0 0.0
      %5563 = vmatpush1.msra.mxu0 %v5434
      %5564 = vmatprep.subr.mxu0 0.0
      %5565 = vmatpush1.msra.mxu0 %v5437
      %5566 = vmatprep.subr.mxu0 0.0
      %5567 = vmatpush1.msra.mxu0 %v5440
      %5568 = vmatprep.subr.mxu0 0.0
      %5569 = vmatpush1.msra.mxu0 %v5443
      %5570 = vmatprep.subr.mxu0 0.0
      %5571 = vmatpush1.msra.mxu0 %v5446
      %5572 = vmatprep.subr.mxu0 0.0
      %5573 = vmatpush1.msra.mxu0 %v5449
      %5574 = vmatprep.subr.mxu0 0.0
      %5575 = vmatpush1.msra.mxu0 %v5452
      %5576 = vmatprep.subr.mxu0 0.0
      %5577 = vmatpush1.msra.mxu0 %v5455
      %5578 = vmatprep.subr.mxu0 0.0
      %5579 = vmatpush1.msra.mxu0 %v5458
      %5580 = vmatprep.subr.mxu0 0.0
      %5581 = vmatpush1.msra.mxu0 %v5461
      %5582 = vmatprep.subr.mxu0 0.0
      %5583 = vmatpush1.msra.mxu0 0.0
      %5584 = vmatprep.subr.mxu0 0.0
      %5585 = vmatpush1.msra.mxu0 0.0
      %5586 = vmatprep.subr.mxu0 0.0
      %5587 = vmatpush1.msra.mxu0 0.0
      %5588 = vmatprep.subr.mxu0 0.0
      %5589 = vmatpush1.msra.mxu0 0.0
      %5590 = vmatprep.subr.mxu0 0.0
      %5591 = vmatpush1.msra.mxu0 0.0
      %5592 = vmatprep.subr.mxu0 0.0
      %5593 = vmatpush1.msra.mxu0 0.0
      %5594 = vmatprep.subr.mxu0 0.0
      %5595 = vmatpush1.msra.mxu0 0.0
      %5596 = vmatprep.subr.mxu0 0.0
      %5597 = vmatpush1.msra.mxu0 0.0
      %5598 = vmatprep.subr.mxu0 0.0
      %5599 = vmatpush1.msra.mxu0 0.0
      %5600 = vmatprep.subr.mxu0 0.0
      %5601 = vmatpush1.msra.mxu0 0.0
      %5602 = vmatprep.subr.mxu0 0.0
      %5603 = vmatpush1.msra.mxu0 0.0
      %5604 = vmatprep.subr.mxu0 0.0
      %5605 = vmatpush1.msra.mxu0 0.0
      %5606 = vmatprep.subr.mxu0 0.0
      %5607 = vmatpush1.msra.mxu0 0.0
      %5608 = vmatprep.subr.mxu0 0.0
      %5609 = vmatpush1.msra.mxu0 0.0
      %5610 = vmatprep.subr.mxu0 0.0
      %5611 = vmatpush1.msra.mxu0 0.0
      %5612 = vmatprep.subr.mxu0 0.0
      %5613 = vmatpush1.msra.mxu0 0.0
      %5614 = vmatprep.mubr.f32.mxu0 0.0
      %5615 = vmatmul.mubr.f32.gmra.mrb[0].mxu0 %v5411
      %v5616 = vpop.f32.mrb[0].mxu0
      %v5617 = vadd.f32 %v5475, %v5616
      %v5618 = vpop.f32.mrb[0].mxu0
      %5619 = vdwg.mxu0
      %v5623 = vcombine.low %v5546, %v5548
      %v5625 = vunpack.c.l.s4 1966171168
      %v5626 = vunpack.c.0.s8 %v5625
      %v5627 = vlaneseq
      %v5628 = vshrl.u32 %v5627, 7
      %v5629 = vsub.s32 %v5626, %v5628
      %v5630 = vrot.slane %v5623, %v5629
      %v5632 = vunpack.c.l.s4 1966171168
      %v5633 = vunpack.c.0.s8 %v5632
      %v5634 = vlaneseq
      %v5635 = vshrl.u32 %v5634, 7
      %v5636 = vsub.s32 %v5633, %v5635
      %v5637 = vrot.slane %v5617, %v5636
      %v5638 = vcombine.low %v5630, %v5637
      %v5640 = vunpack.c.l.s4 1966171168
      %v5641 = vunpack.c.0.s8 %v5640
      %v5642 = vlaneseq
      %v5643 = vshrl.u32 %v5642, 7
      %v5644 = vsub.s32 %v5641, %v5643
      %v5645 = vrot.slane %v5638, %v5644
      %v5647 = vlaneseq
      %vm5648 = vcmp.ge.s32.totalorder %v5647, 0
      %vm5649 = vcmp.lt.s32.totalorder %v5647, 384
      %vm5650 = vmand %vm5648, %vm5649
      %5651 = vst.msk [vmem:[%s654] sm:$0x7] %vm5650, %v5645
      %p5652 = scmp.lt.s32.totalorder %s32, 1
      %s5653 = scalar_select %p5652, %s32, 1
      %s5654 = smul.addr %s5653, 3
      %s5655 = scalar_lea.vmem %s21, %s5654
      // Predicated region
      $region105: #{cocalc_forward.1} parent=103 // pred_check
        %p5656 = pneg %p496
      $region106: #{cocalc_forward.1} parent=103 // pred_check_branch
        %5658 = sbr.rel (%p5656) target = $region108
      $region107: #{cocalc_forward.1} parent=103 // pred_region
        _
      $region108: #{cocalc_forward.1} parent=103 // pred_fallthru
        _
    $region104: #{cocalc_forward.1} parent=5 // pred_fallthru
      _
    %p5659 = scmp.le.s32.totalorder 2, %s27
    // Predicated region
    $region109: #{cocalc_forward.1} parent=5 // pred_check
      %p5660 = pneg %p5659
    $region110: #{cocalc_forward.1} parent=5 // pred_check_branch
      %5662 = sbr.rel (%p5660) target = $region112
    $region111: #{cocalc_forward.1} parent=5 // pred_region
      %s5663 = ssub.s32 %s27, 2
      // Predicated region
      $region113: #{cocalc_forward.1} parent=111 // pred_check
        %p5664 = pneg %p502
      $region114: #{cocalc_forward.1} parent=111 // pred_check_branch
        %5666 = sbr.rel (%p5664) target = $region116
      $region115: #{cocalc_forward.1} parent=111 // pred_region
        %p5667 = scmp.lt.s32.totalorder %s33, 1
        %s5668 = scalar_select %p5667, %s33, 1
        %s5669 = smul.addr %s5668, 3
        %s5670 = scalar_lea.vmem %s21, %s5669
      $region116: #{cocalc_forward.1} parent=111 // pred_fallthru
        _
    $region112: #{cocalc_forward.1} parent=5 // pred_fallthru
      _
  $region6: #{cocalc_forward.1} parent=0 // loop_footer
    %s31 = sadd.s32 1, %s27
  $region7: #{cocalc_forward.1} parent=0 // loop_footer_branch
    %26 = sbr.rel target = $region3
  $region8: #{cocalc_forward.1} parent=0 // loop_exit
    _

</llo_original>
